<compile_context>
chip_gen: v6e
topology: v6e:2x2x1
jax: 0.10.0
libtpu: 0.0.40
codegen_flags: <defaults>
</compile_context>

<pallas_src>
import numpy as np
import jax
import jax.numpy as jnp
from jax import lax
from jax.experimental import pallas as pl
from jax.experimental.pallas import tpu as pltpu

SLOPE = 0.2    # LeakyReLU(0.2) from the layer_list config
EPS = 1e-5     # PyTorch BatchNorm default


# ----------------------------------------------------------------------------
# In-kernel helpers
# ----------------------------------------------------------------------------
def _lrelu(z):
    # max(z, 0.2*z) == LeakyReLU(0.2)(z) since 0 < SLOPE < 1.
    return jnp.maximum(z, SLOPE * z)


def _channel_onehot(c, s, features_on_rows):
    """0/1 map between flat channel-major feature index and channel index.

    features_on_rows=True  -> (C*S, C): ind[f, ch] = 1 iff f belongs to ch
    features_on_rows=False -> (C, C*S): transpose layout.
    Built from iota compares in-kernel (no HBM DMA, no integer division).
    """
    if features_on_rows:
        f = lax.broadcasted_iota(jnp.int32, (c * s, c), 0)
        ch = lax.broadcasted_iota(jnp.int32, (c * s, c), 1)
    else:
        f = lax.broadcasted_iota(jnp.int32, (c, c * s), 1)
        ch = lax.broadcasted_iota(jnp.int32, (c, c * s), 0)
    lo = ch * s
    return ((f >= lo) & (f < lo + s)).astype(jnp.float32)


def _bn2d_lrelu(y, c, gamma, beta):
    """Training-mode BatchNorm2d + LeakyReLU on an NCHW-flattened activation.

    y: (N, C*S) float32, channel-major flat layout.  gamma/beta: (1, C).
    One-pass variance E[x^2]-mean^2 (clamped at 0); fine at these magnitudes.
    """
    n, cs = y.shape
    s = cs // c
    inv_count = 1.0 / (n * s)                                 # N * H * W
    ind = _channel_onehot(c, s, features_on_rows=True)        # (C*S, C)
    ind_t = _channel_onehot(c, s, features_on_rows=False)     # (C, C*S)

    row_sum = jnp.sum(y, axis=0, keepdims=True)               # (1, C*S)
    row_sq = jnp.sum(y * y, axis=0, keepdims=True)            # (1, C*S)
    stats = jnp.concatenate([row_sum, row_sq], axis=0)        # (2, C*S)
    ch_stats = jnp.dot(stats, ind, preferred_element_type=jnp.float32)   # (2, C)

    mean = ch_stats[0:1] * inv_count
    var = jnp.maximum(ch_stats[1:2] * inv_count - mean * mean, 0.0)      # biased
    inv_std = lax.rsqrt(var + EPS)                            # EUP
    scale = gamma * inv_std
    shift = beta - mean * scale
    ss = jnp.concatenate([scale, shift], axis=0)              # (2, C)
    ss_full = jnp.dot(ss, ind_t, preferred_element_type=jnp.float32)     # (2, C*S)
    return _lrelu(y * ss_full[0:1] + ss_full[1:2])


def _bn1d_lrelu(y, gamma, beta):
    """Training-mode BatchNorm1d over the batch dim + LeakyReLU.  y: (N, F)."""
    inv_n = 1.0 / y.shape[0]
    mean = jnp.sum(y, axis=0, keepdims=True) * inv_n
    var = jnp.maximum(jnp.sum(y * y, axis=0, keepdims=True) * inv_n - mean * mean,
                      0.0)
    inv_std = lax.rsqrt(var + EPS)
    scale = gamma * inv_std
    shift = beta - mean * scale
    return _lrelu(y * scale + shift)


# ----------------------------------------------------------------------------
# Fused Pallas kernel (whole forward pass for one batch group)
# ----------------------------------------------------------------------------
def _discriminator_kernel(x_ref,
                          B0_ref, g0_ref, be0_ref,
                          B1_ref, g1_ref, be1_ref,
                          w2_ref, g2_ref, be2_ref,
                          w3_ref, b3_ref,
                          o_ref):
    f32, bf16 = jnp.float32, jnp.bfloat16

    # conv0: Conv2d(4->8, k4, s2, p1) as a dense Toeplitz matmul (bf16 -> f32 acc).
    # The conv bias is exactly cancelled by the following train-mode BatchNorm.
    y = jnp.dot(x_ref[...], B0_ref[...], preferred_element_type=f32)    # (N, 8*8*8)
    y = _bn2d_lrelu(y, 8, g0_ref[...], be0_ref[...])

    # conv1: Conv2d(8->16, k4, s2, p1).
    y = jnp.dot(y.astype(bf16), B1_ref[...], preferred_element_type=f32)  # (N, 16*4*4)
    y = _bn2d_lrelu(y, 16, g1_ref[...], be1_ref[...])

    # fc2: Linear(256 -> 32).  The channel-major flat layout already equals
    # PyTorch x.view(batch, -1); bias cancelled by BatchNorm1d.
    y = jnp.dot(y.astype(bf16), w2_ref[...], preferred_element_type=f32)  # (N, 32)
    y = _bn1d_lrelu(y, g2_ref[...], be2_ref[...])

    # output head: Linear(32 -> 1) with bias, no norm, no activation.
    o_ref[...] = jnp.dot(y.astype(bf16), w3_ref[...],
                         preferred_element_type=f32) + b3_ref[...]


def discriminator_forward(ops, x_nchw, group_size=None):
    """x_nchw: (B, 4, 16, 16) -> (B, 1).  Single pallas_call.

    Optional leading grid axis over independent `group_size` batches (each
    group is its own BatchNorm batch).  Weights use constant index_maps so
    they are fetched once and stay VMEM-resident across grid steps.
    """
    b = x_nchw.shape[0]
    group_size = b if group_size is None else group_size
    assert b % group_size == 0
    n_groups = b // group_size
    # (8,128) BlockSpec rule: a per-group row count < 8 is only legal when the
    # block spans the whole batch dim (n_groups == 1).
    assert n_groups == 1 or group_size % 8 == 0

    x_flat = x_nchw.reshape(b, -1).astype(jnp.bfloat16)     # NCHW flatten + bf16

    def resident(arr):           # constant block index -> DMA'd once, stays in VMEM
        return pl.BlockSpec(arr.shape, lambda i: (0, 0))

    weights = (ops["B0"], ops["g0"], ops["be0"],
               ops["B1"], ops["g1"], ops["be1"],
               ops["w2"], ops["g2"], ops["be2"],
               ops["w3"], ops["b3"])

    return pl.pallas_call(
        _discriminator_kernel,
        out_shape=jax.ShapeDtypeStruct((b, 1), jnp.float32),
        grid=(n_groups,),
        in_specs=[pl.BlockSpec((group_size, x_flat.shape[1]), lambda i: (i, 0))]
                 + [resident(w) for w in weights],
        out_specs=pl.BlockSpec((group_size, 1), lambda i: (i, 0)),
        compiler_params=pltpu.CompilerParams(
            dimension_semantics=("parallel",),      # shard groups across TCs on v7x
            vmem_limit_bytes=16 * 1024 * 1024),
    )(x_flat, *weights)


# ----------------------------------------------------------------------------
# One-time host-side parameter preparation (pre-lowered / pre-transposed, bf16)
# ----------------------------------------------------------------------------
def _conv_as_dense(w_oihw, h, w, stride, pad):
    """Lower a Conv2d weight (C_out, C_in, k, k) to a dense operator B such that
    conv(x) == x.reshape(N, C_in*H*W) @ B, reshaped to (N, C_out, OH, OW),
    using NCHW channel-major flattening on both sides.  Built once on the host,
    stored in bfloat16 (MXU-native)."""
    wk = np.asarray(w_oihw, dtype=np.float32)
    c_out, c_in, k, _ = wk.shape
    oh = (h + 2 * pad - k) // stride + 1
    ow = (w + 2 * pad - k) // stride + 1
    dense = np.zeros((c_in * h * w, c_out * oh * ow), np.float32)
    in_ch_off = np.arange(c_in) * (h * w)
    out_ch_off = np.arange(c_out) * (oh * ow)
    for o_r in range(oh):
        for o_c in range(ow):
            col = out_ch_off + o_r * ow + o_c
            for kr in range(k):
                i_r = stride * o_r + kr - pad
                if i_r < 0 or i_r >= h:
                    continue
                for kc in range(k):
                    i_c = stride * o_c + kc - pad
                    if i_c < 0 or i_c >= w:
                        continue
                    row = in_ch_off + i_r * w + i_c
                    dense[np.ix_(row, col)] += wk[:, :, kr, kc].T   # (C_in, C_out)
    return jnp.asarray(dense, dtype=jnp.bfloat16), oh, ow


def prepare_operands(raw):
    w0, _b0, g0, be0 = raw["conv0"]     # conv bias cancelled by train-mode BN
    w1, _b1, g1, be1 = raw["conv1"]
    w2, _b2, g2, be2 = raw["fc2"]       # fc2 bias cancelled by BN1d
    w3, b3 = raw["fc_out0"]
    B0, oh0, ow0 = _conv_as_dense(w0, 16, 16, 2, 1)      # (1024, 512) bf16
    B1, _, _ = _conv_as_dense(w1, oh0, ow0, 2, 1)        # (512, 256)  bf16
    return dict(
        B0=B0, g0=g0.reshape(1, -1), be0=be0.reshape(1, -1),
        B1=B1, g1=g1.reshape(1, -1), be1=be1.reshape(1, -1),
        w2=jnp.transpose(w2).astype(jnp.bfloat16),
        g2=g2.reshape(1, -1), be2=be2.reshape(1, -1),
        w3=jnp.transpose(w3).astype(jnp.bfloat16),
        b3=b3.reshape(1, 1),
    )


# ----------------------------------------------------------------------------
# Parameter construction (deterministic, mirrors weights_init where it applies)
# ----------------------------------------------------------------------------
def make_params(key):
    keys = jax.random.split(key, 16)
    params = {}
    params["conv0"] = (
        0.02 * jax.random.normal(keys[0], (8, 4, 4, 4), jnp.float32),   # w ~ N(0,0.02)
        0.02 * jax.random.normal(keys[1], (8,), jnp.float32),           # conv bias
        0.02 * jax.random.normal(keys[2], (8,), jnp.float32),           # bn gamma
        jnp.zeros((8,), jnp.float32),                                   # bn beta = 0
    )
    params["conv1"] = (
        0.02 * jax.random.normal(keys[3], (16, 8, 4, 4), jnp.float32),
        0.02 * jax.random.normal(keys[4], (16,), jnp.float32),
        0.02 * jax.random.normal(keys[5], (16,), jnp.float32),
        jnp.zeros((16,), jnp.float32),
    )
    params["fc2"] = (
        0.05 * jax.random.normal(keys[6], (32, 256), jnp.float32),
        0.05 * jax.random.normal(keys[7], (32,), jnp.float32),
        0.02 * jax.random.normal(keys[8], (32,), jnp.float32),
        jnp.zeros((32,), jnp.float32),
    )
    params["fc_out0"] = (
        0.05 * jax.random.normal(keys[9], (1, 32), jnp.float32),
        0.05 * jax.random.normal(keys[10], (1,), jnp.float32),
    )
    return params


# ----------------------------------------------------------------------------
# Pure-JAX f32 reference (PyTorch semantics, including the BN-cancelled biases)
# ----------------------------------------------------------------------------
def reference_forward(raw, x):
    hp = lax.Precision.HIGHEST

    def bn2d(y, g, b):
        mean = jnp.mean(y, axis=(0, 2, 3), keepdims=True)
        var = jnp.mean((y - mean) ** 2, axis=(0, 2, 3), keepdims=True)
        return ((y - mean) * lax.rsqrt(var + EPS) * g.reshape(1, -1, 1, 1)
                + b.reshape(1, -1, 1, 1))

    def lrelu(y):
        return jnp.where(y >= 0, y, SLOPE * y)

    w0, c0b, g0, be0 = raw["conv0"]
    w1, c1b, g1, be1 = raw["conv1"]
    w2, f2b, g2, be2 = raw["fc2"]
    w3, f3b = raw["fc_out0"]

    y = lax.conv_general_dilated(x, w0, (2, 2), ((1, 1), (1, 1)),
                                 dimension_numbers=("NCHW", "OIHW", "NCHW"),
                                 precision=hp) + c0b.reshape(1, -1, 1, 1)
    y = lrelu(bn2d(y, g0, be0))
    y = lax.conv_general_dilated(y, w1, (2, 2), ((1, 1), (1, 1)),
                                 dimension_numbers=("NCHW", "OIHW", "NCHW"),
                                 precision=hp) + c1b.reshape(1, -1, 1, 1)
    y = lrelu(bn2d(y, g1, be1))
    y = y.reshape(y.shape[0], -1)                      # PyTorch x.view(batch, -1)
    y = jnp.dot(y, w2.T, precision=hp) + f2b
    mean = jnp.mean(y, axis=0, keepdims=True)
    var = jnp.mean((y - mean) ** 2, axis=0, keepdims=True)
    y = lrelu((y - mean) * lax.rsqrt(var + EPS) * g2 + be2)
    return jnp.dot(y, w3.T, precision=hp) + f3b


if __name__ == "__main__":
    key = jax.random.PRNGKey(0)
    pkey, xkey = jax.random.split(key)
    raw = make_params(pkey)
    ops = prepare_operands(raw)        # one-time host-side weight preprocessing
    x = jax.random.normal(xkey, (2, 4, 16, 16), jnp.float32)   # NCHW input

    fwd = jax.jit(discriminator_forward)
    out = jax.block_until_ready(fwd(ops, x))
    assert out.shape == (2, 1), out.shape
    assert bool(jnp.all(jnp.isfinite(out)))

    # Cross-check the fused bf16-weight kernel against the f32 JAX reference.
    ref = jax.block_until_ready(jax.jit(reference_forward)(raw, x))
    assert bool(jnp.allclose(out, ref, rtol=5e-2, atol=5e-3)), (out, ref)

    print("KERNEL_OK")
</pallas_src>

<mosaic_0001>
module attributes {stable_mosaic.version = 11 : i64} {
  func.func @_discriminator_kernel(%arg0: i32, %arg1: memref<2x1024xbf16, #tpu.memory_space<vmem>>, %arg2: memref<1024x512xbf16, #tpu.memory_space<vmem>>, %arg3: memref<1x8xf32, #tpu.memory_space<vmem>>, %arg4: memref<1x8xf32, #tpu.memory_space<vmem>>, %arg5: memref<512x256xbf16, #tpu.memory_space<vmem>>, %arg6: memref<1x16xf32, #tpu.memory_space<vmem>>, %arg7: memref<1x16xf32, #tpu.memory_space<vmem>>, %arg8: memref<256x32xbf16, #tpu.memory_space<vmem>>, %arg9: memref<1x32xf32, #tpu.memory_space<vmem>>, %arg10: memref<1x32xf32, #tpu.memory_space<vmem>>, %arg11: memref<32x1xbf16, #tpu.memory_space<vmem>>, %arg12: memref<1x1xf32, #tpu.memory_space<vmem>>, %arg13: memref<2x1xf32, #tpu.memory_space<vmem>>) attributes {dimension_semantics = [#tpu.dimension_semantics<parallel>], iteration_bounds = array<i64: 1>, scalar_prefetch = 0 : i64, scratch_operands = 0 : i64, tpu.core_type = #tpu.core_type<tc>, window_params = [{transform_indices = @transform_0, window_bounds = array<i64: 2, 1024>}, {pipeline_mode = #tpu.pipeline_mode<synchronous>, transform_indices = @transform_1, window_bounds = array<i64: 1024, 512>}, {pipeline_mode = #tpu.pipeline_mode<synchronous>, transform_indices = @transform_2, window_bounds = array<i64: 1, 8>}, {pipeline_mode = #tpu.pipeline_mode<synchronous>, transform_indices = @transform_3, window_bounds = array<i64: 1, 8>}, {pipeline_mode = #tpu.pipeline_mode<synchronous>, transform_indices = @transform_4, window_bounds = array<i64: 512, 256>}, {pipeline_mode = #tpu.pipeline_mode<synchronous>, transform_indices = @transform_5, window_bounds = array<i64: 1, 16>}, {pipeline_mode = #tpu.pipeline_mode<synchronous>, transform_indices = @transform_6, window_bounds = array<i64: 1, 16>}, {pipeline_mode = #tpu.pipeline_mode<synchronous>, transform_indices = @transform_7, window_bounds = array<i64: 256, 32>}, {pipeline_mode = #tpu.pipeline_mode<synchronous>, transform_indices = @transform_8, window_bounds = array<i64: 1, 32>}, {pipeline_mode = #tpu.pipeline_mode<synchronous>, transform_indices = @transform_9, window_bounds = array<i64: 1, 32>}, {pipeline_mode = #tpu.pipeline_mode<synchronous>, transform_indices = @transform_10, window_bounds = array<i64: 32, 1>}, {pipeline_mode = #tpu.pipeline_mode<synchronous>, transform_indices = @transform_11, window_bounds = array<i64: 1, 1>}, {transform_indices = @transform_12, window_bounds = array<i64: 2, 1>}]} {
    %c0 = arith.constant 0 : index
    %c0_0 = arith.constant 0 : index
    %0 = vector.load %arg1[%c0, %c0_0] : memref<2x1024xbf16, #tpu.memory_space<vmem>>, vector<2x1024xbf16>
    %c0_1 = arith.constant 0 : index
    %c0_2 = arith.constant 0 : index
    %1 = vector.load %arg2[%c0_1, %c0_2] : memref<1024x512xbf16, #tpu.memory_space<vmem>>, vector<1024x512xbf16>
    %cst = arith.constant dense<0.000000e+00> : vector<2x512xf32>
    %2 = tpu.matmul %0, %1, %cst {dimension_numbers = #tpu.dot_dimension_numbers<[1], [0], [0], [1], [0, 0, 1, 1], [], []>} : vector<2x1024xbf16>, vector<1024x512xbf16>, vector<2x512xf32> -> vector<2x512xf32>
    %c0_3 = arith.constant 0 : index
    %c0_4 = arith.constant 0 : index
    %3 = vector.load %arg3[%c0_3, %c0_4] : memref<1x8xf32, #tpu.memory_space<vmem>>, vector<1x8xf32>
    %c0_5 = arith.constant 0 : index
    %c0_6 = arith.constant 0 : index
    %4 = vector.load %arg4[%c0_5, %c0_6] : memref<1x8xf32, #tpu.memory_space<vmem>>, vector<1x8xf32>
    %5 = tpu.iota {dimensions = array<i32: 0>} : vector<512x8xi32>
    %6 = tpu.iota {dimensions = array<i32: 1>} : vector<512x8xi32>
    %c64_i32 = arith.constant 64 : i32
    %7 = vector.broadcast %c64_i32 : i32 to vector<512x8xi32>
    %8 = arith.muli %6, %7 : vector<512x8xi32>
    %9 = arith.cmpi sge, %5, %8 : vector<512x8xi32>
    %c64_i32_7 = arith.constant 64 : i32
    %10 = vector.broadcast %c64_i32_7 : i32 to vector<512x8xi32>
    %11 = arith.addi %8, %10 : vector<512x8xi32>
    %12 = arith.cmpi slt, %5, %11 : vector<512x8xi32>
    %13 = arith.andi %9, %12 : vector<512x8xi1>
    %14 = arith.extui %13 : vector<512x8xi1> to vector<512x8xi32>
    %15 = arith.sitofp %14 : vector<512x8xi32> to vector<512x8xf32>
    %16 = tpu.iota {dimensions = array<i32: 1>} : vector<8x512xi32>
    %17 = tpu.iota {dimensions = array<i32: 0>} : vector<8x512xi32>
    %c64_i32_8 = arith.constant 64 : i32
    %18 = vector.broadcast %c64_i32_8 : i32 to vector<8x512xi32>
    %19 = arith.muli %17, %18 : vector<8x512xi32>
    %20 = arith.cmpi sge, %16, %19 : vector<8x512xi32>
    %c64_i32_9 = arith.constant 64 : i32
    %21 = vector.broadcast %c64_i32_9 : i32 to vector<8x512xi32>
    %22 = arith.addi %19, %21 : vector<8x512xi32>
    %23 = arith.cmpi slt, %16, %22 : vector<8x512xi32>
    %24 = arith.andi %20, %23 : vector<8x512xi1>
    %25 = arith.extui %24 : vector<8x512xi1> to vector<8x512xi32>
    %26 = arith.sitofp %25 : vector<8x512xi32> to vector<8x512xf32>
    %cst_10 = arith.constant dense<0.000000e+00> : vector<512xf32>
    %27 = vector.multi_reduction <add>, %2, %cst_10 [0] : vector<2x512xf32> to vector<512xf32>
    %28 = vector.shape_cast %27 : vector<512xf32> to vector<1x512xf32>
    %29 = arith.mulf %2, %2 : vector<2x512xf32>
    %cst_11 = arith.constant dense<0.000000e+00> : vector<512xf32>
    %30 = vector.multi_reduction <add>, %29, %cst_11 [0] : vector<2x512xf32> to vector<512xf32>
    %31 = vector.shape_cast %30 : vector<512xf32> to vector<1x512xf32>
    %32 = tpu.concatenate %28, %31 in 0 : vector<1x512xf32>, vector<1x512xf32> -> vector<2x512xf32>
    %cst_12 = arith.constant dense<0.000000e+00> : vector<2x8xf32>
    %33 = tpu.matmul %32, %15, %cst_12 {dimension_numbers = #tpu.dot_dimension_numbers<[1], [0], [0], [1], [0, 0, 1, 1], [], []>} : vector<2x512xf32>, vector<512x8xf32>, vector<2x8xf32> -> vector<2x8xf32>
    %34 = vector.extract_strided_slice %33 {offsets = [0, 0], sizes = [1, 8], strides = [1, 1]} : vector<2x8xf32> to vector<1x8xf32>
    %cst_13 = arith.constant 7.812500e-03 : f32
    %35 = vector.broadcast %cst_13 : f32 to vector<1x8xf32>
    %36 = arith.mulf %34, %35 : vector<1x8xf32>
    %37 = vector.extract_strided_slice %33 {offsets = [1, 0], sizes = [1, 8], strides = [1, 1]} : vector<2x8xf32> to vector<1x8xf32>
    %cst_14 = arith.constant 7.812500e-03 : f32
    %38 = vector.broadcast %cst_14 : f32 to vector<1x8xf32>
    %39 = arith.mulf %37, %38 : vector<1x8xf32>
    %40 = arith.mulf %36, %36 : vector<1x8xf32>
    %41 = arith.subf %39, %40 : vector<1x8xf32>
    %cst_15 = arith.constant 0.000000e+00 : f32
    %42 = vector.broadcast %cst_15 : f32 to vector<1x8xf32>
    %43 = arith.maximumf %41, %42 : vector<1x8xf32>
    %cst_16 = arith.constant 9.99999974E-6 : f32
    %44 = vector.broadcast %cst_16 : f32 to vector<1x8xf32>
    %45 = arith.addf %43, %44 : vector<1x8xf32>
    %46 = math.rsqrt %45 : vector<1x8xf32>
    %47 = arith.mulf %3, %46 : vector<1x8xf32>
    %48 = arith.mulf %36, %47 : vector<1x8xf32>
    %49 = arith.subf %4, %48 : vector<1x8xf32>
    %50 = tpu.concatenate %47, %49 in 0 : vector<1x8xf32>, vector<1x8xf32> -> vector<2x8xf32>
    %cst_17 = arith.constant dense<0.000000e+00> : vector<2x512xf32>
    %51 = tpu.matmul %50, %26, %cst_17 {dimension_numbers = #tpu.dot_dimension_numbers<[1], [0], [0], [1], [0, 0, 1, 1], [], []>} : vector<2x8xf32>, vector<8x512xf32>, vector<2x512xf32> -> vector<2x512xf32>
    %52 = vector.extract_strided_slice %51 {offsets = [0, 0], sizes = [1, 512], strides = [1, 1]} : vector<2x512xf32> to vector<1x512xf32>
    %53 = vector.broadcast %52 : vector<1x512xf32> to vector<2x512xf32>
    %54 = arith.mulf %2, %53 : vector<2x512xf32>
    %55 = vector.extract_strided_slice %51 {offsets = [1, 0], sizes = [1, 512], strides = [1, 1]} : vector<2x512xf32> to vector<1x512xf32>
    %56 = vector.broadcast %55 : vector<1x512xf32> to vector<2x512xf32>
    %57 = arith.addf %54, %56 : vector<2x512xf32>
    %cst_18 = arith.constant 2.000000e-01 : f32
    %58 = vector.broadcast %cst_18 : f32 to vector<2x512xf32>
    %59 = arith.mulf %58, %57 : vector<2x512xf32>
    %60 = arith.maximumf %57, %59 : vector<2x512xf32>
    %61 = arith.truncf %60 : vector<2x512xf32> to vector<2x512xbf16>
    %c0_19 = arith.constant 0 : index
    %c0_20 = arith.constant 0 : index
    %62 = vector.load %arg5[%c0_19, %c0_20] : memref<512x256xbf16, #tpu.memory_space<vmem>>, vector<512x256xbf16>
    %cst_21 = arith.constant dense<0.000000e+00> : vector<2x256xf32>
    %63 = tpu.matmul %61, %62, %cst_21 {dimension_numbers = #tpu.dot_dimension_numbers<[1], [0], [0], [1], [0, 0, 1, 1], [], []>} : vector<2x512xbf16>, vector<512x256xbf16>, vector<2x256xf32> -> vector<2x256xf32>
    %c0_22 = arith.constant 0 : index
    %c0_23 = arith.constant 0 : index
    %64 = vector.load %arg6[%c0_22, %c0_23] : memref<1x16xf32, #tpu.memory_space<vmem>>, vector<1x16xf32>
    %c0_24 = arith.constant 0 : index
    %c0_25 = arith.constant 0 : index
    %65 = vector.load %arg7[%c0_24, %c0_25] : memref<1x16xf32, #tpu.memory_space<vmem>>, vector<1x16xf32>
    %66 = tpu.iota {dimensions = array<i32: 0>} : vector<256x16xi32>
    %67 = tpu.iota {dimensions = array<i32: 1>} : vector<256x16xi32>
    %c16_i32 = arith.constant 16 : i32
    %68 = vector.broadcast %c16_i32 : i32 to vector<256x16xi32>
    %69 = arith.muli %67, %68 : vector<256x16xi32>
    %70 = arith.cmpi sge, %66, %69 : vector<256x16xi32>
    %c16_i32_26 = arith.constant 16 : i32
    %71 = vector.broadcast %c16_i32_26 : i32 to vector<256x16xi32>
    %72 = arith.addi %69, %71 : vector<256x16xi32>
    %73 = arith.cmpi slt, %66, %72 : vector<256x16xi32>
    %74 = arith.andi %70, %73 : vector<256x16xi1>
    %75 = arith.extui %74 : vector<256x16xi1> to vector<256x16xi32>
    %76 = arith.sitofp %75 : vector<256x16xi32> to vector<256x16xf32>
    %77 = tpu.iota {dimensions = array<i32: 1>} : vector<16x256xi32>
    %78 = tpu.iota {dimensions = array<i32: 0>} : vector<16x256xi32>
    %c16_i32_27 = arith.constant 16 : i32
    %79 = vector.broadcast %c16_i32_27 : i32 to vector<16x256xi32>
    %80 = arith.muli %78, %79 : vector<16x256xi32>
    %81 = arith.cmpi sge, %77, %80 : vector<16x256xi32>
    %c16_i32_28 = arith.constant 16 : i32
    %82 = vector.broadcast %c16_i32_28 : i32 to vector<16x256xi32>
    %83 = arith.addi %80, %82 : vector<16x256xi32>
    %84 = arith.cmpi slt, %77, %83 : vector<16x256xi32>
    %85 = arith.andi %81, %84 : vector<16x256xi1>
    %86 = arith.extui %85 : vector<16x256xi1> to vector<16x256xi32>
    %87 = arith.sitofp %86 : vector<16x256xi32> to vector<16x256xf32>
    %cst_29 = arith.constant dense<0.000000e+00> : vector<256xf32>
    %88 = vector.multi_reduction <add>, %63, %cst_29 [0] : vector<2x256xf32> to vector<256xf32>
    %89 = vector.shape_cast %88 : vector<256xf32> to vector<1x256xf32>
    %90 = arith.mulf %63, %63 : vector<2x256xf32>
    %cst_30 = arith.constant dense<0.000000e+00> : vector<256xf32>
    %91 = vector.multi_reduction <add>, %90, %cst_30 [0] : vector<2x256xf32> to vector<256xf32>
    %92 = vector.shape_cast %91 : vector<256xf32> to vector<1x256xf32>
    %93 = tpu.concatenate %89, %92 in 0 : vector<1x256xf32>, vector<1x256xf32> -> vector<2x256xf32>
    %cst_31 = arith.constant dense<0.000000e+00> : vector<2x16xf32>
    %94 = tpu.matmul %93, %76, %cst_31 {dimension_numbers = #tpu.dot_dimension_numbers<[1], [0], [0], [1], [0, 0, 1, 1], [], []>} : vector<2x256xf32>, vector<256x16xf32>, vector<2x16xf32> -> vector<2x16xf32>
    %95 = vector.extract_strided_slice %94 {offsets = [0, 0], sizes = [1, 16], strides = [1, 1]} : vector<2x16xf32> to vector<1x16xf32>
    %cst_32 = arith.constant 3.125000e-02 : f32
    %96 = vector.broadcast %cst_32 : f32 to vector<1x16xf32>
    %97 = arith.mulf %95, %96 : vector<1x16xf32>
    %98 = vector.extract_strided_slice %94 {offsets = [1, 0], sizes = [1, 16], strides = [1, 1]} : vector<2x16xf32> to vector<1x16xf32>
    %cst_33 = arith.constant 3.125000e-02 : f32
    %99 = vector.broadcast %cst_33 : f32 to vector<1x16xf32>
    %100 = arith.mulf %98, %99 : vector<1x16xf32>
    %101 = arith.mulf %97, %97 : vector<1x16xf32>
    %102 = arith.subf %100, %101 : vector<1x16xf32>
    %cst_34 = arith.constant 0.000000e+00 : f32
    %103 = vector.broadcast %cst_34 : f32 to vector<1x16xf32>
    %104 = arith.maximumf %102, %103 : vector<1x16xf32>
    %cst_35 = arith.constant 9.99999974E-6 : f32
    %105 = vector.broadcast %cst_35 : f32 to vector<1x16xf32>
    %106 = arith.addf %104, %105 : vector<1x16xf32>
    %107 = math.rsqrt %106 : vector<1x16xf32>
    %108 = arith.mulf %64, %107 : vector<1x16xf32>
    %109 = arith.mulf %97, %108 : vector<1x16xf32>
    %110 = arith.subf %65, %109 : vector<1x16xf32>
    %111 = tpu.concatenate %108, %110 in 0 : vector<1x16xf32>, vector<1x16xf32> -> vector<2x16xf32>
    %cst_36 = arith.constant dense<0.000000e+00> : vector<2x256xf32>
    %112 = tpu.matmul %111, %87, %cst_36 {dimension_numbers = #tpu.dot_dimension_numbers<[1], [0], [0], [1], [0, 0, 1, 1], [], []>} : vector<2x16xf32>, vector<16x256xf32>, vector<2x256xf32> -> vector<2x256xf32>
    %113 = vector.extract_strided_slice %112 {offsets = [0, 0], sizes = [1, 256], strides = [1, 1]} : vector<2x256xf32> to vector<1x256xf32>
    %114 = vector.broadcast %113 : vector<1x256xf32> to vector<2x256xf32>
    %115 = arith.mulf %63, %114 : vector<2x256xf32>
    %116 = vector.extract_strided_slice %112 {offsets = [1, 0], sizes = [1, 256], strides = [1, 1]} : vector<2x256xf32> to vector<1x256xf32>
    %117 = vector.broadcast %116 : vector<1x256xf32> to vector<2x256xf32>
    %118 = arith.addf %115, %117 : vector<2x256xf32>
    %cst_37 = arith.constant 2.000000e-01 : f32
    %119 = vector.broadcast %cst_37 : f32 to vector<2x256xf32>
    %120 = arith.mulf %119, %118 : vector<2x256xf32>
    %121 = arith.maximumf %118, %120 : vector<2x256xf32>
    %122 = arith.truncf %121 : vector<2x256xf32> to vector<2x256xbf16>
    %c0_38 = arith.constant 0 : index
    %c0_39 = arith.constant 0 : index
    %123 = vector.load %arg8[%c0_38, %c0_39] : memref<256x32xbf16, #tpu.memory_space<vmem>>, vector<256x32xbf16>
    %cst_40 = arith.constant dense<0.000000e+00> : vector<2x32xf32>
    %124 = tpu.matmul %122, %123, %cst_40 {dimension_numbers = #tpu.dot_dimension_numbers<[1], [0], [0], [1], [0, 0, 1, 1], [], []>} : vector<2x256xbf16>, vector<256x32xbf16>, vector<2x32xf32> -> vector<2x32xf32>
    %c0_41 = arith.constant 0 : index
    %c0_42 = arith.constant 0 : index
    %125 = vector.load %arg9[%c0_41, %c0_42] : memref<1x32xf32, #tpu.memory_space<vmem>>, vector<1x32xf32>
    %c0_43 = arith.constant 0 : index
    %c0_44 = arith.constant 0 : index
    %126 = vector.load %arg10[%c0_43, %c0_44] : memref<1x32xf32, #tpu.memory_space<vmem>>, vector<1x32xf32>
    %cst_45 = arith.constant dense<0.000000e+00> : vector<32xf32>
    %127 = vector.multi_reduction <add>, %124, %cst_45 [0] : vector<2x32xf32> to vector<32xf32>
    %128 = vector.shape_cast %127 : vector<32xf32> to vector<1x32xf32>
    %cst_46 = arith.constant 5.000000e-01 : f32
    %129 = vector.broadcast %cst_46 : f32 to vector<1x32xf32>
    %130 = arith.mulf %128, %129 : vector<1x32xf32>
    %131 = arith.mulf %124, %124 : vector<2x32xf32>
    %cst_47 = arith.constant dense<0.000000e+00> : vector<32xf32>
    %132 = vector.multi_reduction <add>, %131, %cst_47 [0] : vector<2x32xf32> to vector<32xf32>
    %133 = vector.shape_cast %132 : vector<32xf32> to vector<1x32xf32>
    %cst_48 = arith.constant 5.000000e-01 : f32
    %134 = vector.broadcast %cst_48 : f32 to vector<1x32xf32>
    %135 = arith.mulf %133, %134 : vector<1x32xf32>
    %136 = arith.mulf %130, %130 : vector<1x32xf32>
    %137 = arith.subf %135, %136 : vector<1x32xf32>
    %cst_49 = arith.constant 0.000000e+00 : f32
    %138 = vector.broadcast %cst_49 : f32 to vector<1x32xf32>
    %139 = arith.maximumf %137, %138 : vector<1x32xf32>
    %cst_50 = arith.constant 9.99999974E-6 : f32
    %140 = vector.broadcast %cst_50 : f32 to vector<1x32xf32>
    %141 = arith.addf %139, %140 : vector<1x32xf32>
    %142 = math.rsqrt %141 : vector<1x32xf32>
    %143 = arith.mulf %125, %142 : vector<1x32xf32>
    %144 = arith.mulf %130, %143 : vector<1x32xf32>
    %145 = arith.subf %126, %144 : vector<1x32xf32>
    %146 = vector.broadcast %143 : vector<1x32xf32> to vector<2x32xf32>
    %147 = arith.mulf %124, %146 : vector<2x32xf32>
    %148 = vector.broadcast %145 : vector<1x32xf32> to vector<2x32xf32>
    %149 = arith.addf %147, %148 : vector<2x32xf32>
    %cst_51 = arith.constant 2.000000e-01 : f32
    %150 = vector.broadcast %cst_51 : f32 to vector<2x32xf32>
    %151 = arith.mulf %150, %149 : vector<2x32xf32>
    %152 = arith.maximumf %149, %151 : vector<2x32xf32>
    %153 = arith.truncf %152 : vector<2x32xf32> to vector<2x32xbf16>
    %c0_52 = arith.constant 0 : index
    %c0_53 = arith.constant 0 : index
    %154 = vector.load %arg11[%c0_52, %c0_53] : memref<32x1xbf16, #tpu.memory_space<vmem>>, vector<32x1xbf16>
    %cst_54 = arith.constant dense<0.000000e+00> : vector<2x1xf32>
    %155 = tpu.matmul %153, %154, %cst_54 {dimension_numbers = #tpu.dot_dimension_numbers<[1], [0], [0], [1], [0, 0, 1, 1], [], []>} : vector<2x32xbf16>, vector<32x1xbf16>, vector<2x1xf32> -> vector<2x1xf32>
    %c0_55 = arith.constant 0 : index
    %c0_56 = arith.constant 0 : index
    %156 = vector.load %arg12[%c0_55, %c0_56] : memref<1x1xf32, #tpu.memory_space<vmem>>, vector<1x1xf32>
    %157 = vector.broadcast %156 : vector<1x1xf32> to vector<2x1xf32>
    %158 = arith.addf %155, %157 : vector<2x1xf32>
    %c0_57 = arith.constant 0 : index
    %c0_58 = arith.constant 0 : index
    %159 = vector.load %arg13[%c0_57, %c0_58] : memref<2x1xf32, #tpu.memory_space<vmem>>, vector<2x1xf32>
    tpu.vector_store %arg13[%c0_57, %c0_58], %158 {strides = array<i32>} : memref<2x1xf32, #tpu.memory_space<vmem>>, vector<2x1xf32>,
    return
  }
  func.func @transform_0(%arg0: i32) -> (i32, i32) {
    %c0_i32 = arith.constant 0 : i32
    %c0_i32_0 = arith.constant 0 : i32
    return %arg0, %c0_i32 : i32, i32
  }
  func.func @transform_1(%arg0: i32) -> (i32, i32) {
    %c0_i32 = arith.constant 0 : i32
    %c0_i32_0 = arith.constant 0 : i32
    %c0_i32_1 = arith.constant 0 : i32
    return %c0_i32, %c0_i32_0 : i32, i32
  }
  func.func @transform_2(%arg0: i32) -> (i32, i32) {
    %c0_i32 = arith.constant 0 : i32
    %c0_i32_0 = arith.constant 0 : i32
    %c0_i32_1 = arith.constant 0 : i32
    return %c0_i32, %c0_i32_0 : i32, i32
  }
  func.func @transform_3(%arg0: i32) -> (i32, i32) {
    %c0_i32 = arith.constant 0 : i32
    %c0_i32_0 = arith.constant 0 : i32
    %c0_i32_1 = arith.constant 0 : i32
    return %c0_i32, %c0_i32_0 : i32, i32
  }
  func.func @transform_4(%arg0: i32) -> (i32, i32) {
    %c0_i32 = arith.constant 0 : i32
    %c0_i32_0 = arith.constant 0 : i32
    %c0_i32_1 = arith.constant 0 : i32
    return %c0_i32, %c0_i32_0 : i32, i32
  }
  func.func @transform_5(%arg0: i32) -> (i32, i32) {
    %c0_i32 = arith.constant 0 : i32
    %c0_i32_0 = arith.constant 0 : i32
    %c0_i32_1 = arith.constant 0 : i32
    return %c0_i32, %c0_i32_0 : i32, i32
  }
  func.func @transform_6(%arg0: i32) -> (i32, i32) {
    %c0_i32 = arith.constant 0 : i32
    %c0_i32_0 = arith.constant 0 : i32
    %c0_i32_1 = arith.constant 0 : i32
    return %c0_i32, %c0_i32_0 : i32, i32
  }
  func.func @transform_7(%arg0: i32) -> (i32, i32) {
    %c0_i32 = arith.constant 0 : i32
    %c0_i32_0 = arith.constant 0 : i32
    %c0_i32_1 = arith.constant 0 : i32
    return %c0_i32, %c0_i32_0 : i32, i32
  }
  func.func @transform_8(%arg0: i32) -> (i32, i32) {
    %c0_i32 = arith.constant 0 : i32
    %c0_i32_0 = arith.constant 0 : i32
    %c0_i32_1 = arith.constant 0 : i32
    return %c0_i32, %c0_i32_0 : i32, i32
  }
  func.func @transform_9(%arg0: i32) -> (i32, i32) {
    %c0_i32 = arith.constant 0 : i32
    %c0_i32_0 = arith.constant 0 : i32
    %c0_i32_1 = arith.constant 0 : i32
    return %c0_i32, %c0_i32_0 : i32, i32
  }
  func.func @transform_10(%arg0: i32) -> (i32, i32) {
    %c0_i32 = arith.constant 0 : i32
    %c0_i32_0 = arith.constant 0 : i32
    %c0_i32_1 = arith.constant 0 : i32
    return %c0_i32, %c0_i32_0 : i32, i32
  }
  func.func @transform_11(%arg0: i32) -> (i32, i32) {
    %c0_i32 = arith.constant 0 : i32
    %c0_i32_0 = arith.constant 0 : i32
    %c0_i32_1 = arith.constant 0 : i32
    return %c0_i32, %c0_i32_0 : i32, i32
  }
  func.func @transform_12(%arg0: i32) -> (i32, i32) {
    %c0_i32 = arith.constant 0 : i32
    %c0_i32_0 = arith.constant 0 : i32
    return %arg0, %c0_i32 : i32, i32
  }
}

</mosaic_0001>

<llo_original>
// kernel: discriminator_forward.1
$region0: #{discriminator_forward.1}
  #allocation0 [shape = 'u32[]', space=smem, size = 0x4, offset = 0x4, fixed_abs, tag = 'smem constant byte address 0x4 - core index']
  #allocation1 [shape = 'u32[144,128]{1,0:T(1,128)}', space=vmem, size = 0x12000, scoped, tag = 'internal scratch']
  #allocation2 [shape = 'f32[1,1]{1,0:T(1,128)S(1)}', space=vmem, size = 0x200, scoped, tag = 'scoped memory for discriminator_forward.1']
  %s0 = inlined_call_operand.vmem [shape: bf16[2,1024], index: 0, kind: input, shape index: {}]
  %s1 = inlined_call_operand.hbm [shape: bf16[1024,512], index: 1, kind: input, shape index: {}]
  %s2 = inlined_call_operand.vmem [shape: f32[1,8], index: 2, kind: input, shape index: {}]
  %s3 = inlined_call_operand.vmem [shape: f32[1,8], index: 3, kind: input, shape index: {}]
  %s4 = inlined_call_operand.hbm [shape: bf16[512,256], index: 4, kind: input, shape index: {}]
  %s5 = inlined_call_operand.vmem [shape: f32[1,16], index: 5, kind: input, shape index: {}]
  %s6 = inlined_call_operand.vmem [shape: f32[1,16], index: 6, kind: input, shape index: {}]
  %s7 = inlined_call_operand.vmem [shape: bf16[256,32], index: 7, kind: input, shape index: {}]
  %s8 = inlined_call_operand.vmem [shape: f32[1,32], index: 8, kind: input, shape index: {}]
  %s9 = inlined_call_operand.vmem [shape: f32[1,32], index: 9, kind: input, shape index: {}]
  %s10 = inlined_call_operand.vmem [shape: bf16[32,1], index: 10, kind: input, shape index: {}]
  %s11 = inlined_call_operand.<no memory space> [shape: f32[1,1], index: 11, kind: input, shape index: {}]
  %s12 = inlined_call_operand.vmem [shape: f32[2,1], index: 12, kind: output, shape index: {}]
  %s13 = sld [smem:[#allocation0]]
  $region66: #{discriminator_forward.1} parent=0
    _
  %s15 = ssub.s32 1, %s13
  %s16 = scalar_select 0, %s15, %s13
  %v17 = vstv %s11
  %18 = vst [vmem:[#allocation2] sm:$0x1] %v17
  $region1: #{discriminator_forward.1} parent=0
    #allocation3 [shape = 'u8[1048576]{0}', space=vmem, size = 0x100000, scoped, tag = 'input window, operand 1, single buffered']
    #allocation4 [shape = 's32[1]{0}', space=sflag, size = 0x4, scoped, tag = 'scoped memory for discriminator_forward.1']
    #allocation5 [shape = 'u8[262144]{0}', space=vmem, size = 0x40000, scoped, tag = 'input window, operand 4, single buffered']
    #allocation6 [shape = 's32[1]{0}', space=sflag, size = 0x4, scoped, tag = 'scoped memory for discriminator_forward.1']
    %19 = vsyncpa [#allocation4], 0
    %20 = vsyncpa [#allocation6], 0
    // Predicated region
    $region2: #{discriminator_forward.1} parent=1 // pred_check
      _
    $region3: #{discriminator_forward.1} parent=1 // pred_check_branch
      %22 = sbr.rel (0) target = $region5
    $region4: #{discriminator_forward.1} parent=1 // pred_region
      _
    $region5: #{discriminator_forward.1} parent=1 // pred_fallthru
      _
    // Predicated region
    $region6: #{discriminator_forward.1} parent=1 // pred_check
      _
    $region7: #{discriminator_forward.1} parent=1 // pred_check_branch
      %24 = sbr.rel (0) target = $region9
    $region8: #{discriminator_forward.1} parent=1 // pred_region
      %s26 = ssub.s32 32768, 32768
      %27 = vsyncadd [#allocation4], %s26
      %s28 = sshll.u32 [#allocation3], 4
      %s29 = int_to_ptr.vmem [resolvable:$true] %s28
      %34 = dma.hbm_to_vmem [thread:$0]  %s1, 32768, %s29, [#allocation4], 256, 256, 16
    $region9: #{discriminator_forward.1} parent=1 // pred_fallthru
      _
    // Predicated region
    $region10: #{discriminator_forward.1} parent=1 // pred_check
      _
    $region11: #{discriminator_forward.1} parent=1 // pred_check_branch
      %36 = sbr.rel (0) target = $region13
    $region12: #{discriminator_forward.1} parent=1 // pred_region
      _
    $region13: #{discriminator_forward.1} parent=1 // pred_fallthru
      _
    // Predicated region
    $region14: #{discriminator_forward.1} parent=1 // pred_check
      _
    $region15: #{discriminator_forward.1} parent=1 // pred_check_branch
      %38 = sbr.rel (0) target = $region17
    $region16: #{discriminator_forward.1} parent=1 // pred_region
      _
    $region17: #{discriminator_forward.1} parent=1 // pred_fallthru
      _
    // Predicated region
    $region18: #{discriminator_forward.1} parent=1 // pred_check
      _
    $region19: #{discriminator_forward.1} parent=1 // pred_check_branch
      %40 = sbr.rel (0) target = $region21
    $region20: #{discriminator_forward.1} parent=1 // pred_region
      %s42 = ssub.s32 8192, 8192
      %43 = vsyncadd [#allocation6], %s42
      %s44 = sshll.u32 [#allocation5], 4
      %s45 = int_to_ptr.vmem [resolvable:$true] %s44
      %50 = dma.hbm_to_vmem [thread:$0]  %s4, 8192, %s45, [#allocation6], 128, 128, 8
    $region21: #{discriminator_forward.1} parent=1 // pred_fallthru
      _
    // Predicated region
    $region22: #{discriminator_forward.1} parent=1 // pred_check
      _
    $region23: #{discriminator_forward.1} parent=1 // pred_check_branch
      %52 = sbr.rel (0) target = $region25
    $region24: #{discriminator_forward.1} parent=1 // pred_region
      _
    $region25: #{discriminator_forward.1} parent=1 // pred_fallthru
      _
    // Predicated region
    $region26: #{discriminator_forward.1} parent=1 // pred_check
      _
    $region27: #{discriminator_forward.1} parent=1 // pred_check_branch
      %54 = sbr.rel (0) target = $region29
    $region28: #{discriminator_forward.1} parent=1 // pred_region
      _
    $region29: #{discriminator_forward.1} parent=1 // pred_fallthru
      _
    // Predicated region
    $region30: #{discriminator_forward.1} parent=1 // pred_check
      _
    $region31: #{discriminator_forward.1} parent=1 // pred_check_branch
      %56 = sbr.rel (0) target = $region33
    $region32: #{discriminator_forward.1} parent=1 // pred_region
      _
    $region33: #{discriminator_forward.1} parent=1 // pred_fallthru
      _
    // Predicated region
    $region34: #{discriminator_forward.1} parent=1 // pred_check
      _
    $region35: #{discriminator_forward.1} parent=1 // pred_check_branch
      %58 = sbr.rel (0) target = $region37
    $region36: #{discriminator_forward.1} parent=1 // pred_region
      _
    $region37: #{discriminator_forward.1} parent=1 // pred_fallthru
      _
    // Predicated region
    $region38: #{discriminator_forward.1} parent=1 // pred_check
      _
    $region39: #{discriminator_forward.1} parent=1 // pred_check_branch
      %60 = sbr.rel (0) target = $region41
    $region40: #{discriminator_forward.1} parent=1 // pred_region
      _
    $region41: #{discriminator_forward.1} parent=1 // pred_fallthru
      _
    // Predicated region
    $region42: #{discriminator_forward.1} parent=1 // pred_check
      _
    $region43: #{discriminator_forward.1} parent=1 // pred_check_branch
      %62 = sbr.rel (0) target = $region45
    $region44: #{discriminator_forward.1} parent=1 // pred_region
      _
    $region45: #{discriminator_forward.1} parent=1 // pred_fallthru
      _
    // Predicated region
    $region46: #{discriminator_forward.1} parent=1 // pred_check
      _
    $region47: #{discriminator_forward.1} parent=1 // pred_check_branch
      %64 = sbr.rel (0) target = $region49
    $region48: #{discriminator_forward.1} parent=1 // pred_region
      _
    $region49: #{discriminator_forward.1} parent=1 // pred_fallthru
      _
    // Predicated region
    $region50: #{discriminator_forward.1} parent=1 // pred_check
      _
    $region51: #{discriminator_forward.1} parent=1 // pred_check_branch
      %66 = sbr.rel (0) target = $region53
    $region52: #{discriminator_forward.1} parent=1 // pred_region
      %67 = dma.done [#allocation4], 32768
    $region53: #{discriminator_forward.1} parent=1 // pred_fallthru
      _
    // Predicated region
    $region54: #{discriminator_forward.1} parent=1 // pred_check
      _
    $region55: #{discriminator_forward.1} parent=1 // pred_check_branch
      %69 = sbr.rel (0) target = $region57
    $region56: #{discriminator_forward.1} parent=1 // pred_region
      %70 = dma.done [#allocation6], 8192
    $region57: #{discriminator_forward.1} parent=1 // pred_fallthru
      _
    %v72 = vld [vmem:[%s0] sm:$0xff]
    %v73 = vld [vmem:[#allocation3] sm:$0xff]
    %v74 = vld [vmem:[#allocation3 + $0x8] sm:$0xff]
    %v75 = vld [vmem:[#allocation3 + $0x10] sm:$0xff]
    %v76 = vld [vmem:[#allocation3 + $0x18] sm:$0xff]
    %v77 = vld [vmem:[#allocation3 + $0x20] sm:$0xff]
    %v78 = vld [vmem:[#allocation3 + $0x28] sm:$0xff]
    %v79 = vld [vmem:[#allocation3 + $0x30] sm:$0xff]
    %v80 = vld [vmem:[#allocation3 + $0x38] sm:$0xff]
    %v81 = vld [vmem:[#allocation3 + $0x40] sm:$0xff]
    %v82 = vld [vmem:[#allocation3 + $0x48] sm:$0xff]
    %v83 = vld [vmem:[#allocation3 + $0x50] sm:$0xff]
    %v84 = vld [vmem:[#allocation3 + $0x58] sm:$0xff]
    %v85 = vld [vmem:[#allocation3 + $0x60] sm:$0xff]
    %v86 = vld [vmem:[#allocation3 + $0x68] sm:$0xff]
    %v87 = vld [vmem:[#allocation3 + $0x70] sm:$0xff]
    %v88 = vld [vmem:[#allocation3 + $0x78] sm:$0xff]
    %v89 = vld [vmem:[#allocation3 + $0x80] sm:$0xff]
    %v90 = vld [vmem:[#allocation3 + $0x88] sm:$0xff]
    %v91 = vld [vmem:[#allocation3 + $0x90] sm:$0xff]
    %v92 = vld [vmem:[#allocation3 + $0x98] sm:$0xff]
    %v93 = vld [vmem:[#allocation3 + $0xa0] sm:$0xff]
    %v94 = vld [vmem:[#allocation3 + $0xa8] sm:$0xff]
    %v95 = vld [vmem:[#allocation3 + $0xb0] sm:$0xff]
    %v96 = vld [vmem:[#allocation3 + $0xb8] sm:$0xff]
    %v97 = vld [vmem:[#allocation3 + $0xc0] sm:$0xff]
    %v98 = vld [vmem:[#allocation3 + $0xc8] sm:$0xff]
    %v99 = vld [vmem:[#allocation3 + $0xd0] sm:$0xff]
    %v100 = vld [vmem:[#allocation3 + $0xd8] sm:$0xff]
    %v101 = vld [vmem:[#allocation3 + $0xe0] sm:$0xff]
    %v102 = vld [vmem:[#allocation3 + $0xe8] sm:$0xff]
    %v103 = vld [vmem:[#allocation3 + $0xf0] sm:$0xff]
    %v104 = vld [vmem:[#allocation3 + $0xf8] sm:$0xff]
    %v105 = vld [vmem:[#allocation3 + $0x100] sm:$0xff]
    %v106 = vld [vmem:[#allocation3 + $0x108] sm:$0xff]
    %v107 = vld [vmem:[#allocation3 + $0x110] sm:$0xff]
    %v108 = vld [vmem:[#allocation3 + $0x118] sm:$0xff]
    %v109 = vld [vmem:[#allocation3 + $0x120] sm:$0xff]
    %v110 = vld [vmem:[#allocation3 + $0x128] sm:$0xff]
    %v111 = vld [vmem:[#allocation3 + $0x130] sm:$0xff]
    %v112 = vld [vmem:[#allocation3 + $0x138] sm:$0xff]
    %v113 = vld [vmem:[#allocation3 + $0x140] sm:$0xff]
    %v114 = vld [vmem:[#allocation3 + $0x148] sm:$0xff]
    %v115 = vld [vmem:[#allocation3 + $0x150] sm:$0xff]
    %v116 = vld [vmem:[#allocation3 + $0x158] sm:$0xff]
    %v117 = vld [vmem:[#allocation3 + $0x160] sm:$0xff]
    %v118 = vld [vmem:[#allocation3 + $0x168] sm:$0xff]
    %v119 = vld [vmem:[#allocation3 + $0x170] sm:$0xff]
    %v120 = vld [vmem:[#allocation3 + $0x178] sm:$0xff]
    %v121 = vld [vmem:[#allocation3 + $0x180] sm:$0xff]
    %v122 = vld [vmem:[#allocation3 + $0x188] sm:$0xff]
    %v123 = vld [vmem:[#allocation3 + $0x190] sm:$0xff]
    %v124 = vld [vmem:[#allocation3 + $0x198] sm:$0xff]
    %v125 = vld [vmem:[#allocation3 + $0x1a0] sm:$0xff]
    %v126 = vld [vmem:[#allocation3 + $0x1a8] sm:$0xff]
    %v127 = vld [vmem:[#allocation3 + $0x1b0] sm:$0xff]
    %v128 = vld [vmem:[#allocation3 + $0x1b8] sm:$0xff]
    %v129 = vld [vmem:[#allocation3 + $0x1c0] sm:$0xff]
    %v130 = vld [vmem:[#allocation3 + $0x1c8] sm:$0xff]
    %v131 = vld [vmem:[#allocation3 + $0x1d0] sm:$0xff]
    %v132 = vld [vmem:[#allocation3 + $0x1d8] sm:$0xff]
    %v133 = vld [vmem:[#allocation3 + $0x1e0] sm:$0xff]
    %v134 = vld [vmem:[#allocation3 + $0x1e8] sm:$0xff]
    %v135 = vld [vmem:[#allocation3 + $0x1f0] sm:$0xff]
    %v136 = vld [vmem:[#allocation3 + $0x1f8] sm:$0xff]
    %v137 = vld [vmem:[#allocation3 + $0x200] sm:$0xff]
    %v138 = vld [vmem:[#allocation3 + $0x208] sm:$0xff]
    %v139 = vld [vmem:[#allocation3 + $0x210] sm:$0xff]
    %v140 = vld [vmem:[#allocation3 + $0x218] sm:$0xff]
    %v141 = vld [vmem:[#allocation3 + $0x220] sm:$0xff]
    %v142 = vld [vmem:[#allocation3 + $0x228] sm:$0xff]
    %v143 = vld [vmem:[#allocation3 + $0x230] sm:$0xff]
    %v144 = vld [vmem:[#allocation3 + $0x238] sm:$0xff]
    %v145 = vld [vmem:[#allocation3 + $0x240] sm:$0xff]
    %v146 = vld [vmem:[#allocation3 + $0x248] sm:$0xff]
    %v147 = vld [vmem:[#allocation3 + $0x250] sm:$0xff]
    %v148 = vld [vmem:[#allocation3 + $0x258] sm:$0xff]
    %v149 = vld [vmem:[#allocation3 + $0x260] sm:$0xff]
    %v150 = vld [vmem:[#allocation3 + $0x268] sm:$0xff]
    %v151 = vld [vmem:[#allocation3 + $0x270] sm:$0xff]
    %v152 = vld [vmem:[#allocation3 + $0x278] sm:$0xff]
    %v153 = vld [vmem:[#allocation3 + $0x280] sm:$0xff]
    %v154 = vld [vmem:[#allocation3 + $0x288] sm:$0xff]
    %v155 = vld [vmem:[#allocation3 + $0x290] sm:$0xff]
    %v156 = vld [vmem:[#allocation3 + $0x298] sm:$0xff]
    %v157 = vld [vmem:[#allocation3 + $0x2a0] sm:$0xff]
    %v158 = vld [vmem:[#allocation3 + $0x2a8] sm:$0xff]
    %v159 = vld [vmem:[#allocation3 + $0x2b0] sm:$0xff]
    %v160 = vld [vmem:[#allocation3 + $0x2b8] sm:$0xff]
    %v161 = vld [vmem:[#allocation3 + $0x2c0] sm:$0xff]
    %v162 = vld [vmem:[#allocation3 + $0x2c8] sm:$0xff]
    %v163 = vld [vmem:[#allocation3 + $0x2d0] sm:$0xff]
    %v164 = vld [vmem:[#allocation3 + $0x2d8] sm:$0xff]
    %v165 = vld [vmem:[#allocation3 + $0x2e0] sm:$0xff]
    %v166 = vld [vmem:[#allocation3 + $0x2e8] sm:$0xff]
    %v167 = vld [vmem:[#allocation3 + $0x2f0] sm:$0xff]
    %v168 = vld [vmem:[#allocation3 + $0x2f8] sm:$0xff]
    %v169 = vld [vmem:[#allocation3 + $0x300] sm:$0xff]
    %v170 = vld [vmem:[#allocation3 + $0x308] sm:$0xff]
    %v171 = vld [vmem:[#allocation3 + $0x310] sm:$0xff]
    %v172 = vld [vmem:[#allocation3 + $0x318] sm:$0xff]
    %v173 = vld [vmem:[#allocation3 + $0x320] sm:$0xff]
    %v174 = vld [vmem:[#allocation3 + $0x328] sm:$0xff]
    %v175 = vld [vmem:[#allocation3 + $0x330] sm:$0xff]
    %v176 = vld [vmem:[#allocation3 + $0x338] sm:$0xff]
    %v177 = vld [vmem:[#allocation3 + $0x340] sm:$0xff]
    %v178 = vld [vmem:[#allocation3 + $0x348] sm:$0xff]
    %v179 = vld [vmem:[#allocation3 + $0x350] sm:$0xff]
    %v180 = vld [vmem:[#allocation3 + $0x358] sm:$0xff]
    %v181 = vld [vmem:[#allocation3 + $0x360] sm:$0xff]
    %v182 = vld [vmem:[#allocation3 + $0x368] sm:$0xff]
    %v183 = vld [vmem:[#allocation3 + $0x370] sm:$0xff]
    %v184 = vld [vmem:[#allocation3 + $0x378] sm:$0xff]
    %v185 = vld [vmem:[#allocation3 + $0x380] sm:$0xff]
    %v186 = vld [vmem:[#allocation3 + $0x388] sm:$0xff]
    %v187 = vld [vmem:[#allocation3 + $0x390] sm:$0xff]
    %v188 = vld [vmem:[#allocation3 + $0x398] sm:$0xff]
    %v189 = vld [vmem:[#allocation3 + $0x3a0] sm:$0xff]
    %v190 = vld [vmem:[#allocation3 + $0x3a8] sm:$0xff]
    %v191 = vld [vmem:[#allocation3 + $0x3b0] sm:$0xff]
    %v192 = vld [vmem:[#allocation3 + $0x3b8] sm:$0xff]
    %v193 = vld [vmem:[#allocation3 + $0x3c0] sm:$0xff]
    %v194 = vld [vmem:[#allocation3 + $0x3c8] sm:$0xff]
    %v195 = vld [vmem:[#allocation3 + $0x3d0] sm:$0xff]
    %v196 = vld [vmem:[#allocation3 + $0x3d8] sm:$0xff]
    %v197 = vld [vmem:[#allocation3 + $0x3e0] sm:$0xff]
    %v198 = vld [vmem:[#allocation3 + $0x3e8] sm:$0xff]
    %v199 = vld [vmem:[#allocation3 + $0x3f0] sm:$0xff]
    %v200 = vld [vmem:[#allocation3 + $0x3f8] sm:$0xff]
    %v201 = vld [vmem:[#allocation3 + $0x400] sm:$0xff]
    %v202 = vld [vmem:[#allocation3 + $0x408] sm:$0xff]
    %v203 = vld [vmem:[#allocation3 + $0x410] sm:$0xff]
    %v204 = vld [vmem:[#allocation3 + $0x418] sm:$0xff]
    %v205 = vld [vmem:[#allocation3 + $0x420] sm:$0xff]
    %v206 = vld [vmem:[#allocation3 + $0x428] sm:$0xff]
    %v207 = vld [vmem:[#allocation3 + $0x430] sm:$0xff]
    %v208 = vld [vmem:[#allocation3 + $0x438] sm:$0xff]
    %v209 = vld [vmem:[#allocation3 + $0x440] sm:$0xff]
    %v210 = vld [vmem:[#allocation3 + $0x448] sm:$0xff]
    %v211 = vld [vmem:[#allocation3 + $0x450] sm:$0xff]
    %v212 = vld [vmem:[#allocation3 + $0x458] sm:$0xff]
    %v213 = vld [vmem:[#allocation3 + $0x460] sm:$0xff]
    %v214 = vld [vmem:[#allocation3 + $0x468] sm:$0xff]
    %v215 = vld [vmem:[#allocation3 + $0x470] sm:$0xff]
    %v216 = vld [vmem:[#allocation3 + $0x478] sm:$0xff]
    %v217 = vld [vmem:[#allocation3 + $0x480] sm:$0xff]
    %v218 = vld [vmem:[#allocation3 + $0x488] sm:$0xff]
    %v219 = vld [vmem:[#allocation3 + $0x490] sm:$0xff]
    %v220 = vld [vmem:[#allocation3 + $0x498] sm:$0xff]
    %v221 = vld [vmem:[#allocation3 + $0x4a0] sm:$0xff]
    %v222 = vld [vmem:[#allocation3 + $0x4a8] sm:$0xff]
    %v223 = vld [vmem:[#allocation3 + $0x4b0] sm:$0xff]
    %v224 = vld [vmem:[#allocation3 + $0x4b8] sm:$0xff]
    %v225 = vld [vmem:[#allocation3 + $0x4c0] sm:$0xff]
    %v226 = vld [vmem:[#allocation3 + $0x4c8] sm:$0xff]
    %v227 = vld [vmem:[#allocation3 + $0x4d0] sm:$0xff]
    %v228 = vld [vmem:[#allocation3 + $0x4d8] sm:$0xff]
    %v229 = vld [vmem:[#allocation3 + $0x4e0] sm:$0xff]
    %v230 = vld [vmem:[#allocation3 + $0x4e8] sm:$0xff]
    %v231 = vld [vmem:[#allocation3 + $0x4f0] sm:$0xff]
    %v232 = vld [vmem:[#allocation3 + $0x4f8] sm:$0xff]
    %v233 = vld [vmem:[#allocation3 + $0x500] sm:$0xff]
    %v234 = vld [vmem:[#allocation3 + $0x508] sm:$0xff]
    %v235 = vld [vmem:[#allocation3 + $0x510] sm:$0xff]
    %v236 = vld [vmem:[#allocation3 + $0x518] sm:$0xff]
    %v237 = vld [vmem:[#allocation3 + $0x520] sm:$0xff]
    %v238 = vld [vmem:[#allocation3 + $0x528] sm:$0xff]
    %v239 = vld [vmem:[#allocation3 + $0x530] sm:$0xff]
    %v240 = vld [vmem:[#allocation3 + $0x538] sm:$0xff]
    %v241 = vld [vmem:[#allocation3 + $0x540] sm:$0xff]
    %v242 = vld [vmem:[#allocation3 + $0x548] sm:$0xff]
    %v243 = vld [vmem:[#allocation3 + $0x550] sm:$0xff]
    %v244 = vld [vmem:[#allocation3 + $0x558] sm:$0xff]
    %v245 = vld [vmem:[#allocation3 + $0x560] sm:$0xff]
    %v246 = vld [vmem:[#allocation3 + $0x568] sm:$0xff]
    %v247 = vld [vmem:[#allocation3 + $0x570] sm:$0xff]
    %v248 = vld [vmem:[#allocation3 + $0x578] sm:$0xff]
    %v249 = vld [vmem:[#allocation3 + $0x580] sm:$0xff]
    %v250 = vld [vmem:[#allocation3 + $0x588] sm:$0xff]
    %v251 = vld [vmem:[#allocation3 + $0x590] sm:$0xff]
    %v252 = vld [vmem:[#allocation3 + $0x598] sm:$0xff]
    %v253 = vld [vmem:[#allocation3 + $0x5a0] sm:$0xff]
    %v254 = vld [vmem:[#allocation3 + $0x5a8] sm:$0xff]
    %v255 = vld [vmem:[#allocation3 + $0x5b0] sm:$0xff]
    %v256 = vld [vmem:[#allocation3 + $0x5b8] sm:$0xff]
    %v257 = vld [vmem:[#allocation3 + $0x5c0] sm:$0xff]
    %v258 = vld [vmem:[#allocation3 + $0x5c8] sm:$0xff]
    %v259 = vld [vmem:[#allocation3 + $0x5d0] sm:$0xff]
    %v260 = vld [vmem:[#allocation3 + $0x5d8] sm:$0xff]
    %v261 = vld [vmem:[#allocation3 + $0x5e0] sm:$0xff]
    %v262 = vld [vmem:[#allocation3 + $0x5e8] sm:$0xff]
    %v263 = vld [vmem:[#allocation3 + $0x5f0] sm:$0xff]
    %v264 = vld [vmem:[#allocation3 + $0x5f8] sm:$0xff]
    %v265 = vld [vmem:[#allocation3 + $0x600] sm:$0xff]
    %v266 = vld [vmem:[#allocation3 + $0x608] sm:$0xff]
    %v267 = vld [vmem:[#allocation3 + $0x610] sm:$0xff]
    %v268 = vld [vmem:[#allocation3 + $0x618] sm:$0xff]
    %v269 = vld [vmem:[#allocation3 + $0x620] sm:$0xff]
    %v270 = vld [vmem:[#allocation3 + $0x628] sm:$0xff]
    %v271 = vld [vmem:[#allocation3 + $0x630] sm:$0xff]
    %v272 = vld [vmem:[#allocation3 + $0x638] sm:$0xff]
    %v273 = vld [vmem:[#allocation3 + $0x640] sm:$0xff]
    %v274 = vld [vmem:[#allocation3 + $0x648] sm:$0xff]
    %v275 = vld [vmem:[#allocation3 + $0x650] sm:$0xff]
    %v276 = vld [vmem:[#allocation3 + $0x658] sm:$0xff]
    %v277 = vld [vmem:[#allocation3 + $0x660] sm:$0xff]
    %v278 = vld [vmem:[#allocation3 + $0x668] sm:$0xff]
    %v279 = vld [vmem:[#allocation3 + $0x670] sm:$0xff]
    %v280 = vld [vmem:[#allocation3 + $0x678] sm:$0xff]
    %v281 = vld [vmem:[#allocation3 + $0x680] sm:$0xff]
    %v282 = vld [vmem:[#allocation3 + $0x688] sm:$0xff]
    %v283 = vld [vmem:[#allocation3 + $0x690] sm:$0xff]
    %v284 = vld [vmem:[#allocation3 + $0x698] sm:$0xff]
    %v285 = vld [vmem:[#allocation3 + $0x6a0] sm:$0xff]
    %v286 = vld [vmem:[#allocation3 + $0x6a8] sm:$0xff]
    %v287 = vld [vmem:[#allocation3 + $0x6b0] sm:$0xff]
    %v288 = vld [vmem:[#allocation3 + $0x6b8] sm:$0xff]
    %v289 = vld [vmem:[#allocation3 + $0x6c0] sm:$0xff]
    %v290 = vld [vmem:[#allocation3 + $0x6c8] sm:$0xff]
    %v291 = vld [vmem:[#allocation3 + $0x6d0] sm:$0xff]
    %v292 = vld [vmem:[#allocation3 + $0x6d8] sm:$0xff]
    %v293 = vld [vmem:[#allocation3 + $0x6e0] sm:$0xff]
    %v294 = vld [vmem:[#allocation3 + $0x6e8] sm:$0xff]
    %v295 = vld [vmem:[#allocation3 + $0x6f0] sm:$0xff]
    %v296 = vld [vmem:[#allocation3 + $0x6f8] sm:$0xff]
    %v297 = vld [vmem:[#allocation3 + $0x700] sm:$0xff]
    %v298 = vld [vmem:[#allocation3 + $0x708] sm:$0xff]
    %v299 = vld [vmem:[#allocation3 + $0x710] sm:$0xff]
    %v300 = vld [vmem:[#allocation3 + $0x718] sm:$0xff]
    %v301 = vld [vmem:[#allocation3 + $0x720] sm:$0xff]
    %v302 = vld [vmem:[#allocation3 + $0x728] sm:$0xff]
    %v303 = vld [vmem:[#allocation3 + $0x730] sm:$0xff]
    %v304 = vld [vmem:[#allocation3 + $0x738] sm:$0xff]
    %v305 = vld [vmem:[#allocation3 + $0x740] sm:$0xff]
    %v306 = vld [vmem:[#allocation3 + $0x748] sm:$0xff]
    %v307 = vld [vmem:[#allocation3 + $0x750] sm:$0xff]
    %v308 = vld [vmem:[#allocation3 + $0x758] sm:$0xff]
    %v309 = vld [vmem:[#allocation3 + $0x760] sm:$0xff]
    %v310 = vld [vmem:[#allocation3 + $0x768] sm:$0xff]
    %v311 = vld [vmem:[#allocation3 + $0x770] sm:$0xff]
    %v312 = vld [vmem:[#allocation3 + $0x778] sm:$0xff]
    %v313 = vld [vmem:[#allocation3 + $0x780] sm:$0xff]
    %v314 = vld [vmem:[#allocation3 + $0x788] sm:$0xff]
    %v315 = vld [vmem:[#allocation3 + $0x790] sm:$0xff]
    %v316 = vld [vmem:[#allocation3 + $0x798] sm:$0xff]
    %v317 = vld [vmem:[#allocation3 + $0x7a0] sm:$0xff]
    %v318 = vld [vmem:[#allocation3 + $0x7a8] sm:$0xff]
    %v319 = vld [vmem:[#allocation3 + $0x7b0] sm:$0xff]
    %v320 = vld [vmem:[#allocation3 + $0x7b8] sm:$0xff]
    %v321 = vld [vmem:[#allocation3 + $0x7c0] sm:$0xff]
    %v322 = vld [vmem:[#allocation3 + $0x7c8] sm:$0xff]
    %v323 = vld [vmem:[#allocation3 + $0x7d0] sm:$0xff]
    %v324 = vld [vmem:[#allocation3 + $0x7d8] sm:$0xff]
    %v325 = vld [vmem:[#allocation3 + $0x7e0] sm:$0xff]
    %v326 = vld [vmem:[#allocation3 + $0x7e8] sm:$0xff]
    %v327 = vld [vmem:[#allocation3 + $0x7f0] sm:$0xff]
    %v328 = vld [vmem:[#allocation3 + $0x7f8] sm:$0xff]
    %v330 = vcombine.high %v72, %v72
    %v332 = vunpack.c.l.s4 1966171168
    %v333 = vunpack.c.0.s8 %v332
    %v334 = vlaneseq
    %v335 = vshrl.u32 %v334, 7
    %v336 = vsub.s32 %v333, %v335
    %v337 = vrot.slane %v72, %v336
    %v339 = vunpack.c.l.s4 1966171168
    %v340 = vunpack.c.0.s8 %v339
    %v341 = vlaneseq
    %v342 = vshrl.u32 %v341, 7
    %v343 = vsub.s32 %v340, %v342
    %v344 = vrot.slane %v330, %v343
    %v345 = vcombine.high %v337, %v337
    %v346 = vcombine.high %v344, %v344
    %v348 = vunpack.c.l.s4 1966171168
    %v349 = vunpack.c.0.s8 %v348
    %v350 = vlaneseq
    %v351 = vshrl.u32 %v350, 7
    %v352 = vsub.s32 %v349, %v351
    %v353 = vrot.slane %v337, %v352
    %v355 = vunpack.c.l.s4 1966171168
    %v356 = vunpack.c.0.s8 %v355
    %v357 = vlaneseq
    %v358 = vshrl.u32 %v357, 7
    %v359 = vsub.s32 %v356, %v358
    %v360 = vrot.slane %v344, %v359
    %v362 = vunpack.c.l.s4 1966171168
    %v363 = vunpack.c.0.s8 %v362
    %v364 = vlaneseq
    %v365 = vshrl.u32 %v364, 7
    %v366 = vsub.s32 %v363, %v365
    %v367 = vrot.slane %v345, %v366
    %v369 = vunpack.c.l.s4 1966171168
    %v370 = vunpack.c.0.s8 %v369
    %v371 = vlaneseq
    %v372 = vshrl.u32 %v371, 7
    %v373 = vsub.s32 %v370, %v372
    %v374 = vrot.slane %v346, %v373
    %v375 = vcombine.high %v353, %v353
    %v376 = vcombine.high %v360, %v360
    %v377 = vcombine.high %v367, %v367
    %v378 = vcombine.high %v374, %v374
    %v643 = vunpack.c.l.b16 %v73
    %v644 = vunpack.c.h.b16 %v73
    %v645 = vunpack.c.l.b16 %v74
    %v646 = vunpack.c.h.b16 %v74
    %v647 = vunpack.c.l.b16 %v75
    %v648 = vunpack.c.h.b16 %v75
    %v649 = vunpack.c.l.b16 %v76
    %v650 = vunpack.c.h.b16 %v76
    %v651 = vunpack.c.l.b16 %v77
    %v652 = vunpack.c.h.b16 %v77
    %v653 = vunpack.c.l.b16 %v78
    %v654 = vunpack.c.h.b16 %v78
    %v655 = vunpack.c.l.b16 %v79
    %v656 = vunpack.c.h.b16 %v79
    %v657 = vunpack.c.l.b16 %v80
    %v658 = vunpack.c.h.b16 %v80
    %v659 = vunpack.c.l.b16 %v81
    %v660 = vunpack.c.h.b16 %v81
    %v661 = vunpack.c.l.b16 %v82
    %v662 = vunpack.c.h.b16 %v82
    %v663 = vunpack.c.l.b16 %v83
    %v664 = vunpack.c.h.b16 %v83
    %v665 = vunpack.c.l.b16 %v84
    %v666 = vunpack.c.h.b16 %v84
    %v667 = vunpack.c.l.b16 %v85
    %v668 = vunpack.c.h.b16 %v85
    %v669 = vunpack.c.l.b16 %v86
    %v670 = vunpack.c.h.b16 %v86
    %v671 = vunpack.c.l.b16 %v87
    %v672 = vunpack.c.h.b16 %v87
    %v673 = vunpack.c.l.b16 %v88
    %v674 = vunpack.c.h.b16 %v88
    %v675 = vunpack.c.l.b16 %v89
    %v676 = vunpack.c.h.b16 %v89
    %v677 = vunpack.c.l.b16 %v90
    %v678 = vunpack.c.h.b16 %v90
    %v679 = vunpack.c.l.b16 %v91
    %v680 = vunpack.c.h.b16 %v91
    %v681 = vunpack.c.l.b16 %v92
    %v682 = vunpack.c.h.b16 %v92
    %v683 = vunpack.c.l.b16 %v93
    %v684 = vunpack.c.h.b16 %v93
    %v685 = vunpack.c.l.b16 %v94
    %v686 = vunpack.c.h.b16 %v94
    %v687 = vunpack.c.l.b16 %v95
    %v688 = vunpack.c.h.b16 %v95
    %v689 = vunpack.c.l.b16 %v96
    %v690 = vunpack.c.h.b16 %v96
    %v691 = vunpack.c.l.b16 %v97
    %v692 = vunpack.c.h.b16 %v97
    %v693 = vunpack.c.l.b16 %v98
    %v694 = vunpack.c.h.b16 %v98
    %v695 = vunpack.c.l.b16 %v99
    %v696 = vunpack.c.h.b16 %v99
    %v697 = vunpack.c.l.b16 %v100
    %v698 = vunpack.c.h.b16 %v100
    %v699 = vunpack.c.l.b16 %v101
    %v700 = vunpack.c.h.b16 %v101
    %v701 = vunpack.c.l.b16 %v102
    %v702 = vunpack.c.h.b16 %v102
    %v703 = vunpack.c.l.b16 %v103
    %v704 = vunpack.c.h.b16 %v103
    %v705 = vunpack.c.l.b16 %v104
    %v706 = vunpack.c.h.b16 %v104
    %v707 = vunpack.c.l.b16 %v105
    %v708 = vunpack.c.h.b16 %v105
    %v709 = vunpack.c.l.b16 %v106
    %v710 = vunpack.c.h.b16 %v106
    %v711 = vunpack.c.l.b16 %v107
    %v712 = vunpack.c.h.b16 %v107
    %v713 = vunpack.c.l.b16 %v108
    %v714 = vunpack.c.h.b16 %v108
    %v715 = vunpack.c.l.b16 %v109
    %v716 = vunpack.c.h.b16 %v109
    %v717 = vunpack.c.l.b16 %v110
    %v718 = vunpack.c.h.b16 %v110
    %v719 = vunpack.c.l.b16 %v111
    %v720 = vunpack.c.h.b16 %v111
    %v721 = vunpack.c.l.b16 %v112
    %v722 = vunpack.c.h.b16 %v112
    %v723 = vunpack.c.l.b16 %v113
    %v724 = vunpack.c.h.b16 %v113
    %v725 = vunpack.c.l.b16 %v114
    %v726 = vunpack.c.h.b16 %v114
    %v727 = vunpack.c.l.b16 %v115
    %v728 = vunpack.c.h.b16 %v115
    %v729 = vunpack.c.l.b16 %v116
    %v730 = vunpack.c.h.b16 %v116
    %v731 = vunpack.c.l.b16 %v117
    %v732 = vunpack.c.h.b16 %v117
    %v733 = vunpack.c.l.b16 %v118
    %v734 = vunpack.c.h.b16 %v118
    %v735 = vunpack.c.l.b16 %v119
    %v736 = vunpack.c.h.b16 %v119
    %v737 = vunpack.c.l.b16 %v120
    %v738 = vunpack.c.h.b16 %v120
    %v739 = vunpack.c.l.b16 %v121
    %v740 = vunpack.c.h.b16 %v121
    %v741 = vunpack.c.l.b16 %v122
    %v742 = vunpack.c.h.b16 %v122
    %v743 = vunpack.c.l.b16 %v123
    %v744 = vunpack.c.h.b16 %v123
    %v745 = vunpack.c.l.b16 %v124
    %v746 = vunpack.c.h.b16 %v124
    %v747 = vunpack.c.l.b16 %v125
    %v748 = vunpack.c.h.b16 %v125
    %v749 = vunpack.c.l.b16 %v126
    %v750 = vunpack.c.h.b16 %v126
    %v751 = vunpack.c.l.b16 %v127
    %v752 = vunpack.c.h.b16 %v127
    %v753 = vunpack.c.l.b16 %v128
    %v754 = vunpack.c.h.b16 %v128
    %v755 = vunpack.c.l.b16 %v129
    %v756 = vunpack.c.h.b16 %v129
    %v757 = vunpack.c.l.b16 %v130
    %v758 = vunpack.c.h.b16 %v130
    %v759 = vunpack.c.l.b16 %v131
    %v760 = vunpack.c.h.b16 %v131
    %v761 = vunpack.c.l.b16 %v132
    %v762 = vunpack.c.h.b16 %v132
    %v763 = vunpack.c.l.b16 %v133
    %v764 = vunpack.c.h.b16 %v133
    %v765 = vunpack.c.l.b16 %v134
    %v766 = vunpack.c.h.b16 %v134
    %v767 = vunpack.c.l.b16 %v135
    %v768 = vunpack.c.h.b16 %v135
    %v769 = vunpack.c.l.b16 %v136
    %v770 = vunpack.c.h.b16 %v136
    %v771 = vunpack.c.l.b16 %v137
    %v772 = vunpack.c.h.b16 %v137
    %v773 = vunpack.c.l.b16 %v138
    %v774 = vunpack.c.h.b16 %v138
    %v775 = vunpack.c.l.b16 %v139
    %v776 = vunpack.c.h.b16 %v139
    %v777 = vunpack.c.l.b16 %v140
    %v778 = vunpack.c.h.b16 %v140
    %v779 = vunpack.c.l.b16 %v141
    %v780 = vunpack.c.h.b16 %v141
    %v781 = vunpack.c.l.b16 %v142
    %v782 = vunpack.c.h.b16 %v142
    %v783 = vunpack.c.l.b16 %v143
    %v784 = vunpack.c.h.b16 %v143
    %v785 = vunpack.c.l.b16 %v144
    %v786 = vunpack.c.h.b16 %v144
    %v787 = vunpack.c.l.b16 %v145
    %v788 = vunpack.c.h.b16 %v145
    %v789 = vunpack.c.l.b16 %v146
    %v790 = vunpack.c.h.b16 %v146
    %v791 = vunpack.c.l.b16 %v147
    %v792 = vunpack.c.h.b16 %v147
    %v793 = vunpack.c.l.b16 %v148
    %v794 = vunpack.c.h.b16 %v148
    %v795 = vunpack.c.l.b16 %v149
    %v796 = vunpack.c.h.b16 %v149
    %v797 = vunpack.c.l.b16 %v150
    %v798 = vunpack.c.h.b16 %v150
    %v799 = vunpack.c.l.b16 %v151
    %v800 = vunpack.c.h.b16 %v151
    %v801 = vunpack.c.l.b16 %v152
    %v802 = vunpack.c.h.b16 %v152
    %v803 = vunpack.c.l.b16 %v153
    %v804 = vunpack.c.h.b16 %v153
    %v805 = vunpack.c.l.b16 %v154
    %v806 = vunpack.c.h.b16 %v154
    %v807 = vunpack.c.l.b16 %v155
    %v808 = vunpack.c.h.b16 %v155
    %v809 = vunpack.c.l.b16 %v156
    %v810 = vunpack.c.h.b16 %v156
    %v811 = vunpack.c.l.b16 %v157
    %v812 = vunpack.c.h.b16 %v157
    %v813 = vunpack.c.l.b16 %v158
    %v814 = vunpack.c.h.b16 %v158
    %v815 = vunpack.c.l.b16 %v159
    %v816 = vunpack.c.h.b16 %v159
    %v817 = vunpack.c.l.b16 %v160
    %v818 = vunpack.c.h.b16 %v160
    %v819 = vunpack.c.l.b16 %v161
    %v820 = vunpack.c.h.b16 %v161
    %v821 = vunpack.c.l.b16 %v162
    %v822 = vunpack.c.h.b16 %v162
    %v823 = vunpack.c.l.b16 %v163
    %v824 = vunpack.c.h.b16 %v163
    %v825 = vunpack.c.l.b16 %v164
    %v826 = vunpack.c.h.b16 %v164
    %v827 = vunpack.c.l.b16 %v165
    %v828 = vunpack.c.h.b16 %v165
    %v829 = vunpack.c.l.b16 %v166
    %v830 = vunpack.c.h.b16 %v166
    %v831 = vunpack.c.l.b16 %v167
    %v832 = vunpack.c.h.b16 %v167
    %v833 = vunpack.c.l.b16 %v168
    %v834 = vunpack.c.h.b16 %v168
    %v835 = vunpack.c.l.b16 %v169
    %v836 = vunpack.c.h.b16 %v169
    %v837 = vunpack.c.l.b16 %v170
    %v838 = vunpack.c.h.b16 %v170
    %v839 = vunpack.c.l.b16 %v171
    %v840 = vunpack.c.h.b16 %v171
    %v841 = vunpack.c.l.b16 %v172
    %v842 = vunpack.c.h.b16 %v172
    %v843 = vunpack.c.l.b16 %v173
    %v844 = vunpack.c.h.b16 %v173
    %v845 = vunpack.c.l.b16 %v174
    %v846 = vunpack.c.h.b16 %v174
    %v847 = vunpack.c.l.b16 %v175
    %v848 = vunpack.c.h.b16 %v175
    %v849 = vunpack.c.l.b16 %v176
    %v850 = vunpack.c.h.b16 %v176
    %v851 = vunpack.c.l.b16 %v177
    %v852 = vunpack.c.h.b16 %v177
    %v853 = vunpack.c.l.b16 %v178
    %v854 = vunpack.c.h.b16 %v178
    %v855 = vunpack.c.l.b16 %v179
    %v856 = vunpack.c.h.b16 %v179
    %v857 = vunpack.c.l.b16 %v180
    %v858 = vunpack.c.h.b16 %v180
    %v859 = vunpack.c.l.b16 %v181
    %v860 = vunpack.c.h.b16 %v181
    %v861 = vunpack.c.l.b16 %v182
    %v862 = vunpack.c.h.b16 %v182
    %v863 = vunpack.c.l.b16 %v183
    %v864 = vunpack.c.h.b16 %v183
    %v865 = vunpack.c.l.b16 %v184
    %v866 = vunpack.c.h.b16 %v184
    %v867 = vunpack.c.l.b16 %v185
    %v868 = vunpack.c.h.b16 %v185
    %v869 = vunpack.c.l.b16 %v186
    %v870 = vunpack.c.h.b16 %v186
    %v871 = vunpack.c.l.b16 %v187
    %v872 = vunpack.c.h.b16 %v187
    %v873 = vunpack.c.l.b16 %v188
    %v874 = vunpack.c.h.b16 %v188
    %v875 = vunpack.c.l.b16 %v189
    %v876 = vunpack.c.h.b16 %v189
    %v877 = vunpack.c.l.b16 %v190
    %v878 = vunpack.c.h.b16 %v190
    %v879 = vunpack.c.l.b16 %v191
    %v880 = vunpack.c.h.b16 %v191
    %v881 = vunpack.c.l.b16 %v192
    %v882 = vunpack.c.h.b16 %v192
    %v883 = vunpack.c.l.b16 %v193
    %v884 = vunpack.c.h.b16 %v193
    %v885 = vunpack.c.l.b16 %v194
    %v886 = vunpack.c.h.b16 %v194
    %v887 = vunpack.c.l.b16 %v195
    %v888 = vunpack.c.h.b16 %v195
    %v889 = vunpack.c.l.b16 %v196
    %v890 = vunpack.c.h.b16 %v196
    %v891 = vunpack.c.l.b16 %v197
    %v892 = vunpack.c.h.b16 %v197
    %v893 = vunpack.c.l.b16 %v198
    %v894 = vunpack.c.h.b16 %v198
    %v895 = vunpack.c.l.b16 %v199
    %v896 = vunpack.c.h.b16 %v199
    %v897 = vunpack.c.l.b16 %v200
    %v898 = vunpack.c.h.b16 %v200
    %v899 = vunpack.c.l.b16 %v201
    %v900 = vunpack.c.h.b16 %v201
    %v901 = vunpack.c.l.b16 %v202
    %v902 = vunpack.c.h.b16 %v202
    %v903 = vunpack.c.l.b16 %v203
    %v904 = vunpack.c.h.b16 %v203
    %v905 = vunpack.c.l.b16 %v204
    %v906 = vunpack.c.h.b16 %v204
    %v907 = vunpack.c.l.b16 %v205
    %v908 = vunpack.c.h.b16 %v205
    %v909 = vunpack.c.l.b16 %v206
    %v910 = vunpack.c.h.b16 %v206
    %v911 = vunpack.c.l.b16 %v207
    %v912 = vunpack.c.h.b16 %v207
    %v913 = vunpack.c.l.b16 %v208
    %v914 = vunpack.c.h.b16 %v208
    %v915 = vunpack.c.l.b16 %v209
    %v916 = vunpack.c.h.b16 %v209
    %v917 = vunpack.c.l.b16 %v210
    %v918 = vunpack.c.h.b16 %v210
    %v919 = vunpack.c.l.b16 %v211
    %v920 = vunpack.c.h.b16 %v211
    %v921 = vunpack.c.l.b16 %v212
    %v922 = vunpack.c.h.b16 %v212
    %v923 = vunpack.c.l.b16 %v213
    %v924 = vunpack.c.h.b16 %v213
    %v925 = vunpack.c.l.b16 %v214
    %v926 = vunpack.c.h.b16 %v214
    %v927 = vunpack.c.l.b16 %v215
    %v928 = vunpack.c.h.b16 %v215
    %v929 = vunpack.c.l.b16 %v216
    %v930 = vunpack.c.h.b16 %v216
    %v931 = vunpack.c.l.b16 %v217
    %v932 = vunpack.c.h.b16 %v217
    %v933 = vunpack.c.l.b16 %v218
    %v934 = vunpack.c.h.b16 %v218
    %v935 = vunpack.c.l.b16 %v219
    %v936 = vunpack.c.h.b16 %v219
    %v937 = vunpack.c.l.b16 %v220
    %v938 = vunpack.c.h.b16 %v220
    %v939 = vunpack.c.l.b16 %v221
    %v940 = vunpack.c.h.b16 %v221
    %v941 = vunpack.c.l.b16 %v222
    %v942 = vunpack.c.h.b16 %v222
    %v943 = vunpack.c.l.b16 %v223
    %v944 = vunpack.c.h.b16 %v223
    %v945 = vunpack.c.l.b16 %v224
    %v946 = vunpack.c.h.b16 %v224
    %v947 = vunpack.c.l.b16 %v225
    %v948 = vunpack.c.h.b16 %v225
    %v949 = vunpack.c.l.b16 %v226
    %v950 = vunpack.c.h.b16 %v226
    %v951 = vunpack.c.l.b16 %v227
    %v952 = vunpack.c.h.b16 %v227
    %v953 = vunpack.c.l.b16 %v228
    %v954 = vunpack.c.h.b16 %v228
    %v955 = vunpack.c.l.b16 %v229
    %v956 = vunpack.c.h.b16 %v229
    %v957 = vunpack.c.l.b16 %v230
    %v958 = vunpack.c.h.b16 %v230
    %v959 = vunpack.c.l.b16 %v231
    %v960 = vunpack.c.h.b16 %v231
    %v961 = vunpack.c.l.b16 %v232
    %v962 = vunpack.c.h.b16 %v232
    %v963 = vunpack.c.l.b16 %v233
    %v964 = vunpack.c.h.b16 %v233
    %v965 = vunpack.c.l.b16 %v234
    %v966 = vunpack.c.h.b16 %v234
    %v967 = vunpack.c.l.b16 %v235
    %v968 = vunpack.c.h.b16 %v235
    %v969 = vunpack.c.l.b16 %v236
    %v970 = vunpack.c.h.b16 %v236
    %v971 = vunpack.c.l.b16 %v237
    %v972 = vunpack.c.h.b16 %v237
    %v973 = vunpack.c.l.b16 %v238
    %v974 = vunpack.c.h.b16 %v238
    %v975 = vunpack.c.l.b16 %v239
    %v976 = vunpack.c.h.b16 %v239
    %v977 = vunpack.c.l.b16 %v240
    %v978 = vunpack.c.h.b16 %v240
    %v979 = vunpack.c.l.b16 %v241
    %v980 = vunpack.c.h.b16 %v241
    %v981 = vunpack.c.l.b16 %v242
    %v982 = vunpack.c.h.b16 %v242
    %v983 = vunpack.c.l.b16 %v243
    %v984 = vunpack.c.h.b16 %v243
    %v985 = vunpack.c.l.b16 %v244
    %v986 = vunpack.c.h.b16 %v244
    %v987 = vunpack.c.l.b16 %v245
    %v988 = vunpack.c.h.b16 %v245
    %v989 = vunpack.c.l.b16 %v246
    %v990 = vunpack.c.h.b16 %v246
    %v991 = vunpack.c.l.b16 %v247
    %v992 = vunpack.c.h.b16 %v247
    %v993 = vunpack.c.l.b16 %v248
    %v994 = vunpack.c.h.b16 %v248
    %v995 = vunpack.c.l.b16 %v249
    %v996 = vunpack.c.h.b16 %v249
    %v997 = vunpack.c.l.b16 %v250
    %v998 = vunpack.c.h.b16 %v250
    %v999 = vunpack.c.l.b16 %v251
    %v1000 = vunpack.c.h.b16 %v251
    %v1001 = vunpack.c.l.b16 %v252
    %v1002 = vunpack.c.h.b16 %v252
    %v1003 = vunpack.c.l.b16 %v253
    %v1004 = vunpack.c.h.b16 %v253
    %v1005 = vunpack.c.l.b16 %v254
    %v1006 = vunpack.c.h.b16 %v254
    %v1007 = vunpack.c.l.b16 %v255
    %v1008 = vunpack.c.h.b16 %v255
    %v1009 = vunpack.c.l.b16 %v256
    %v1010 = vunpack.c.h.b16 %v256
    %v1011 = vunpack.c.l.b16 %v257
    %v1012 = vunpack.c.h.b16 %v257
    %v1013 = vunpack.c.l.b16 %v258
    %v1014 = vunpack.c.h.b16 %v258
    %v1015 = vunpack.c.l.b16 %v259
    %v1016 = vunpack.c.h.b16 %v259
    %v1017 = vunpack.c.l.b16 %v260
    %v1018 = vunpack.c.h.b16 %v260
    %v1019 = vunpack.c.l.b16 %v261
    %v1020 = vunpack.c.h.b16 %v261
    %v1021 = vunpack.c.l.b16 %v262
    %v1022 = vunpack.c.h.b16 %v262
    %v1023 = vunpack.c.l.b16 %v263
    %v1024 = vunpack.c.h.b16 %v263
    %v1025 = vunpack.c.l.b16 %v264
    %v1026 = vunpack.c.h.b16 %v264
    %v1027 = vunpack.c.l.b16 %v265
    %v1028 = vunpack.c.h.b16 %v265
    %v1029 = vunpack.c.l.b16 %v266
    %v1030 = vunpack.c.h.b16 %v266
    %v1031 = vunpack.c.l.b16 %v267
    %v1032 = vunpack.c.h.b16 %v267
    %v1033 = vunpack.c.l.b16 %v268
    %v1034 = vunpack.c.h.b16 %v268
    %v1035 = vunpack.c.l.b16 %v269
    %v1036 = vunpack.c.h.b16 %v269
    %v1037 = vunpack.c.l.b16 %v270
    %v1038 = vunpack.c.h.b16 %v270
    %v1039 = vunpack.c.l.b16 %v271
    %v1040 = vunpack.c.h.b16 %v271
    %v1041 = vunpack.c.l.b16 %v272
    %v1042 = vunpack.c.h.b16 %v272
    %v1043 = vunpack.c.l.b16 %v273
    %v1044 = vunpack.c.h.b16 %v273
    %v1045 = vunpack.c.l.b16 %v274
    %v1046 = vunpack.c.h.b16 %v274
    %v1047 = vunpack.c.l.b16 %v275
    %v1048 = vunpack.c.h.b16 %v275
    %v1049 = vunpack.c.l.b16 %v276
    %v1050 = vunpack.c.h.b16 %v276
    %v1051 = vunpack.c.l.b16 %v277
    %v1052 = vunpack.c.h.b16 %v277
    %v1053 = vunpack.c.l.b16 %v278
    %v1054 = vunpack.c.h.b16 %v278
    %v1055 = vunpack.c.l.b16 %v279
    %v1056 = vunpack.c.h.b16 %v279
    %v1057 = vunpack.c.l.b16 %v280
    %v1058 = vunpack.c.h.b16 %v280
    %v1059 = vunpack.c.l.b16 %v281
    %v1060 = vunpack.c.h.b16 %v281
    %v1061 = vunpack.c.l.b16 %v282
    %v1062 = vunpack.c.h.b16 %v282
    %v1063 = vunpack.c.l.b16 %v283
    %v1064 = vunpack.c.h.b16 %v283
    %v1065 = vunpack.c.l.b16 %v284
    %v1066 = vunpack.c.h.b16 %v284
    %v1067 = vunpack.c.l.b16 %v285
    %v1068 = vunpack.c.h.b16 %v285
    %v1069 = vunpack.c.l.b16 %v286
    %v1070 = vunpack.c.h.b16 %v286
    %v1071 = vunpack.c.l.b16 %v287
    %v1072 = vunpack.c.h.b16 %v287
    %v1073 = vunpack.c.l.b16 %v288
    %v1074 = vunpack.c.h.b16 %v288
    %v1075 = vunpack.c.l.b16 %v289
    %v1076 = vunpack.c.h.b16 %v289
    %v1077 = vunpack.c.l.b16 %v290
    %v1078 = vunpack.c.h.b16 %v290
    %v1079 = vunpack.c.l.b16 %v291
    %v1080 = vunpack.c.h.b16 %v291
    %v1081 = vunpack.c.l.b16 %v292
    %v1082 = vunpack.c.h.b16 %v292
    %v1083 = vunpack.c.l.b16 %v293
    %v1084 = vunpack.c.h.b16 %v293
    %v1085 = vunpack.c.l.b16 %v294
    %v1086 = vunpack.c.h.b16 %v294
    %v1087 = vunpack.c.l.b16 %v295
    %v1088 = vunpack.c.h.b16 %v295
    %v1089 = vunpack.c.l.b16 %v296
    %v1090 = vunpack.c.h.b16 %v296
    %v1091 = vunpack.c.l.b16 %v297
    %v1092 = vunpack.c.h.b16 %v297
    %v1093 = vunpack.c.l.b16 %v298
    %v1094 = vunpack.c.h.b16 %v298
    %v1095 = vunpack.c.l.b16 %v299
    %v1096 = vunpack.c.h.b16 %v299
    %v1097 = vunpack.c.l.b16 %v300
    %v1098 = vunpack.c.h.b16 %v300
    %v1099 = vunpack.c.l.b16 %v301
    %v1100 = vunpack.c.h.b16 %v301
    %v1101 = vunpack.c.l.b16 %v302
    %v1102 = vunpack.c.h.b16 %v302
    %v1103 = vunpack.c.l.b16 %v303
    %v1104 = vunpack.c.h.b16 %v303
    %v1105 = vunpack.c.l.b16 %v304
    %v1106 = vunpack.c.h.b16 %v304
    %v1107 = vunpack.c.l.b16 %v305
    %v1108 = vunpack.c.h.b16 %v305
    %v1109 = vunpack.c.l.b16 %v306
    %v1110 = vunpack.c.h.b16 %v306
    %v1111 = vunpack.c.l.b16 %v307
    %v1112 = vunpack.c.h.b16 %v307
    %v1113 = vunpack.c.l.b16 %v308
    %v1114 = vunpack.c.h.b16 %v308
    %v1115 = vunpack.c.l.b16 %v309
    %v1116 = vunpack.c.h.b16 %v309
    %v1117 = vunpack.c.l.b16 %v310
    %v1118 = vunpack.c.h.b16 %v310
    %v1119 = vunpack.c.l.b16 %v311
    %v1120 = vunpack.c.h.b16 %v311
    %v1121 = vunpack.c.l.b16 %v312
    %v1122 = vunpack.c.h.b16 %v312
    %v1123 = vunpack.c.l.b16 %v313
    %v1124 = vunpack.c.h.b16 %v313
    %v1125 = vunpack.c.l.b16 %v314
    %v1126 = vunpack.c.h.b16 %v314
    %v1127 = vunpack.c.l.b16 %v315
    %v1128 = vunpack.c.h.b16 %v315
    %v1129 = vunpack.c.l.b16 %v316
    %v1130 = vunpack.c.h.b16 %v316
    %v1131 = vunpack.c.l.b16 %v317
    %v1132 = vunpack.c.h.b16 %v317
    %v1133 = vunpack.c.l.b16 %v318
    %v1134 = vunpack.c.h.b16 %v318
    %v1135 = vunpack.c.l.b16 %v319
    %v1136 = vunpack.c.h.b16 %v319
    %v1137 = vunpack.c.l.b16 %v320
    %v1138 = vunpack.c.h.b16 %v320
    %v1139 = vunpack.c.l.b16 %v321
    %v1140 = vunpack.c.h.b16 %v321
    %v1141 = vunpack.c.l.b16 %v322
    %v1142 = vunpack.c.h.b16 %v322
    %v1143 = vunpack.c.l.b16 %v323
    %v1144 = vunpack.c.h.b16 %v323
    %v1145 = vunpack.c.l.b16 %v324
    %v1146 = vunpack.c.h.b16 %v324
    %v1147 = vunpack.c.l.b16 %v325
    %v1148 = vunpack.c.h.b16 %v325
    %v1149 = vunpack.c.l.b16 %v326
    %v1150 = vunpack.c.h.b16 %v326
    %v1151 = vunpack.c.l.b16 %v327
    %v1152 = vunpack.c.h.b16 %v327
    %v1153 = vunpack.c.l.b16 %v328
    %v1154 = vunpack.c.h.b16 %v328
    %v1155 = vpack.c.b16 %v647, %v643
    %v1156 = vpack.c.b16 %v648, %v644
    %v1157 = vpack.c.b16 %v649, %v645
    %v1158 = vpack.c.b16 %v650, %v646
    %v1159 = vpack.c.b16 %v655, %v651
    %v1160 = vpack.c.b16 %v656, %v652
    %v1161 = vpack.c.b16 %v657, %v653
    %v1162 = vpack.c.b16 %v658, %v654
    %v1163 = vpack.c.b16 %v663, %v659
    %v1164 = vpack.c.b16 %v664, %v660
    %v1165 = vpack.c.b16 %v665, %v661
    %v1166 = vpack.c.b16 %v666, %v662
    %v1167 = vpack.c.b16 %v671, %v667
    %v1168 = vpack.c.b16 %v672, %v668
    %v1169 = vpack.c.b16 %v673, %v669
    %v1170 = vpack.c.b16 %v674, %v670
    %v1171 = vpack.c.b16 %v679, %v675
    %v1172 = vpack.c.b16 %v680, %v676
    %v1173 = vpack.c.b16 %v681, %v677
    %v1174 = vpack.c.b16 %v682, %v678
    %v1175 = vpack.c.b16 %v687, %v683
    %v1176 = vpack.c.b16 %v688, %v684
    %v1177 = vpack.c.b16 %v689, %v685
    %v1178 = vpack.c.b16 %v690, %v686
    %v1179 = vpack.c.b16 %v695, %v691
    %v1180 = vpack.c.b16 %v696, %v692
    %v1181 = vpack.c.b16 %v697, %v693
    %v1182 = vpack.c.b16 %v698, %v694
    %v1183 = vpack.c.b16 %v703, %v699
    %v1184 = vpack.c.b16 %v704, %v700
    %v1185 = vpack.c.b16 %v705, %v701
    %v1186 = vpack.c.b16 %v706, %v702
    %v1187 = vpack.c.b16 %v711, %v707
    %v1188 = vpack.c.b16 %v712, %v708
    %v1189 = vpack.c.b16 %v713, %v709
    %v1190 = vpack.c.b16 %v714, %v710
    %v1191 = vpack.c.b16 %v719, %v715
    %v1192 = vpack.c.b16 %v720, %v716
    %v1193 = vpack.c.b16 %v721, %v717
    %v1194 = vpack.c.b16 %v722, %v718
    %v1195 = vpack.c.b16 %v727, %v723
    %v1196 = vpack.c.b16 %v728, %v724
    %v1197 = vpack.c.b16 %v729, %v725
    %v1198 = vpack.c.b16 %v730, %v726
    %v1199 = vpack.c.b16 %v735, %v731
    %v1200 = vpack.c.b16 %v736, %v732
    %v1201 = vpack.c.b16 %v737, %v733
    %v1202 = vpack.c.b16 %v738, %v734
    %v1203 = vpack.c.b16 %v743, %v739
    %v1204 = vpack.c.b16 %v744, %v740
    %v1205 = vpack.c.b16 %v745, %v741
    %v1206 = vpack.c.b16 %v746, %v742
    %v1207 = vpack.c.b16 %v751, %v747
    %v1208 = vpack.c.b16 %v752, %v748
    %v1209 = vpack.c.b16 %v753, %v749
    %v1210 = vpack.c.b16 %v754, %v750
    %v1211 = vpack.c.b16 %v759, %v755
    %v1212 = vpack.c.b16 %v760, %v756
    %v1213 = vpack.c.b16 %v761, %v757
    %v1214 = vpack.c.b16 %v762, %v758
    %v1215 = vpack.c.b16 %v767, %v763
    %v1216 = vpack.c.b16 %v768, %v764
    %v1217 = vpack.c.b16 %v769, %v765
    %v1218 = vpack.c.b16 %v770, %v766
    %v1219 = vpack.c.b16 %v775, %v771
    %v1220 = vpack.c.b16 %v776, %v772
    %v1221 = vpack.c.b16 %v777, %v773
    %v1222 = vpack.c.b16 %v778, %v774
    %v1223 = vpack.c.b16 %v783, %v779
    %v1224 = vpack.c.b16 %v784, %v780
    %v1225 = vpack.c.b16 %v785, %v781
    %v1226 = vpack.c.b16 %v786, %v782
    %v1227 = vpack.c.b16 %v791, %v787
    %v1228 = vpack.c.b16 %v792, %v788
    %v1229 = vpack.c.b16 %v793, %v789
    %v1230 = vpack.c.b16 %v794, %v790
    %v1231 = vpack.c.b16 %v799, %v795
    %v1232 = vpack.c.b16 %v800, %v796
    %v1233 = vpack.c.b16 %v801, %v797
    %v1234 = vpack.c.b16 %v802, %v798
    %v1235 = vpack.c.b16 %v807, %v803
    %v1236 = vpack.c.b16 %v808, %v804
    %v1237 = vpack.c.b16 %v809, %v805
    %v1238 = vpack.c.b16 %v810, %v806
    %v1239 = vpack.c.b16 %v815, %v811
    %v1240 = vpack.c.b16 %v816, %v812
    %v1241 = vpack.c.b16 %v817, %v813
    %v1242 = vpack.c.b16 %v818, %v814
    %v1243 = vpack.c.b16 %v823, %v819
    %v1244 = vpack.c.b16 %v824, %v820
    %v1245 = vpack.c.b16 %v825, %v821
    %v1246 = vpack.c.b16 %v826, %v822
    %v1247 = vpack.c.b16 %v831, %v827
    %v1248 = vpack.c.b16 %v832, %v828
    %v1249 = vpack.c.b16 %v833, %v829
    %v1250 = vpack.c.b16 %v834, %v830
    %v1251 = vpack.c.b16 %v839, %v835
    %v1252 = vpack.c.b16 %v840, %v836
    %v1253 = vpack.c.b16 %v841, %v837
    %v1254 = vpack.c.b16 %v842, %v838
    %v1255 = vpack.c.b16 %v847, %v843
    %v1256 = vpack.c.b16 %v848, %v844
    %v1257 = vpack.c.b16 %v849, %v845
    %v1258 = vpack.c.b16 %v850, %v846
    %v1259 = vpack.c.b16 %v855, %v851
    %v1260 = vpack.c.b16 %v856, %v852
    %v1261 = vpack.c.b16 %v857, %v853
    %v1262 = vpack.c.b16 %v858, %v854
    %v1263 = vpack.c.b16 %v863, %v859
    %v1264 = vpack.c.b16 %v864, %v860
    %v1265 = vpack.c.b16 %v865, %v861
    %v1266 = vpack.c.b16 %v866, %v862
    %v1267 = vpack.c.b16 %v871, %v867
    %v1268 = vpack.c.b16 %v872, %v868
    %v1269 = vpack.c.b16 %v873, %v869
    %v1270 = vpack.c.b16 %v874, %v870
    %v1271 = vpack.c.b16 %v879, %v875
    %v1272 = vpack.c.b16 %v880, %v876
    %v1273 = vpack.c.b16 %v881, %v877
    %v1274 = vpack.c.b16 %v882, %v878
    %v1275 = vpack.c.b16 %v887, %v883
    %v1276 = vpack.c.b16 %v888, %v884
    %v1277 = vpack.c.b16 %v889, %v885
    %v1278 = vpack.c.b16 %v890, %v886
    %v1279 = vpack.c.b16 %v895, %v891
    %v1280 = vpack.c.b16 %v896, %v892
    %v1281 = vpack.c.b16 %v897, %v893
    %v1282 = vpack.c.b16 %v898, %v894
    %v1283 = vpack.c.b16 %v903, %v899
    %v1284 = vpack.c.b16 %v904, %v900
    %v1285 = vpack.c.b16 %v905, %v901
    %v1286 = vpack.c.b16 %v906, %v902
    %v1287 = vpack.c.b16 %v911, %v907
    %v1288 = vpack.c.b16 %v912, %v908
    %v1289 = vpack.c.b16 %v913, %v909
    %v1290 = vpack.c.b16 %v914, %v910
    %v1291 = vpack.c.b16 %v919, %v915
    %v1292 = vpack.c.b16 %v920, %v916
    %v1293 = vpack.c.b16 %v921, %v917
    %v1294 = vpack.c.b16 %v922, %v918
    %v1295 = vpack.c.b16 %v927, %v923
    %v1296 = vpack.c.b16 %v928, %v924
    %v1297 = vpack.c.b16 %v929, %v925
    %v1298 = vpack.c.b16 %v930, %v926
    %v1299 = vpack.c.b16 %v935, %v931
    %v1300 = vpack.c.b16 %v936, %v932
    %v1301 = vpack.c.b16 %v937, %v933
    %v1302 = vpack.c.b16 %v938, %v934
    %v1303 = vpack.c.b16 %v943, %v939
    %v1304 = vpack.c.b16 %v944, %v940
    %v1305 = vpack.c.b16 %v945, %v941
    %v1306 = vpack.c.b16 %v946, %v942
    %v1307 = vpack.c.b16 %v951, %v947
    %v1308 = vpack.c.b16 %v952, %v948
    %v1309 = vpack.c.b16 %v953, %v949
    %v1310 = vpack.c.b16 %v954, %v950
    %v1311 = vpack.c.b16 %v959, %v955
    %v1312 = vpack.c.b16 %v960, %v956
    %v1313 = vpack.c.b16 %v961, %v957
    %v1314 = vpack.c.b16 %v962, %v958
    %v1315 = vpack.c.b16 %v967, %v963
    %v1316 = vpack.c.b16 %v968, %v964
    %v1317 = vpack.c.b16 %v969, %v965
    %v1318 = vpack.c.b16 %v970, %v966
    %v1319 = vpack.c.b16 %v975, %v971
    %v1320 = vpack.c.b16 %v976, %v972
    %v1321 = vpack.c.b16 %v977, %v973
    %v1322 = vpack.c.b16 %v978, %v974
    %v1323 = vpack.c.b16 %v983, %v979
    %v1324 = vpack.c.b16 %v984, %v980
    %v1325 = vpack.c.b16 %v985, %v981
    %v1326 = vpack.c.b16 %v986, %v982
    %v1327 = vpack.c.b16 %v991, %v987
    %v1328 = vpack.c.b16 %v992, %v988
    %v1329 = vpack.c.b16 %v993, %v989
    %v1330 = vpack.c.b16 %v994, %v990
    %v1331 = vpack.c.b16 %v999, %v995
    %v1332 = vpack.c.b16 %v1000, %v996
    %v1333 = vpack.c.b16 %v1001, %v997
    %v1334 = vpack.c.b16 %v1002, %v998
    %v1335 = vpack.c.b16 %v1007, %v1003
    %v1336 = vpack.c.b16 %v1008, %v1004
    %v1337 = vpack.c.b16 %v1009, %v1005
    %v1338 = vpack.c.b16 %v1010, %v1006
    %v1339 = vpack.c.b16 %v1015, %v1011
    %v1340 = vpack.c.b16 %v1016, %v1012
    %v1341 = vpack.c.b16 %v1017, %v1013
    %v1342 = vpack.c.b16 %v1018, %v1014
    %v1343 = vpack.c.b16 %v1023, %v1019
    %v1344 = vpack.c.b16 %v1024, %v1020
    %v1345 = vpack.c.b16 %v1025, %v1021
    %v1346 = vpack.c.b16 %v1026, %v1022
    %v1347 = vpack.c.b16 %v1031, %v1027
    %v1348 = vpack.c.b16 %v1032, %v1028
    %v1349 = vpack.c.b16 %v1033, %v1029
    %v1350 = vpack.c.b16 %v1034, %v1030
    %v1351 = vpack.c.b16 %v1039, %v1035
    %v1352 = vpack.c.b16 %v1040, %v1036
    %v1353 = vpack.c.b16 %v1041, %v1037
    %v1354 = vpack.c.b16 %v1042, %v1038
    %v1355 = vpack.c.b16 %v1047, %v1043
    %v1356 = vpack.c.b16 %v1048, %v1044
    %v1357 = vpack.c.b16 %v1049, %v1045
    %v1358 = vpack.c.b16 %v1050, %v1046
    %v1359 = vpack.c.b16 %v1055, %v1051
    %v1360 = vpack.c.b16 %v1056, %v1052
    %v1361 = vpack.c.b16 %v1057, %v1053
    %v1362 = vpack.c.b16 %v1058, %v1054
    %v1363 = vpack.c.b16 %v1063, %v1059
    %v1364 = vpack.c.b16 %v1064, %v1060
    %v1365 = vpack.c.b16 %v1065, %v1061
    %v1366 = vpack.c.b16 %v1066, %v1062
    %v1367 = vpack.c.b16 %v1071, %v1067
    %v1368 = vpack.c.b16 %v1072, %v1068
    %v1369 = vpack.c.b16 %v1073, %v1069
    %v1370 = vpack.c.b16 %v1074, %v1070
    %v1371 = vpack.c.b16 %v1079, %v1075
    %v1372 = vpack.c.b16 %v1080, %v1076
    %v1373 = vpack.c.b16 %v1081, %v1077
    %v1374 = vpack.c.b16 %v1082, %v1078
    %v1375 = vpack.c.b16 %v1087, %v1083
    %v1376 = vpack.c.b16 %v1088, %v1084
    %v1377 = vpack.c.b16 %v1089, %v1085
    %v1378 = vpack.c.b16 %v1090, %v1086
    %v1379 = vpack.c.b16 %v1095, %v1091
    %v1380 = vpack.c.b16 %v1096, %v1092
    %v1381 = vpack.c.b16 %v1097, %v1093
    %v1382 = vpack.c.b16 %v1098, %v1094
    %v1383 = vpack.c.b16 %v1103, %v1099
    %v1384 = vpack.c.b16 %v1104, %v1100
    %v1385 = vpack.c.b16 %v1105, %v1101
    %v1386 = vpack.c.b16 %v1106, %v1102
    %v1387 = vpack.c.b16 %v1111, %v1107
    %v1388 = vpack.c.b16 %v1112, %v1108
    %v1389 = vpack.c.b16 %v1113, %v1109
    %v1390 = vpack.c.b16 %v1114, %v1110
    %v1391 = vpack.c.b16 %v1119, %v1115
    %v1392 = vpack.c.b16 %v1120, %v1116
    %v1393 = vpack.c.b16 %v1121, %v1117
    %v1394 = vpack.c.b16 %v1122, %v1118
    %v1395 = vpack.c.b16 %v1127, %v1123
    %v1396 = vpack.c.b16 %v1128, %v1124
    %v1397 = vpack.c.b16 %v1129, %v1125
    %v1398 = vpack.c.b16 %v1130, %v1126
    %v1399 = vpack.c.b16 %v1135, %v1131
    %v1400 = vpack.c.b16 %v1136, %v1132
    %v1401 = vpack.c.b16 %v1137, %v1133
    %v1402 = vpack.c.b16 %v1138, %v1134
    %v1403 = vpack.c.b16 %v1143, %v1139
    %v1404 = vpack.c.b16 %v1144, %v1140
    %v1405 = vpack.c.b16 %v1145, %v1141
    %v1406 = vpack.c.b16 %v1146, %v1142
    %v1407 = vpack.c.b16 %v1151, %v1147
    %v1408 = vpack.c.b16 %v1152, %v1148
    %v1409 = vpack.c.b16 %v1153, %v1149
    %v1410 = vpack.c.b16 %v1154, %v1150
    %1667 = vmatprep.subr.bf16.mxu0 %v1184
    %1668 = vmatpush1.bf16.msra.mxu0 %v1183
    %1669 = vmatprep.subr.bf16.mxu0 %v1180
    %1670 = vmatpush1.bf16.msra.mxu0 %v1179
    %1671 = vmatprep.subr.bf16.mxu0 %v1176
    %1672 = vmatpush1.bf16.msra.mxu0 %v1175
    %1673 = vmatprep.subr.bf16.mxu0 %v1172
    %1674 = vmatpush1.bf16.msra.mxu0 %v1171
    %1675 = vmatprep.subr.bf16.mxu0 %v1168
    %1676 = vmatpush1.bf16.msra.mxu0 %v1167
    %1677 = vmatprep.subr.bf16.mxu0 %v1164
    %1678 = vmatpush1.bf16.msra.mxu0 %v1163
    %1679 = vmatprep.subr.bf16.mxu0 %v1160
    %1680 = vmatpush1.bf16.msra.mxu0 %v1159
    %1681 = vmatprep.subr.bf16.mxu0 %v1156
    %1682 = vmatpush1.bf16.msra.mxu0 %v1155
    %1683 = vmatprep.subr.bf16.mxu0 %v1216
    %1684 = vmatpush2.bf16.msra.mxu0 %v1215
    %1685 = vmatprep.subr.bf16.mxu0 %v1212
    %1686 = vmatpush2.bf16.msra.mxu0 %v1211
    %1687 = vmatprep.subr.bf16.mxu0 %v1208
    %1688 = vmatpush2.bf16.msra.mxu0 %v1207
    %1689 = vmatprep.subr.bf16.mxu0 %v1204
    %1690 = vmatpush2.bf16.msra.mxu0 %v1203
    %1691 = vmatprep.subr.bf16.mxu0 %v1200
    %1692 = vmatpush2.bf16.msra.mxu0 %v1199
    %1693 = vmatprep.subr.bf16.mxu0 %v1196
    %1694 = vmatpush2.bf16.msra.mxu0 %v1195
    %1695 = vmatprep.subr.bf16.mxu0 %v1192
    %1696 = vmatpush2.bf16.msra.mxu0 %v1191
    %1697 = vmatprep.subr.bf16.mxu0 %v1188
    %1698 = vmatpush2.bf16.msra.mxu0 %v1187
    %1699 = vmatprep.mubr.bf16.mxu0 %v367
    %1700 = vmatmul.mubr.bf16.gmra.mxu0 %v353
    %v1701 = vpop.f32.mrf.mxu0
    %v1702 = vadd.f32 0.0, %v1701
    %v1703 = vpop.f32.mrf.mxu0
    %v1704 = vadd.f32 0.0, %v1703
    %v1705 = vpop.f32.mrf.mxu0
    %v1706 = vpop.f32.mrf.mxu0
    %1707 = vdwg.mxu0
    %1708 = vmatprep.subr.bf16.mxu0 %v1248
    %1709 = vmatpush1.bf16.msra.mxu0 %v1247
    %1710 = vmatprep.subr.bf16.mxu0 %v1244
    %1711 = vmatpush1.bf16.msra.mxu0 %v1243
    %1712 = vmatprep.subr.bf16.mxu0 %v1240
    %1713 = vmatpush1.bf16.msra.mxu0 %v1239
    %1714 = vmatprep.subr.bf16.mxu0 %v1236
    %1715 = vmatpush1.bf16.msra.mxu0 %v1235
    %1716 = vmatprep.subr.bf16.mxu0 %v1232
    %1717 = vmatpush1.bf16.msra.mxu0 %v1231
    %1718 = vmatprep.subr.bf16.mxu0 %v1228
    %1719 = vmatpush1.bf16.msra.mxu0 %v1227
    %1720 = vmatprep.subr.bf16.mxu0 %v1224
    %1721 = vmatpush1.bf16.msra.mxu0 %v1223
    %1722 = vmatprep.subr.bf16.mxu0 %v1220
    %1723 = vmatpush1.bf16.msra.mxu0 %v1219
    %1724 = vmatprep.subr.bf16.mxu0 %v1280
    %1725 = vmatpush2.bf16.msra.mxu0 %v1279
    %1726 = vmatprep.subr.bf16.mxu0 %v1276
    %1727 = vmatpush2.bf16.msra.mxu0 %v1275
    %1728 = vmatprep.subr.bf16.mxu0 %v1272
    %1729 = vmatpush2.bf16.msra.mxu0 %v1271
    %1730 = vmatprep.subr.bf16.mxu0 %v1268
    %1731 = vmatpush2.bf16.msra.mxu0 %v1267
    %1732 = vmatprep.subr.bf16.mxu0 %v1264
    %1733 = vmatpush2.bf16.msra.mxu0 %v1263
    %1734 = vmatprep.subr.bf16.mxu0 %v1260
    %1735 = vmatpush2.bf16.msra.mxu0 %v1259
    %1736 = vmatprep.subr.bf16.mxu0 %v1256
    %1737 = vmatpush2.bf16.msra.mxu0 %v1255
    %1738 = vmatprep.subr.bf16.mxu0 %v1252
    %1739 = vmatpush2.bf16.msra.mxu0 %v1251
    %1740 = vmatprep.mubr.bf16.mxu0 %v377
    %1741 = vmatmul.mubr.bf16.gmra.mxu0 %v375
    %v1742 = vpop.f32.mrf.mxu0
    %v1743 = vadd.f32 %v1702, %v1742
    %v1744 = vpop.f32.mrf.mxu0
    %v1745 = vadd.f32 %v1704, %v1744
    %v1746 = vpop.f32.mrf.mxu0
    %v1747 = vpop.f32.mrf.mxu0
    %1748 = vdwg.mxu0
    %1749 = vmatprep.subr.bf16.mxu0 %v1312
    %1750 = vmatpush1.bf16.msra.mxu0 %v1311
    %1751 = vmatprep.subr.bf16.mxu0 %v1308
    %1752 = vmatpush1.bf16.msra.mxu0 %v1307
    %1753 = vmatprep.subr.bf16.mxu0 %v1304
    %1754 = vmatpush1.bf16.msra.mxu0 %v1303
    %1755 = vmatprep.subr.bf16.mxu0 %v1300
    %1756 = vmatpush1.bf16.msra.mxu0 %v1299
    %1757 = vmatprep.subr.bf16.mxu0 %v1296
    %1758 = vmatpush1.bf16.msra.mxu0 %v1295
    %1759 = vmatprep.subr.bf16.mxu0 %v1292
    %1760 = vmatpush1.bf16.msra.mxu0 %v1291
    %1761 = vmatprep.subr.bf16.mxu0 %v1288
    %1762 = vmatpush1.bf16.msra.mxu0 %v1287
    %1763 = vmatprep.subr.bf16.mxu0 %v1284
    %1764 = vmatpush1.bf16.msra.mxu0 %v1283
    %1765 = vmatprep.subr.bf16.mxu0 %v1344
    %1766 = vmatpush2.bf16.msra.mxu0 %v1343
    %1767 = vmatprep.subr.bf16.mxu0 %v1340
    %1768 = vmatpush2.bf16.msra.mxu0 %v1339
    %1769 = vmatprep.subr.bf16.mxu0 %v1336
    %1770 = vmatpush2.bf16.msra.mxu0 %v1335
    %1771 = vmatprep.subr.bf16.mxu0 %v1332
    %1772 = vmatpush2.bf16.msra.mxu0 %v1331
    %1773 = vmatprep.subr.bf16.mxu0 %v1328
    %1774 = vmatpush2.bf16.msra.mxu0 %v1327
    %1775 = vmatprep.subr.bf16.mxu0 %v1324
    %1776 = vmatpush2.bf16.msra.mxu0 %v1323
    %1777 = vmatprep.subr.bf16.mxu0 %v1320
    %1778 = vmatpush2.bf16.msra.mxu0 %v1319
    %1779 = vmatprep.subr.bf16.mxu0 %v1316
    %1780 = vmatpush2.bf16.msra.mxu0 %v1315
    %1781 = vmatprep.mubr.bf16.mxu0 %v374
    %1782 = vmatmul.mubr.bf16.gmra.mxu0 %v360
    %v1783 = vpop.f32.mrf.mxu0
    %v1784 = vadd.f32 %v1743, %v1783
    %v1785 = vpop.f32.mrf.mxu0
    %v1786 = vadd.f32 %v1745, %v1785
    %v1787 = vpop.f32.mrf.mxu0
    %v1788 = vpop.f32.mrf.mxu0
    %1789 = vdwg.mxu0
    %1790 = vmatprep.subr.bf16.mxu0 %v1376
    %1791 = vmatpush1.bf16.msra.mxu0 %v1375
    %1792 = vmatprep.subr.bf16.mxu0 %v1372
    %1793 = vmatpush1.bf16.msra.mxu0 %v1371
    %1794 = vmatprep.subr.bf16.mxu0 %v1368
    %1795 = vmatpush1.bf16.msra.mxu0 %v1367
    %1796 = vmatprep.subr.bf16.mxu0 %v1364
    %1797 = vmatpush1.bf16.msra.mxu0 %v1363
    %1798 = vmatprep.subr.bf16.mxu0 %v1360
    %1799 = vmatpush1.bf16.msra.mxu0 %v1359
    %1800 = vmatprep.subr.bf16.mxu0 %v1356
    %1801 = vmatpush1.bf16.msra.mxu0 %v1355
    %1802 = vmatprep.subr.bf16.mxu0 %v1352
    %1803 = vmatpush1.bf16.msra.mxu0 %v1351
    %1804 = vmatprep.subr.bf16.mxu0 %v1348
    %1805 = vmatpush1.bf16.msra.mxu0 %v1347
    %1806 = vmatprep.subr.bf16.mxu0 %v1408
    %1807 = vmatpush2.bf16.msra.mxu0 %v1407
    %1808 = vmatprep.subr.bf16.mxu0 %v1404
    %1809 = vmatpush2.bf16.msra.mxu0 %v1403
    %1810 = vmatprep.subr.bf16.mxu0 %v1400
    %1811 = vmatpush2.bf16.msra.mxu0 %v1399
    %1812 = vmatprep.subr.bf16.mxu0 %v1396
    %1813 = vmatpush2.bf16.msra.mxu0 %v1395
    %1814 = vmatprep.subr.bf16.mxu0 %v1392
    %1815 = vmatpush2.bf16.msra.mxu0 %v1391
    %1816 = vmatprep.subr.bf16.mxu0 %v1388
    %1817 = vmatpush2.bf16.msra.mxu0 %v1387
    %1818 = vmatprep.subr.bf16.mxu0 %v1384
    %1819 = vmatpush2.bf16.msra.mxu0 %v1383
    %1820 = vmatprep.subr.bf16.mxu0 %v1380
    %1821 = vmatpush2.bf16.msra.mxu0 %v1379
    %1822 = vmatprep.mubr.bf16.mxu0 %v378
    %1823 = vmatmul.mubr.bf16.gmra.mxu0 %v376
    %v1824 = vpop.f32.mrf.mxu0
    %v1825 = vadd.f32 %v1784, %v1824
    %v1826 = vpop.f32.mrf.mxu0
    %v1827 = vadd.f32 %v1786, %v1826
    %v1828 = vpop.f32.mrf.mxu0
    %v1829 = vpop.f32.mrf.mxu0
    %1830 = vdwg.mxu0
    %1831 = vmatprep.subr.bf16.mxu0 %v1186
    %1832 = vmatpush1.bf16.msra.mxu0 %v1185
    %1833 = vmatprep.subr.bf16.mxu0 %v1182
    %1834 = vmatpush1.bf16.msra.mxu0 %v1181
    %1835 = vmatprep.subr.bf16.mxu0 %v1178
    %1836 = vmatpush1.bf16.msra.mxu0 %v1177
    %1837 = vmatprep.subr.bf16.mxu0 %v1174
    %1838 = vmatpush1.bf16.msra.mxu0 %v1173
    %1839 = vmatprep.subr.bf16.mxu0 %v1170
    %1840 = vmatpush1.bf16.msra.mxu0 %v1169
    %1841 = vmatprep.subr.bf16.mxu0 %v1166
    %1842 = vmatpush1.bf16.msra.mxu0 %v1165
    %1843 = vmatprep.subr.bf16.mxu0 %v1162
    %1844 = vmatpush1.bf16.msra.mxu0 %v1161
    %1845 = vmatprep.subr.bf16.mxu0 %v1158
    %1846 = vmatpush1.bf16.msra.mxu0 %v1157
    %1847 = vmatprep.subr.bf16.mxu0 %v1218
    %1848 = vmatpush2.bf16.msra.mxu0 %v1217
    %1849 = vmatprep.subr.bf16.mxu0 %v1214
    %1850 = vmatpush2.bf16.msra.mxu0 %v1213
    %1851 = vmatprep.subr.bf16.mxu0 %v1210
    %1852 = vmatpush2.bf16.msra.mxu0 %v1209
    %1853 = vmatprep.subr.bf16.mxu0 %v1206
    %1854 = vmatpush2.bf16.msra.mxu0 %v1205
    %1855 = vmatprep.subr.bf16.mxu0 %v1202
    %1856 = vmatpush2.bf16.msra.mxu0 %v1201
    %1857 = vmatprep.subr.bf16.mxu0 %v1198
    %1858 = vmatpush2.bf16.msra.mxu0 %v1197
    %1859 = vmatprep.subr.bf16.mxu0 %v1194
    %1860 = vmatpush2.bf16.msra.mxu0 %v1193
    %1861 = vmatprep.subr.bf16.mxu0 %v1190
    %1862 = vmatpush2.bf16.msra.mxu0 %v1189
    %1863 = vmatprep.mubr.bf16.mxu0 %v367
    %1864 = vmatmul.mubr.bf16.gmra.mxu0 %v353
    %v1865 = vpop.f32.mrf.mxu0
    %v1866 = vadd.f32 0.0, %v1865
    %v1867 = vpop.f32.mrf.mxu0
    %v1868 = vadd.f32 0.0, %v1867
    %v1869 = vpop.f32.mrf.mxu0
    %v1870 = vpop.f32.mrf.mxu0
    %1871 = vdwg.mxu0
    %1872 = vmatprep.subr.bf16.mxu0 %v1250
    %1873 = vmatpush1.bf16.msra.mxu0 %v1249
    %1874 = vmatprep.subr.bf16.mxu0 %v1246
    %1875 = vmatpush1.bf16.msra.mxu0 %v1245
    %1876 = vmatprep.subr.bf16.mxu0 %v1242
    %1877 = vmatpush1.bf16.msra.mxu0 %v1241
    %1878 = vmatprep.subr.bf16.mxu0 %v1238
    %1879 = vmatpush1.bf16.msra.mxu0 %v1237
    %1880 = vmatprep.subr.bf16.mxu0 %v1234
    %1881 = vmatpush1.bf16.msra.mxu0 %v1233
    %1882 = vmatprep.subr.bf16.mxu0 %v1230
    %1883 = vmatpush1.bf16.msra.mxu0 %v1229
    %1884 = vmatprep.subr.bf16.mxu0 %v1226
    %1885 = vmatpush1.bf16.msra.mxu0 %v1225
    %1886 = vmatprep.subr.bf16.mxu0 %v1222
    %1887 = vmatpush1.bf16.msra.mxu0 %v1221
    %1888 = vmatprep.subr.bf16.mxu0 %v1282
    %1889 = vmatpush2.bf16.msra.mxu0 %v1281
    %1890 = vmatprep.subr.bf16.mxu0 %v1278
    %1891 = vmatpush2.bf16.msra.mxu0 %v1277
    %1892 = vmatprep.subr.bf16.mxu0 %v1274
    %1893 = vmatpush2.bf16.msra.mxu0 %v1273
    %1894 = vmatprep.subr.bf16.mxu0 %v1270
    %1895 = vmatpush2.bf16.msra.mxu0 %v1269
    %1896 = vmatprep.subr.bf16.mxu0 %v1266
    %1897 = vmatpush2.bf16.msra.mxu0 %v1265
    %1898 = vmatprep.subr.bf16.mxu0 %v1262
    %1899 = vmatpush2.bf16.msra.mxu0 %v1261
    %1900 = vmatprep.subr.bf16.mxu0 %v1258
    %1901 = vmatpush2.bf16.msra.mxu0 %v1257
    %1902 = vmatprep.subr.bf16.mxu0 %v1254
    %1903 = vmatpush2.bf16.msra.mxu0 %v1253
    %1904 = vmatprep.mubr.bf16.mxu0 %v377
    %1905 = vmatmul.mubr.bf16.gmra.mxu0 %v375
    %v1906 = vpop.f32.mrf.mxu0
    %v1907 = vadd.f32 %v1866, %v1906
    %v1908 = vpop.f32.mrf.mxu0
    %v1909 = vadd.f32 %v1868, %v1908
    %v1910 = vpop.f32.mrf.mxu0
    %v1911 = vpop.f32.mrf.mxu0
    %1912 = vdwg.mxu0
    %1913 = vmatprep.subr.bf16.mxu0 %v1314
    %1914 = vmatpush1.bf16.msra.mxu0 %v1313
    %1915 = vmatprep.subr.bf16.mxu0 %v1310
    %1916 = vmatpush1.bf16.msra.mxu0 %v1309
    %1917 = vmatprep.subr.bf16.mxu0 %v1306
    %1918 = vmatpush1.bf16.msra.mxu0 %v1305
    %1919 = vmatprep.subr.bf16.mxu0 %v1302
    %1920 = vmatpush1.bf16.msra.mxu0 %v1301
    %1921 = vmatprep.subr.bf16.mxu0 %v1298
    %1922 = vmatpush1.bf16.msra.mxu0 %v1297
    %1923 = vmatprep.subr.bf16.mxu0 %v1294
    %1924 = vmatpush1.bf16.msra.mxu0 %v1293
    %1925 = vmatprep.subr.bf16.mxu0 %v1290
    %1926 = vmatpush1.bf16.msra.mxu0 %v1289
    %1927 = vmatprep.subr.bf16.mxu0 %v1286
    %1928 = vmatpush1.bf16.msra.mxu0 %v1285
    %1929 = vmatprep.subr.bf16.mxu0 %v1346
    %1930 = vmatpush2.bf16.msra.mxu0 %v1345
    %1931 = vmatprep.subr.bf16.mxu0 %v1342
    %1932 = vmatpush2.bf16.msra.mxu0 %v1341
    %1933 = vmatprep.subr.bf16.mxu0 %v1338
    %1934 = vmatpush2.bf16.msra.mxu0 %v1337
    %1935 = vmatprep.subr.bf16.mxu0 %v1334
    %1936 = vmatpush2.bf16.msra.mxu0 %v1333
    %1937 = vmatprep.subr.bf16.mxu0 %v1330
    %1938 = vmatpush2.bf16.msra.mxu0 %v1329
    %1939 = vmatprep.subr.bf16.mxu0 %v1326
    %1940 = vmatpush2.bf16.msra.mxu0 %v1325
    %1941 = vmatprep.subr.bf16.mxu0 %v1322
    %1942 = vmatpush2.bf16.msra.mxu0 %v1321
    %1943 = vmatprep.subr.bf16.mxu0 %v1318
    %1944 = vmatpush2.bf16.msra.mxu0 %v1317
    %1945 = vmatprep.mubr.bf16.mxu0 %v374
    %1946 = vmatmul.mubr.bf16.gmra.mxu0 %v360
    %v1947 = vpop.f32.mrf.mxu0
    %v1948 = vadd.f32 %v1907, %v1947
    %v1949 = vpop.f32.mrf.mxu0
    %v1950 = vadd.f32 %v1909, %v1949
    %v1951 = vpop.f32.mrf.mxu0
    %v1952 = vpop.f32.mrf.mxu0
    %1953 = vdwg.mxu0
    %1954 = vmatprep.subr.bf16.mxu0 %v1378
    %1955 = vmatpush1.bf16.msra.mxu0 %v1377
    %1956 = vmatprep.subr.bf16.mxu0 %v1374
    %1957 = vmatpush1.bf16.msra.mxu0 %v1373
    %1958 = vmatprep.subr.bf16.mxu0 %v1370
    %1959 = vmatpush1.bf16.msra.mxu0 %v1369
    %1960 = vmatprep.subr.bf16.mxu0 %v1366
    %1961 = vmatpush1.bf16.msra.mxu0 %v1365
    %1962 = vmatprep.subr.bf16.mxu0 %v1362
    %1963 = vmatpush1.bf16.msra.mxu0 %v1361
    %1964 = vmatprep.subr.bf16.mxu0 %v1358
    %1965 = vmatpush1.bf16.msra.mxu0 %v1357
    %1966 = vmatprep.subr.bf16.mxu0 %v1354
    %1967 = vmatpush1.bf16.msra.mxu0 %v1353
    %1968 = vmatprep.subr.bf16.mxu0 %v1350
    %1969 = vmatpush1.bf16.msra.mxu0 %v1349
    %1970 = vmatprep.subr.bf16.mxu0 %v1410
    %1971 = vmatpush2.bf16.msra.mxu0 %v1409
    %1972 = vmatprep.subr.bf16.mxu0 %v1406
    %1973 = vmatpush2.bf16.msra.mxu0 %v1405
    %1974 = vmatprep.subr.bf16.mxu0 %v1402
    %1975 = vmatpush2.bf16.msra.mxu0 %v1401
    %1976 = vmatprep.subr.bf16.mxu0 %v1398
    %1977 = vmatpush2.bf16.msra.mxu0 %v1397
    %1978 = vmatprep.subr.bf16.mxu0 %v1394
    %1979 = vmatpush2.bf16.msra.mxu0 %v1393
    %1980 = vmatprep.subr.bf16.mxu0 %v1390
    %1981 = vmatpush2.bf16.msra.mxu0 %v1389
    %1982 = vmatprep.subr.bf16.mxu0 %v1386
    %1983 = vmatpush2.bf16.msra.mxu0 %v1385
    %1984 = vmatprep.subr.bf16.mxu0 %v1382
    %1985 = vmatpush2.bf16.msra.mxu0 %v1381
    %1986 = vmatprep.mubr.bf16.mxu0 %v378
    %1987 = vmatmul.mubr.bf16.gmra.mxu0 %v376
    %v1988 = vpop.f32.mrf.mxu0
    %v1989 = vadd.f32 %v1948, %v1988
    %v1990 = vpop.f32.mrf.mxu0
    %v1991 = vadd.f32 %v1950, %v1990
    %v1992 = vpop.f32.mrf.mxu0
    %v1993 = vpop.f32.mrf.mxu0
    %1994 = vdwg.mxu0
    %v1995 = vld [vmem:[%s2] sm:$0x1]
    %v1996 = vld [vmem:[%s3] sm:$0x1]
    %v1997 = vlaneseq
    %v1998 = vshrl.u32 %v1997, 7
    %v1999 = vadd.s32 %v1998, 8
    %v2000 = vadd.s32 %v1998, 16
    %v2001 = vadd.s32 %v1998, 24
    %v2002 = vadd.s32 %v1998, 32
    %v2003 = vadd.s32 %v1998, 40
    %v2004 = vadd.s32 %v1998, 48
    %v2005 = vadd.s32 %v1998, 56
    %v2006 = vadd.s32 %v1998, 64
    %v2007 = vadd.s32 %v1998, 72
    %v2008 = vadd.s32 %v1998, 80
    %v2009 = vadd.s32 %v1998, 88
    %v2010 = vadd.s32 %v1998, 96
    %v2011 = vadd.s32 %v1998, 104
    %v2012 = vadd.s32 %v1998, 112
    %v2013 = vadd.s32 %v1998, 120
    %v2014 = vadd.s32 %v1998, 128
    %v2015 = vadd.s32 %v1998, 136
    %v2016 = vadd.s32 %v1998, 144
    %v2017 = vadd.s32 %v1998, 152
    %v2018 = vadd.s32 %v1998, 160
    %v2019 = vadd.s32 %v1998, 168
    %v2020 = vadd.s32 %v1998, 176
    %v2021 = vadd.s32 %v1998, 184
    %v2022 = vadd.s32 %v1998, 192
    %v2023 = vadd.s32 %v1998, 200
    %v2024 = vadd.s32 %v1998, 208
    %v2025 = vadd.s32 %v1998, 216
    %v2026 = vadd.s32 %v1998, 224
    %v2027 = vadd.s32 %v1998, 232
    %v2028 = vadd.s32 %v1998, 240
    %v2029 = vadd.s32 %v1998, 248
    %v2030 = vadd.s32 %v1998, 256
    %v2031 = vadd.s32 %v1998, 264
    %v2032 = vadd.s32 %v1998, 272
    %v2033 = vadd.s32 %v1998, 280
    %v2034 = vadd.s32 %v1998, 288
    %v2035 = vadd.s32 %v1998, 296
    %v2036 = vadd.s32 %v1998, 304
    %v2037 = vadd.s32 %v1998, 312
    %v2038 = vadd.s32 %v1998, 320
    %v2039 = vadd.s32 %v1998, 328
    %v2040 = vadd.s32 %v1998, 336
    %v2041 = vadd.s32 %v1998, 344
    %v2042 = vadd.s32 %v1998, 352
    %v2043 = vadd.s32 %v1998, 360
    %v2044 = vadd.s32 %v1998, 368
    %v2045 = vadd.s32 %v1998, 376
    %v2046 = vadd.s32 %v1998, 384
    %v2047 = vadd.s32 %v1998, 392
    %v2048 = vadd.s32 %v1998, 400
    %v2049 = vadd.s32 %v1998, 408
    %v2050 = vadd.s32 %v1998, 416
    %v2051 = vadd.s32 %v1998, 424
    %v2052 = vadd.s32 %v1998, 432
    %v2053 = vadd.s32 %v1998, 440
    %v2054 = vadd.s32 %v1998, 448
    %v2055 = vadd.s32 %v1998, 456
    %v2056 = vadd.s32 %v1998, 464
    %v2057 = vadd.s32 %v1998, 472
    %v2058 = vadd.s32 %v1998, 480
    %v2059 = vadd.s32 %v1998, 488
    %v2060 = vadd.s32 %v1998, 496
    %v2061 = vadd.s32 %v1998, 504
    %v2062 = vlaneseq
    %v2063 = vand.u32 %v2062, 127
    %v2064 = vmul.u32 %v2063, 64
    %vm2065 = vcmp.ge.s32.totalorder %v1998, %v2064
    %vm2066 = vcmp.ge.s32.totalorder %v1999, %v2064
    %vm2067 = vcmp.ge.s32.totalorder %v2000, %v2064
    %vm2068 = vcmp.ge.s32.totalorder %v2001, %v2064
    %vm2069 = vcmp.ge.s32.totalorder %v2002, %v2064
    %vm2070 = vcmp.ge.s32.totalorder %v2003, %v2064
    %vm2071 = vcmp.ge.s32.totalorder %v2004, %v2064
    %vm2072 = vcmp.ge.s32.totalorder %v2005, %v2064
    %vm2073 = vcmp.ge.s32.totalorder %v2006, %v2064
    %vm2074 = vcmp.ge.s32.totalorder %v2007, %v2064
    %vm2075 = vcmp.ge.s32.totalorder %v2008, %v2064
    %vm2076 = vcmp.ge.s32.totalorder %v2009, %v2064
    %vm2077 = vcmp.ge.s32.totalorder %v2010, %v2064
    %vm2078 = vcmp.ge.s32.totalorder %v2011, %v2064
    %vm2079 = vcmp.ge.s32.totalorder %v2012, %v2064
    %vm2080 = vcmp.ge.s32.totalorder %v2013, %v2064
    %vm2081 = vcmp.ge.s32.totalorder %v2014, %v2064
    %vm2082 = vcmp.ge.s32.totalorder %v2015, %v2064
    %vm2083 = vcmp.ge.s32.totalorder %v2016, %v2064
    %vm2084 = vcmp.ge.s32.totalorder %v2017, %v2064
    %vm2085 = vcmp.ge.s32.totalorder %v2018, %v2064
    %vm2086 = vcmp.ge.s32.totalorder %v2019, %v2064
    %vm2087 = vcmp.ge.s32.totalorder %v2020, %v2064
    %vm2088 = vcmp.ge.s32.totalorder %v2021, %v2064
    %vm2089 = vcmp.ge.s32.totalorder %v2022, %v2064
    %vm2090 = vcmp.ge.s32.totalorder %v2023, %v2064
    %vm2091 = vcmp.ge.s32.totalorder %v2024, %v2064
    %vm2092 = vcmp.ge.s32.totalorder %v2025, %v2064
    %vm2093 = vcmp.ge.s32.totalorder %v2026, %v2064
    %vm2094 = vcmp.ge.s32.totalorder %v2027, %v2064
    %vm2095 = vcmp.ge.s32.totalorder %v2028, %v2064
    %vm2096 = vcmp.ge.s32.totalorder %v2029, %v2064
    %vm2097 = vcmp.ge.s32.totalorder %v2030, %v2064
    %vm2098 = vcmp.ge.s32.totalorder %v2031, %v2064
    %vm2099 = vcmp.ge.s32.totalorder %v2032, %v2064
    %vm2100 = vcmp.ge.s32.totalorder %v2033, %v2064
    %vm2101 = vcmp.ge.s32.totalorder %v2034, %v2064
    %vm2102 = vcmp.ge.s32.totalorder %v2035, %v2064
    %vm2103 = vcmp.ge.s32.totalorder %v2036, %v2064
    %vm2104 = vcmp.ge.s32.totalorder %v2037, %v2064
    %vm2105 = vcmp.ge.s32.totalorder %v2038, %v2064
    %vm2106 = vcmp.ge.s32.totalorder %v2039, %v2064
    %vm2107 = vcmp.ge.s32.totalorder %v2040, %v2064
    %vm2108 = vcmp.ge.s32.totalorder %v2041, %v2064
    %vm2109 = vcmp.ge.s32.totalorder %v2042, %v2064
    %vm2110 = vcmp.ge.s32.totalorder %v2043, %v2064
    %vm2111 = vcmp.ge.s32.totalorder %v2044, %v2064
    %vm2112 = vcmp.ge.s32.totalorder %v2045, %v2064
    %vm2113 = vcmp.ge.s32.totalorder %v2046, %v2064
    %vm2114 = vcmp.ge.s32.totalorder %v2047, %v2064
    %vm2115 = vcmp.ge.s32.totalorder %v2048, %v2064
    %vm2116 = vcmp.ge.s32.totalorder %v2049, %v2064
    %vm2117 = vcmp.ge.s32.totalorder %v2050, %v2064
    %vm2118 = vcmp.ge.s32.totalorder %v2051, %v2064
    %vm2119 = vcmp.ge.s32.totalorder %v2052, %v2064
    %vm2120 = vcmp.ge.s32.totalorder %v2053, %v2064
    %vm2121 = vcmp.ge.s32.totalorder %v2054, %v2064
    %vm2122 = vcmp.ge.s32.totalorder %v2055, %v2064
    %vm2123 = vcmp.ge.s32.totalorder %v2056, %v2064
    %vm2124 = vcmp.ge.s32.totalorder %v2057, %v2064
    %vm2125 = vcmp.ge.s32.totalorder %v2058, %v2064
    %vm2126 = vcmp.ge.s32.totalorder %v2059, %v2064
    %vm2127 = vcmp.ge.s32.totalorder %v2060, %v2064
    %vm2128 = vcmp.ge.s32.totalorder %v2061, %v2064
    %v2129 = vadd.s32 %v2064, 64
    %vm2130 = vcmp.lt.s32.totalorder %v1998, %v2129
    %vm2131 = vcmp.lt.s32.totalorder %v1999, %v2129
    %vm2132 = vcmp.lt.s32.totalorder %v2000, %v2129
    %vm2133 = vcmp.lt.s32.totalorder %v2001, %v2129
    %vm2134 = vcmp.lt.s32.totalorder %v2002, %v2129
    %vm2135 = vcmp.lt.s32.totalorder %v2003, %v2129
    %vm2136 = vcmp.lt.s32.totalorder %v2004, %v2129
    %vm2137 = vcmp.lt.s32.totalorder %v2005, %v2129
    %vm2138 = vcmp.lt.s32.totalorder %v2006, %v2129
    %vm2139 = vcmp.lt.s32.totalorder %v2007, %v2129
    %vm2140 = vcmp.lt.s32.totalorder %v2008, %v2129
    %vm2141 = vcmp.lt.s32.totalorder %v2009, %v2129
    %vm2142 = vcmp.lt.s32.totalorder %v2010, %v2129
    %vm2143 = vcmp.lt.s32.totalorder %v2011, %v2129
    %vm2144 = vcmp.lt.s32.totalorder %v2012, %v2129
    %vm2145 = vcmp.lt.s32.totalorder %v2013, %v2129
    %vm2146 = vcmp.lt.s32.totalorder %v2014, %v2129
    %vm2147 = vcmp.lt.s32.totalorder %v2015, %v2129
    %vm2148 = vcmp.lt.s32.totalorder %v2016, %v2129
    %vm2149 = vcmp.lt.s32.totalorder %v2017, %v2129
    %vm2150 = vcmp.lt.s32.totalorder %v2018, %v2129
    %vm2151 = vcmp.lt.s32.totalorder %v2019, %v2129
    %vm2152 = vcmp.lt.s32.totalorder %v2020, %v2129
    %vm2153 = vcmp.lt.s32.totalorder %v2021, %v2129
    %vm2154 = vcmp.lt.s32.totalorder %v2022, %v2129
    %vm2155 = vcmp.lt.s32.totalorder %v2023, %v2129
    %vm2156 = vcmp.lt.s32.totalorder %v2024, %v2129
    %vm2157 = vcmp.lt.s32.totalorder %v2025, %v2129
    %vm2158 = vcmp.lt.s32.totalorder %v2026, %v2129
    %vm2159 = vcmp.lt.s32.totalorder %v2027, %v2129
    %vm2160 = vcmp.lt.s32.totalorder %v2028, %v2129
    %vm2161 = vcmp.lt.s32.totalorder %v2029, %v2129
    %vm2162 = vcmp.lt.s32.totalorder %v2030, %v2129
    %vm2163 = vcmp.lt.s32.totalorder %v2031, %v2129
    %vm2164 = vcmp.lt.s32.totalorder %v2032, %v2129
    %vm2165 = vcmp.lt.s32.totalorder %v2033, %v2129
    %vm2166 = vcmp.lt.s32.totalorder %v2034, %v2129
    %vm2167 = vcmp.lt.s32.totalorder %v2035, %v2129
    %vm2168 = vcmp.lt.s32.totalorder %v2036, %v2129
    %vm2169 = vcmp.lt.s32.totalorder %v2037, %v2129
    %vm2170 = vcmp.lt.s32.totalorder %v2038, %v2129
    %vm2171 = vcmp.lt.s32.totalorder %v2039, %v2129
    %vm2172 = vcmp.lt.s32.totalorder %v2040, %v2129
    %vm2173 = vcmp.lt.s32.totalorder %v2041, %v2129
    %vm2174 = vcmp.lt.s32.totalorder %v2042, %v2129
    %vm2175 = vcmp.lt.s32.totalorder %v2043, %v2129
    %vm2176 = vcmp.lt.s32.totalorder %v2044, %v2129
    %vm2177 = vcmp.lt.s32.totalorder %v2045, %v2129
    %vm2178 = vcmp.lt.s32.totalorder %v2046, %v2129
    %vm2179 = vcmp.lt.s32.totalorder %v2047, %v2129
    %vm2180 = vcmp.lt.s32.totalorder %v2048, %v2129
    %vm2181 = vcmp.lt.s32.totalorder %v2049, %v2129
    %vm2182 = vcmp.lt.s32.totalorder %v2050, %v2129
    %vm2183 = vcmp.lt.s32.totalorder %v2051, %v2129
    %vm2184 = vcmp.lt.s32.totalorder %v2052, %v2129
    %vm2185 = vcmp.lt.s32.totalorder %v2053, %v2129
    %vm2186 = vcmp.lt.s32.totalorder %v2054, %v2129
    %vm2187 = vcmp.lt.s32.totalorder %v2055, %v2129
    %vm2188 = vcmp.lt.s32.totalorder %v2056, %v2129
    %vm2189 = vcmp.lt.s32.totalorder %v2057, %v2129
    %vm2190 = vcmp.lt.s32.totalorder %v2058, %v2129
    %vm2191 = vcmp.lt.s32.totalorder %v2059, %v2129
    %vm2192 = vcmp.lt.s32.totalorder %v2060, %v2129
    %vm2193 = vcmp.lt.s32.totalorder %v2061, %v2129
    %vm2194 = vmand %vm2065, %vm2130
    %vm2195 = vmand %vm2066, %vm2131
    %vm2196 = vmand %vm2067, %vm2132
    %vm2197 = vmand %vm2068, %vm2133
    %vm2198 = vmand %vm2069, %vm2134
    %vm2199 = vmand %vm2070, %vm2135
    %vm2200 = vmand %vm2071, %vm2136
    %vm2201 = vmand %vm2072, %vm2137
    %vm2202 = vmand %vm2073, %vm2138
    %vm2203 = vmand %vm2074, %vm2139
    %vm2204 = vmand %vm2075, %vm2140
    %vm2205 = vmand %vm2076, %vm2141
    %vm2206 = vmand %vm2077, %vm2142
    %vm2207 = vmand %vm2078, %vm2143
    %vm2208 = vmand %vm2079, %vm2144
    %vm2209 = vmand %vm2080, %vm2145
    %vm2210 = vmand %vm2081, %vm2146
    %vm2211 = vmand %vm2082, %vm2147
    %vm2212 = vmand %vm2083, %vm2148
    %vm2213 = vmand %vm2084, %vm2149
    %vm2214 = vmand %vm2085, %vm2150
    %vm2215 = vmand %vm2086, %vm2151
    %vm2216 = vmand %vm2087, %vm2152
    %vm2217 = vmand %vm2088, %vm2153
    %vm2218 = vmand %vm2089, %vm2154
    %vm2219 = vmand %vm2090, %vm2155
    %vm2220 = vmand %vm2091, %vm2156
    %vm2221 = vmand %vm2092, %vm2157
    %vm2222 = vmand %vm2093, %vm2158
    %vm2223 = vmand %vm2094, %vm2159
    %vm2224 = vmand %vm2095, %vm2160
    %vm2225 = vmand %vm2096, %vm2161
    %vm2226 = vmand %vm2097, %vm2162
    %vm2227 = vmand %vm2098, %vm2163
    %vm2228 = vmand %vm2099, %vm2164
    %vm2229 = vmand %vm2100, %vm2165
    %vm2230 = vmand %vm2101, %vm2166
    %vm2231 = vmand %vm2102, %vm2167
    %vm2232 = vmand %vm2103, %vm2168
    %vm2233 = vmand %vm2104, %vm2169
    %vm2234 = vmand %vm2105, %vm2170
    %vm2235 = vmand %vm2106, %vm2171
    %vm2236 = vmand %vm2107, %vm2172
    %vm2237 = vmand %vm2108, %vm2173
    %vm2238 = vmand %vm2109, %vm2174
    %vm2239 = vmand %vm2110, %vm2175
    %vm2240 = vmand %vm2111, %vm2176
    %vm2241 = vmand %vm2112, %vm2177
    %vm2242 = vmand %vm2113, %vm2178
    %vm2243 = vmand %vm2114, %vm2179
    %vm2244 = vmand %vm2115, %vm2180
    %vm2245 = vmand %vm2116, %vm2181
    %vm2246 = vmand %vm2117, %vm2182
    %vm2247 = vmand %vm2118, %vm2183
    %vm2248 = vmand %vm2119, %vm2184
    %vm2249 = vmand %vm2120, %vm2185
    %vm2250 = vmand %vm2121, %vm2186
    %vm2251 = vmand %vm2122, %vm2187
    %vm2252 = vmand %vm2123, %vm2188
    %vm2253 = vmand %vm2124, %vm2189
    %vm2254 = vmand %vm2125, %vm2190
    %vm2255 = vmand %vm2126, %vm2191
    %vm2256 = vmand %vm2127, %vm2192
    %vm2257 = vmand %vm2128, %vm2193
    %v2258 = vsel %vm2194, 1, 0
    %v2259 = vsel %vm2195, 1, 0
    %v2260 = vsel %vm2196, 1, 0
    %v2261 = vsel %vm2197, 1, 0
    %v2262 = vsel %vm2198, 1, 0
    %v2263 = vsel %vm2199, 1, 0
    %v2264 = vsel %vm2200, 1, 0
    %v2265 = vsel %vm2201, 1, 0
    %v2266 = vsel %vm2202, 1, 0
    %v2267 = vsel %vm2203, 1, 0
    %v2268 = vsel %vm2204, 1, 0
    %v2269 = vsel %vm2205, 1, 0
    %v2270 = vsel %vm2206, 1, 0
    %v2271 = vsel %vm2207, 1, 0
    %v2272 = vsel %vm2208, 1, 0
    %v2273 = vsel %vm2209, 1, 0
    %v2274 = vsel %vm2210, 1, 0
    %v2275 = vsel %vm2211, 1, 0
    %v2276 = vsel %vm2212, 1, 0
    %v2277 = vsel %vm2213, 1, 0
    %v2278 = vsel %vm2214, 1, 0
    %v2279 = vsel %vm2215, 1, 0
    %v2280 = vsel %vm2216, 1, 0
    %v2281 = vsel %vm2217, 1, 0
    %v2282 = vsel %vm2218, 1, 0
    %v2283 = vsel %vm2219, 1, 0
    %v2284 = vsel %vm2220, 1, 0
    %v2285 = vsel %vm2221, 1, 0
    %v2286 = vsel %vm2222, 1, 0
    %v2287 = vsel %vm2223, 1, 0
    %v2288 = vsel %vm2224, 1, 0
    %v2289 = vsel %vm2225, 1, 0
    %v2290 = vsel %vm2226, 1, 0
    %v2291 = vsel %vm2227, 1, 0
    %v2292 = vsel %vm2228, 1, 0
    %v2293 = vsel %vm2229, 1, 0
    %v2294 = vsel %vm2230, 1, 0
    %v2295 = vsel %vm2231, 1, 0
    %v2296 = vsel %vm2232, 1, 0
    %v2297 = vsel %vm2233, 1, 0
    %v2298 = vsel %vm2234, 1, 0
    %v2299 = vsel %vm2235, 1, 0
    %v2300 = vsel %vm2236, 1, 0
    %v2301 = vsel %vm2237, 1, 0
    %v2302 = vsel %vm2238, 1, 0
    %v2303 = vsel %vm2239, 1, 0
    %v2304 = vsel %vm2240, 1, 0
    %v2305 = vsel %vm2241, 1, 0
    %v2306 = vsel %vm2242, 1, 0
    %v2307 = vsel %vm2243, 1, 0
    %v2308 = vsel %vm2244, 1, 0
    %v2309 = vsel %vm2245, 1, 0
    %v2310 = vsel %vm2246, 1, 0
    %v2311 = vsel %vm2247, 1, 0
    %v2312 = vsel %vm2248, 1, 0
    %v2313 = vsel %vm2249, 1, 0
    %v2314 = vsel %vm2250, 1, 0
    %v2315 = vsel %vm2251, 1, 0
    %v2316 = vsel %vm2252, 1, 0
    %v2317 = vsel %vm2253, 1, 0
    %v2318 = vsel %vm2254, 1, 0
    %v2319 = vsel %vm2255, 1, 0
    %v2320 = vsel %vm2256, 1, 0
    %v2321 = vsel %vm2257, 1, 0
    %v2322 = vcvt.s32.f32 %v2258
    %v2323 = vcvt.s32.f32 %v2259
    %v2324 = vcvt.s32.f32 %v2260
    %v2325 = vcvt.s32.f32 %v2261
    %v2326 = vcvt.s32.f32 %v2262
    %v2327 = vcvt.s32.f32 %v2263
    %v2328 = vcvt.s32.f32 %v2264
    %v2329 = vcvt.s32.f32 %v2265
    %v2330 = vcvt.s32.f32 %v2266
    %v2331 = vcvt.s32.f32 %v2267
    %v2332 = vcvt.s32.f32 %v2268
    %v2333 = vcvt.s32.f32 %v2269
    %v2334 = vcvt.s32.f32 %v2270
    %v2335 = vcvt.s32.f32 %v2271
    %v2336 = vcvt.s32.f32 %v2272
    %v2337 = vcvt.s32.f32 %v2273
    %v2338 = vcvt.s32.f32 %v2274
    %v2339 = vcvt.s32.f32 %v2275
    %v2340 = vcvt.s32.f32 %v2276
    %v2341 = vcvt.s32.f32 %v2277
    %v2342 = vcvt.s32.f32 %v2278
    %v2343 = vcvt.s32.f32 %v2279
    %v2344 = vcvt.s32.f32 %v2280
    %v2345 = vcvt.s32.f32 %v2281
    %v2346 = vcvt.s32.f32 %v2282
    %v2347 = vcvt.s32.f32 %v2283
    %v2348 = vcvt.s32.f32 %v2284
    %v2349 = vcvt.s32.f32 %v2285
    %v2350 = vcvt.s32.f32 %v2286
    %v2351 = vcvt.s32.f32 %v2287
    %v2352 = vcvt.s32.f32 %v2288
    %v2353 = vcvt.s32.f32 %v2289
    %v2354 = vcvt.s32.f32 %v2290
    %v2355 = vcvt.s32.f32 %v2291
    %v2356 = vcvt.s32.f32 %v2292
    %v2357 = vcvt.s32.f32 %v2293
    %v2358 = vcvt.s32.f32 %v2294
    %v2359 = vcvt.s32.f32 %v2295
    %v2360 = vcvt.s32.f32 %v2296
    %v2361 = vcvt.s32.f32 %v2297
    %v2362 = vcvt.s32.f32 %v2298
    %v2363 = vcvt.s32.f32 %v2299
    %v2364 = vcvt.s32.f32 %v2300
    %v2365 = vcvt.s32.f32 %v2301
    %v2366 = vcvt.s32.f32 %v2302
    %v2367 = vcvt.s32.f32 %v2303
    %v2368 = vcvt.s32.f32 %v2304
    %v2369 = vcvt.s32.f32 %v2305
    %v2370 = vcvt.s32.f32 %v2306
    %v2371 = vcvt.s32.f32 %v2307
    %v2372 = vcvt.s32.f32 %v2308
    %v2373 = vcvt.s32.f32 %v2309
    %v2374 = vcvt.s32.f32 %v2310
    %v2375 = vcvt.s32.f32 %v2311
    %v2376 = vcvt.s32.f32 %v2312
    %v2377 = vcvt.s32.f32 %v2313
    %v2378 = vcvt.s32.f32 %v2314
    %v2379 = vcvt.s32.f32 %v2315
    %v2380 = vcvt.s32.f32 %v2316
    %v2381 = vcvt.s32.f32 %v2317
    %v2382 = vcvt.s32.f32 %v2318
    %v2383 = vcvt.s32.f32 %v2319
    %v2384 = vcvt.s32.f32 %v2320
    %v2385 = vcvt.s32.f32 %v2321
    %v2386 = vadd.s32 %v2063, 128
    %v2387 = vadd.s32 %v2063, 256
    %v2388 = vadd.s32 %v2063, 384
    %v2389 = vmul.u32 %v1998, 64
    %vm2390 = vcmp.ge.s32.totalorder %v2063, %v2389
    %vm2391 = vcmp.ge.s32.totalorder %v2386, %v2389
    %vm2392 = vcmp.ge.s32.totalorder %v2387, %v2389
    %vm2393 = vcmp.ge.s32.totalorder %v2388, %v2389
    %v2394 = vadd.s32 %v2389, 64
    %vm2395 = vcmp.lt.s32.totalorder %v2063, %v2394
    %vm2396 = vcmp.lt.s32.totalorder %v2386, %v2394
    %vm2397 = vcmp.lt.s32.totalorder %v2387, %v2394
    %vm2398 = vcmp.lt.s32.totalorder %v2388, %v2394
    %vm2399 = vmand %vm2390, %vm2395
    %vm2400 = vmand %vm2391, %vm2396
    %vm2401 = vmand %vm2392, %vm2397
    %vm2402 = vmand %vm2393, %vm2398
    %v2403 = vsel %vm2399, 1, 0
    %v2404 = vsel %vm2400, 1, 0
    %v2405 = vsel %vm2401, 1, 0
    %v2406 = vsel %vm2402, 1, 0
    %v2407 = vcvt.s32.f32 %v2403
    %v2408 = vcvt.s32.f32 %v2404
    %v2409 = vcvt.s32.f32 %v2405
    %v2410 = vcvt.s32.f32 %v2406
    %vm2411 = vcmask 1041408
    %v2412 = vsel %vm2411, %v1825, 0.0
    %v2413 = vrot.slane %v2412, 4
    %v2414 = vadd.f32 %v2412, %v2413
    %v2415 = vrot.slane %v2414, 2
    %v2416 = vadd.f32 %v2414, %v2415
    %v2417 = vrot.slane %v2416, 1
    %v2418 = vadd.f32 %v2416, %v2417
    %v2419 = vsel %vm2411, %v1827, 0.0
    %v2420 = vrot.slane %v2419, 4
    %v2421 = vadd.f32 %v2419, %v2420
    %v2422 = vrot.slane %v2421, 2
    %v2423 = vadd.f32 %v2421, %v2422
    %v2424 = vrot.slane %v2423, 1
    %v2425 = vadd.f32 %v2423, %v2424
    %v2426 = vsel %vm2411, %v1989, 0.0
    %v2427 = vrot.slane %v2426, 4
    %v2428 = vadd.f32 %v2426, %v2427
    %v2429 = vrot.slane %v2428, 2
    %v2430 = vadd.f32 %v2428, %v2429
    %v2431 = vrot.slane %v2430, 1
    %v2432 = vadd.f32 %v2430, %v2431
    %v2433 = vsel %vm2411, %v1991, 0.0
    %v2434 = vrot.slane %v2433, 4
    %v2435 = vadd.f32 %v2433, %v2434
    %v2436 = vrot.slane %v2435, 2
    %v2437 = vadd.f32 %v2435, %v2436
    %v2438 = vrot.slane %v2437, 1
    %v2439 = vadd.f32 %v2437, %v2438
    %v2440 = vmul.f32 %v1825, %v1825
    %v2441 = vmul.f32 %v1827, %v1827
    %v2442 = vmul.f32 %v1989, %v1989
    %v2443 = vmul.f32 %v1991, %v1991
    %v2444 = vsel %vm2411, %v2440, 0.0
    %v2445 = vrot.slane %v2444, 4
    %v2446 = vadd.f32 %v2444, %v2445
    %v2447 = vrot.slane %v2446, 2
    %v2448 = vadd.f32 %v2446, %v2447
    %v2449 = vrot.slane %v2448, 1
    %v2450 = vadd.f32 %v2448, %v2449
    %v2451 = vsel %vm2411, %v2441, 0.0
    %v2452 = vrot.slane %v2451, 4
    %v2453 = vadd.f32 %v2451, %v2452
    %v2454 = vrot.slane %v2453, 2
    %v2455 = vadd.f32 %v2453, %v2454
    %v2456 = vrot.slane %v2455, 1
    %v2457 = vadd.f32 %v2455, %v2456
    %v2458 = vsel %vm2411, %v2442, 0.0
    %v2459 = vrot.slane %v2458, 4
    %v2460 = vadd.f32 %v2458, %v2459
    %v2461 = vrot.slane %v2460, 2
    %v2462 = vadd.f32 %v2460, %v2461
    %v2463 = vrot.slane %v2462, 1
    %v2464 = vadd.f32 %v2462, %v2463
    %v2465 = vsel %vm2411, %v2443, 0.0
    %v2466 = vrot.slane %v2465, 4
    %v2467 = vadd.f32 %v2465, %v2466
    %v2468 = vrot.slane %v2467, 2
    %v2469 = vadd.f32 %v2467, %v2468
    %v2470 = vrot.slane %v2469, 1
    %v2471 = vadd.f32 %v2469, %v2470
    %vm2472 = vcmask 1040384
    %v2473 = vsel %vm2472, %v2418, %v2450
    %v2474 = vsel %vm2472, %v2425, %v2457
    %v2475 = vsel %vm2472, %v2432, %v2464
    %v2476 = vsel %vm2472, %v2439, %v2471
    %2477 = vmatprep.subr.mxu0 0.0
    %2478 = vmatpush1.msra.mxu0 %v2337
    %2479 = vmatprep.subr.mxu0 0.0
    %2480 = vmatpush1.msra.mxu0 %v2336
    %2481 = vmatprep.subr.mxu0 0.0
    %2482 = vmatpush1.msra.mxu0 %v2335
    %2483 = vmatprep.subr.mxu0 0.0
    %2484 = vmatpush1.msra.mxu0 %v2334
    %2485 = vmatprep.subr.mxu0 0.0
    %2486 = vmatpush1.msra.mxu0 %v2333
    %2487 = vmatprep.subr.mxu0 0.0
    %2488 = vmatpush1.msra.mxu0 %v2332
    %2489 = vmatprep.subr.mxu0 0.0
    %2490 = vmatpush1.msra.mxu0 %v2331
    %2491 = vmatprep.subr.mxu0 0.0
    %2492 = vmatpush1.msra.mxu0 %v2330
    %2493 = vmatprep.subr.mxu0 0.0
    %2494 = vmatpush1.msra.mxu0 %v2329
    %2495 = vmatprep.subr.mxu0 0.0
    %2496 = vmatpush1.msra.mxu0 %v2328
    %2497 = vmatprep.subr.mxu0 0.0
    %2498 = vmatpush1.msra.mxu0 %v2327
    %2499 = vmatprep.subr.mxu0 0.0
    %2500 = vmatpush1.msra.mxu0 %v2326
    %2501 = vmatprep.subr.mxu0 0.0
    %2502 = vmatpush1.msra.mxu0 %v2325
    %2503 = vmatprep.subr.mxu0 0.0
    %2504 = vmatpush1.msra.mxu0 %v2324
    %2505 = vmatprep.subr.mxu0 0.0
    %2506 = vmatpush1.msra.mxu0 %v2323
    %2507 = vmatprep.subr.mxu0 0.0
    %2508 = vmatpush1.msra.mxu0 %v2322
    %2509 = vmatprep.subr.mxu0 0.0
    %2510 = vmatpush2.msra.mxu0 %v2353
    %2511 = vmatprep.subr.mxu0 0.0
    %2512 = vmatpush2.msra.mxu0 %v2352
    %2513 = vmatprep.subr.mxu0 0.0
    %2514 = vmatpush2.msra.mxu0 %v2351
    %2515 = vmatprep.subr.mxu0 0.0
    %2516 = vmatpush2.msra.mxu0 %v2350
    %2517 = vmatprep.subr.mxu0 0.0
    %2518 = vmatpush2.msra.mxu0 %v2349
    %2519 = vmatprep.subr.mxu0 0.0
    %2520 = vmatpush2.msra.mxu0 %v2348
    %2521 = vmatprep.subr.mxu0 0.0
    %2522 = vmatpush2.msra.mxu0 %v2347
    %2523 = vmatprep.subr.mxu0 0.0
    %2524 = vmatpush2.msra.mxu0 %v2346
    %2525 = vmatprep.subr.mxu0 0.0
    %2526 = vmatpush2.msra.mxu0 %v2345
    %2527 = vmatprep.subr.mxu0 0.0
    %2528 = vmatpush2.msra.mxu0 %v2344
    %2529 = vmatprep.subr.mxu0 0.0
    %2530 = vmatpush2.msra.mxu0 %v2343
    %2531 = vmatprep.subr.mxu0 0.0
    %2532 = vmatpush2.msra.mxu0 %v2342
    %2533 = vmatprep.subr.mxu0 0.0
    %2534 = vmatpush2.msra.mxu0 %v2341
    %2535 = vmatprep.subr.mxu0 0.0
    %2536 = vmatpush2.msra.mxu0 %v2340
    %2537 = vmatprep.subr.mxu0 0.0
    %2538 = vmatpush2.msra.mxu0 %v2339
    %2539 = vmatprep.subr.mxu0 0.0
    %2540 = vmatpush2.msra.mxu0 %v2338
    %2541 = vmatprep.mubr.f32.mxu0 %v2474
    %2542 = vmatmul.mubr.f32.gmra.mxu0 %v2473
    %v2543 = vpop.f32.mrf.mxu0
    %v2544 = vadd.f32 0.0, %v2543
    %v2545 = vpop.f32.mrf.mxu0
    %2546 = vdwg.mxu0
    %2547 = vmatprep.subr.mxu0 0.0
    %2548 = vmatpush1.msra.mxu0 %v2369
    %2549 = vmatprep.subr.mxu0 0.0
    %2550 = vmatpush1.msra.mxu0 %v2368
    %2551 = vmatprep.subr.mxu0 0.0
    %2552 = vmatpush1.msra.mxu0 %v2367
    %2553 = vmatprep.subr.mxu0 0.0
    %2554 = vmatpush1.msra.mxu0 %v2366
    %2555 = vmatprep.subr.mxu0 0.0
    %2556 = vmatpush1.msra.mxu0 %v2365
    %2557 = vmatprep.subr.mxu0 0.0
    %2558 = vmatpush1.msra.mxu0 %v2364
    %2559 = vmatprep.subr.mxu0 0.0
    %2560 = vmatpush1.msra.mxu0 %v2363
    %2561 = vmatprep.subr.mxu0 0.0
    %2562 = vmatpush1.msra.mxu0 %v2362
    %2563 = vmatprep.subr.mxu0 0.0
    %2564 = vmatpush1.msra.mxu0 %v2361
    %2565 = vmatprep.subr.mxu0 0.0
    %2566 = vmatpush1.msra.mxu0 %v2360
    %2567 = vmatprep.subr.mxu0 0.0
    %2568 = vmatpush1.msra.mxu0 %v2359
    %2569 = vmatprep.subr.mxu0 0.0
    %2570 = vmatpush1.msra.mxu0 %v2358
    %2571 = vmatprep.subr.mxu0 0.0
    %2572 = vmatpush1.msra.mxu0 %v2357
    %2573 = vmatprep.subr.mxu0 0.0
    %2574 = vmatpush1.msra.mxu0 %v2356
    %2575 = vmatprep.subr.mxu0 0.0
    %2576 = vmatpush1.msra.mxu0 %v2355
    %2577 = vmatprep.subr.mxu0 0.0
    %2578 = vmatpush1.msra.mxu0 %v2354
    %2579 = vmatprep.subr.mxu0 0.0
    %2580 = vmatpush2.msra.mxu0 %v2385
    %2581 = vmatprep.subr.mxu0 0.0
    %2582 = vmatpush2.msra.mxu0 %v2384
    %2583 = vmatprep.subr.mxu0 0.0
    %2584 = vmatpush2.msra.mxu0 %v2383
    %2585 = vmatprep.subr.mxu0 0.0
    %2586 = vmatpush2.msra.mxu0 %v2382
    %2587 = vmatprep.subr.mxu0 0.0
    %2588 = vmatpush2.msra.mxu0 %v2381
    %2589 = vmatprep.subr.mxu0 0.0
    %2590 = vmatpush2.msra.mxu0 %v2380
    %2591 = vmatprep.subr.mxu0 0.0
    %2592 = vmatpush2.msra.mxu0 %v2379
    %2593 = vmatprep.subr.mxu0 0.0
    %2594 = vmatpush2.msra.mxu0 %v2378
    %2595 = vmatprep.subr.mxu0 0.0
    %2596 = vmatpush2.msra.mxu0 %v2377
    %2597 = vmatprep.subr.mxu0 0.0
    %2598 = vmatpush2.msra.mxu0 %v2376
    %2599 = vmatprep.subr.mxu0 0.0
    %2600 = vmatpush2.msra.mxu0 %v2375
    %2601 = vmatprep.subr.mxu0 0.0
    %2602 = vmatpush2.msra.mxu0 %v2374
    %2603 = vmatprep.subr.mxu0 0.0
    %2604 = vmatpush2.msra.mxu0 %v2373
    %2605 = vmatprep.subr.mxu0 0.0
    %2606 = vmatpush2.msra.mxu0 %v2372
    %2607 = vmatprep.subr.mxu0 0.0
    %2608 = vmatpush2.msra.mxu0 %v2371
    %2609 = vmatprep.subr.mxu0 0.0
    %2610 = vmatpush2.msra.mxu0 %v2370
    %2611 = vmatprep.mubr.f32.mxu0 %v2476
    %2612 = vmatmul.mubr.f32.gmra.mxu0 %v2475
    %v2613 = vpop.f32.mrf.mxu0
    %v2614 = vadd.f32 %v2544, %v2613
    %v2615 = vpop.f32.mrf.mxu0
    %2616 = vdwg.mxu0
    %v2617 = vmul.f32 %v2614, 0.0078125
    %v2618 = vmul.f32 %v2617, %v2617
    %v2620 = vrot.slane %v2618, 7
    %v2622 = vsub.f32 %v2617, %v2620
    %v2623 = vmax.f32 %v2622, 0.0
    %v2624 = vadd.f32 %v2623, 1e-05
    %v2625 = vrsqrt.pop %v2624
    %v2628 = vunpack.c.l.s4 1966171168
    %v2629 = vunpack.c.0.s8 %v2628
    %v2630 = vlaneseq
    %v2631 = vshrl.u32 %v2630, 7
    %v2632 = vsub.s32 %v2629, %v2631
    %v2633 = vrot.slane %v2625, %v2632
    %v2634 = vcombine.high %v2633, %v2633
    %v2636 = vunpack.c.l.s4 1966171168
    %v2637 = vunpack.c.0.s8 %v2636
    %v2638 = vlaneseq
    %v2639 = vshrl.u32 %v2638, 7
    %v2640 = vsub.s32 %v2637, %v2639
    %v2641 = vrot.slane %v2634, %v2640
    %v2643 = vmul.f32 %v1995, %v2641
    %v2644 = vmul.f32 %v2617, %v2643
    %v2645 = vsub.f32 %v1996, %v2644
    %v2647 = vlaneseq
    %v2648 = vshrl.u32 %v2647, 7
    %v2649 = vsub.s32 0, %v2648
    %v2650 = vrot.slane %v2645, %v2649
    %v2652 = vsel %vm2472, %v2643, %v2650
    %vm2653 = vcmask 64512
    %v2655 = vsel %vm2653, %v2652, 0
    %2657 = vmatprep.subr.mxu0 0.0
    %2658 = vmatpush1.msra.mxu0 0.0
    %2659 = vmatprep.subr.mxu0 0.0
    %2660 = vmatpush1.msra.mxu0 0.0
    %2661 = vmatprep.subr.mxu0 0.0
    %2662 = vmatpush1.msra.mxu0 0.0
    %2663 = vmatprep.subr.mxu0 0.0
    %2664 = vmatpush1.msra.mxu0 0.0
    %2665 = vmatprep.subr.mxu0 0.0
    %2666 = vmatpush1.msra.mxu0 0.0
    %2667 = vmatprep.subr.mxu0 0.0
    %2668 = vmatpush1.msra.mxu0 0.0
    %2669 = vmatprep.subr.mxu0 0.0
    %2670 = vmatpush1.msra.mxu0 0.0
    %2671 = vmatprep.subr.mxu0 0.0
    %2672 = vmatpush1.msra.mxu0 0.0
    %2673 = vmatprep.subr.mxu0 0.0
    %2674 = vmatpush1.msra.mxu0 0.0
    %2675 = vmatprep.subr.mxu0 0.0
    %2676 = vmatpush1.msra.mxu0 0.0
    %2677 = vmatprep.subr.mxu0 0.0
    %2678 = vmatpush1.msra.mxu0 0.0
    %2679 = vmatprep.subr.mxu0 0.0
    %2680 = vmatpush1.msra.mxu0 0.0
    %2681 = vmatprep.subr.mxu0 0.0
    %2682 = vmatpush1.msra.mxu0 0.0
    %2683 = vmatprep.subr.mxu0 0.0
    %2684 = vmatpush1.msra.mxu0 0.0
    %2685 = vmatprep.subr.mxu0 0.0
    %2686 = vmatpush1.msra.mxu0 0.0
    %2687 = vmatprep.subr.mxu0 %v2408
    %2688 = vmatpush1.msra.mxu0 %v2407
    %2689 = vmatprep.subr.mxu0 0.0
    %2690 = vmatpush2.msra.mxu0 0.0
    %2691 = vmatprep.subr.mxu0 0.0
    %2692 = vmatpush2.msra.mxu0 0.0
    %2693 = vmatprep.subr.mxu0 0.0
    %2694 = vmatpush2.msra.mxu0 0.0
    %2695 = vmatprep.subr.mxu0 0.0
    %2696 = vmatpush2.msra.mxu0 0.0
    %2697 = vmatprep.subr.mxu0 0.0
    %2698 = vmatpush2.msra.mxu0 0.0
    %2699 = vmatprep.subr.mxu0 0.0
    %2700 = vmatpush2.msra.mxu0 0.0
    %2701 = vmatprep.subr.mxu0 0.0
    %2702 = vmatpush2.msra.mxu0 0.0
    %2703 = vmatprep.subr.mxu0 0.0
    %2704 = vmatpush2.msra.mxu0 0.0
    %2705 = vmatprep.subr.mxu0 0.0
    %2706 = vmatpush2.msra.mxu0 0.0
    %2707 = vmatprep.subr.mxu0 0.0
    %2708 = vmatpush2.msra.mxu0 0.0
    %2709 = vmatprep.subr.mxu0 0.0
    %2710 = vmatpush2.msra.mxu0 0.0
    %2711 = vmatprep.subr.mxu0 0.0
    %2712 = vmatpush2.msra.mxu0 0.0
    %2713 = vmatprep.subr.mxu0 0.0
    %2714 = vmatpush2.msra.mxu0 0.0
    %2715 = vmatprep.subr.mxu0 0.0
    %2716 = vmatpush2.msra.mxu0 0.0
    %2717 = vmatprep.subr.mxu0 0.0
    %2718 = vmatpush2.msra.mxu0 0.0
    %2719 = vmatprep.subr.mxu0 0.0
    %2720 = vmatpush2.msra.mxu0 0.0
    %2721 = vmatprep.mubr.f32.mxu0 0.0
    %2722 = vmatmul.mubr.f32.gmra.mxu0 %v2655
    %v2723 = vpop.f32.mrf.mxu0
    %v2724 = vadd.f32 0.0, %v2723
    %v2725 = vpop.f32.mrf.mxu0
    %v2726 = vadd.f32 0.0, %v2725
    %2727 = vdwg.mxu0
    %2728 = vmatprep.subr.mxu0 0.0
    %2729 = vmatpush1.msra.mxu0 0.0
    %2730 = vmatprep.subr.mxu0 0.0
    %2731 = vmatpush1.msra.mxu0 0.0
    %2732 = vmatprep.subr.mxu0 0.0
    %2733 = vmatpush1.msra.mxu0 0.0
    %2734 = vmatprep.subr.mxu0 0.0
    %2735 = vmatpush1.msra.mxu0 0.0
    %2736 = vmatprep.subr.mxu0 0.0
    %2737 = vmatpush1.msra.mxu0 0.0
    %2738 = vmatprep.subr.mxu0 0.0
    %2739 = vmatpush1.msra.mxu0 0.0
    %2740 = vmatprep.subr.mxu0 0.0
    %2741 = vmatpush1.msra.mxu0 0.0
    %2742 = vmatprep.subr.mxu0 0.0
    %2743 = vmatpush1.msra.mxu0 0.0
    %2744 = vmatprep.subr.mxu0 0.0
    %2745 = vmatpush1.msra.mxu0 0.0
    %2746 = vmatprep.subr.mxu0 0.0
    %2747 = vmatpush1.msra.mxu0 0.0
    %2748 = vmatprep.subr.mxu0 0.0
    %2749 = vmatpush1.msra.mxu0 0.0
    %2750 = vmatprep.subr.mxu0 0.0
    %2751 = vmatpush1.msra.mxu0 0.0
    %2752 = vmatprep.subr.mxu0 0.0
    %2753 = vmatpush1.msra.mxu0 0.0
    %2754 = vmatprep.subr.mxu0 0.0
    %2755 = vmatpush1.msra.mxu0 0.0
    %2756 = vmatprep.subr.mxu0 0.0
    %2757 = vmatpush1.msra.mxu0 0.0
    %2758 = vmatprep.subr.mxu0 %v2410
    %2759 = vmatpush1.msra.mxu0 %v2409
    %2760 = vmatprep.subr.mxu0 0.0
    %2761 = vmatpush2.msra.mxu0 0.0
    %2762 = vmatprep.subr.mxu0 0.0
    %2763 = vmatpush2.msra.mxu0 0.0
    %2764 = vmatprep.subr.mxu0 0.0
    %2765 = vmatpush2.msra.mxu0 0.0
    %2766 = vmatprep.subr.mxu0 0.0
    %2767 = vmatpush2.msra.mxu0 0.0
    %2768 = vmatprep.subr.mxu0 0.0
    %2769 = vmatpush2.msra.mxu0 0.0
    %2770 = vmatprep.subr.mxu0 0.0
    %2771 = vmatpush2.msra.mxu0 0.0
    %2772 = vmatprep.subr.mxu0 0.0
    %2773 = vmatpush2.msra.mxu0 0.0
    %2774 = vmatprep.subr.mxu0 0.0
    %2775 = vmatpush2.msra.mxu0 0.0
    %2776 = vmatprep.subr.mxu0 0.0
    %2777 = vmatpush2.msra.mxu0 0.0
    %2778 = vmatprep.subr.mxu0 0.0
    %2779 = vmatpush2.msra.mxu0 0.0
    %2780 = vmatprep.subr.mxu0 0.0
    %2781 = vmatpush2.msra.mxu0 0.0
    %2782 = vmatprep.subr.mxu0 0.0
    %2783 = vmatpush2.msra.mxu0 0.0
    %2784 = vmatprep.subr.mxu0 0.0
    %2785 = vmatpush2.msra.mxu0 0.0
    %2786 = vmatprep.subr.mxu0 0.0
    %2787 = vmatpush2.msra.mxu0 0.0
    %2788 = vmatprep.subr.mxu0 0.0
    %2789 = vmatpush2.msra.mxu0 0.0
    %2790 = vmatprep.subr.mxu0 0.0
    %2791 = vmatpush2.msra.mxu0 0.0
    %2792 = vmatprep.mubr.f32.mxu0 0.0
    %2793 = vmatmul.mubr.f32.gmra.mxu0 %v2655
    %v2794 = vpop.f32.mrf.mxu0
    %v2795 = vadd.f32 0.0, %v2794
    %v2796 = vpop.f32.mrf.mxu0
    %v2797 = vadd.f32 0.0, %v2796
    %2798 = vdwg.mxu0
    %v2799 = vlaneseq
    %v2800 = vshrl.u32 %v2799, 7
    %v2801 = vsub.s32 0, %v2800
    %v2802 = vrot.slane %v2724, %v2801
    %v2803 = vlaneseq
    %v2804 = vshrl.u32 %v2803, 7
    %v2805 = vsub.s32 0, %v2804
    %v2806 = vrot.slane %v2726, %v2805
    %v2807 = vlaneseq
    %v2808 = vshrl.u32 %v2807, 7
    %v2809 = vsub.s32 0, %v2808
    %v2810 = vrot.slane %v2795, %v2809
    %v2811 = vlaneseq
    %v2812 = vshrl.u32 %v2811, 7
    %v2813 = vsub.s32 0, %v2812
    %v2814 = vrot.slane %v2797, %v2813
    %v2815 = vmul.f32 %v1825, %v2802
    %v2816 = vmul.f32 %v1827, %v2806
    %v2817 = vmul.f32 %v1989, %v2810
    %v2818 = vmul.f32 %v1991, %v2814
    %v2819 = vlaneseq
    %v2820 = vshrl.u32 %v2819, 7
    %v2821 = vsub.s32 1, %v2820
    %v2822 = vrot.slane %v2724, %v2821
    %v2823 = vlaneseq
    %v2824 = vshrl.u32 %v2823, 7
    %v2825 = vsub.s32 1, %v2824
    %v2826 = vrot.slane %v2726, %v2825
    %v2827 = vlaneseq
    %v2828 = vshrl.u32 %v2827, 7
    %v2829 = vsub.s32 1, %v2828
    %v2830 = vrot.slane %v2795, %v2829
    %v2831 = vlaneseq
    %v2832 = vshrl.u32 %v2831, 7
    %v2833 = vsub.s32 1, %v2832
    %v2834 = vrot.slane %v2797, %v2833
    %v2835 = vadd.f32 %v2815, %v2822
    %v2836 = vadd.f32 %v2816, %v2826
    %v2837 = vadd.f32 %v2817, %v2830
    %v2838 = vadd.f32 %v2818, %v2834
    %v2839 = vmul.f32 %v2835, 0.2
    %v2840 = vmul.f32 %v2836, 0.2
    %v2841 = vmul.f32 %v2837, 0.2
    %v2842 = vmul.f32 %v2838, 0.2
    %v2843 = vmax.f32 %v2835, %v2839
    %v2844 = vmax.f32 %v2836, %v2840
    %v2845 = vmax.f32 %v2837, %v2841
    %v2846 = vmax.f32 %v2838, %v2842
    %v2847 = vpack.c.bf16 %v2843, %v2843
    %v2848 = vpack.c.bf16 %v2844, %v2844
    %v2849 = vpack.c.bf16 %v2845, %v2845
    %v2850 = vpack.c.bf16 %v2846, %v2846
    %v2851 = vld [vmem:[#allocation5] sm:$0xff]
    %v2852 = vld [vmem:[#allocation5 + $0x8] sm:$0xff]
    %v2853 = vld [vmem:[#allocation5 + $0x10] sm:$0xff]
    %v2854 = vld [vmem:[#allocation5 + $0x18] sm:$0xff]
    %v2855 = vld [vmem:[#allocation5 + $0x20] sm:$0xff]
    %v2856 = vld [vmem:[#allocation5 + $0x28] sm:$0xff]
    %v2857 = vld [vmem:[#allocation5 + $0x30] sm:$0xff]
    %v2858 = vld [vmem:[#allocation5 + $0x38] sm:$0xff]
    %v2859 = vld [vmem:[#allocation5 + $0x40] sm:$0xff]
    %v2860 = vld [vmem:[#allocation5 + $0x48] sm:$0xff]
    %v2861 = vld [vmem:[#allocation5 + $0x50] sm:$0xff]
    %v2862 = vld [vmem:[#allocation5 + $0x58] sm:$0xff]
    %v2863 = vld [vmem:[#allocation5 + $0x60] sm:$0xff]
    %v2864 = vld [vmem:[#allocation5 + $0x68] sm:$0xff]
    %v2865 = vld [vmem:[#allocation5 + $0x70] sm:$0xff]
    %v2866 = vld [vmem:[#allocation5 + $0x78] sm:$0xff]
    %v2867 = vld [vmem:[#allocation5 + $0x80] sm:$0xff]
    %v2868 = vld [vmem:[#allocation5 + $0x88] sm:$0xff]
    %v2869 = vld [vmem:[#allocation5 + $0x90] sm:$0xff]
    %v2870 = vld [vmem:[#allocation5 + $0x98] sm:$0xff]
    %v2871 = vld [vmem:[#allocation5 + $0xa0] sm:$0xff]
    %v2872 = vld [vmem:[#allocation5 + $0xa8] sm:$0xff]
    %v2873 = vld [vmem:[#allocation5 + $0xb0] sm:$0xff]
    %v2874 = vld [vmem:[#allocation5 + $0xb8] sm:$0xff]
    %v2875 = vld [vmem:[#allocation5 + $0xc0] sm:$0xff]
    %v2876 = vld [vmem:[#allocation5 + $0xc8] sm:$0xff]
    %v2877 = vld [vmem:[#allocation5 + $0xd0] sm:$0xff]
    %v2878 = vld [vmem:[#allocation5 + $0xd8] sm:$0xff]
    %v2879 = vld [vmem:[#allocation5 + $0xe0] sm:$0xff]
    %v2880 = vld [vmem:[#allocation5 + $0xe8] sm:$0xff]
    %v2881 = vld [vmem:[#allocation5 + $0xf0] sm:$0xff]
    %v2882 = vld [vmem:[#allocation5 + $0xf8] sm:$0xff]
    %v2883 = vld [vmem:[#allocation5 + $0x100] sm:$0xff]
    %v2884 = vld [vmem:[#allocation5 + $0x108] sm:$0xff]
    %v2885 = vld [vmem:[#allocation5 + $0x110] sm:$0xff]
    %v2886 = vld [vmem:[#allocation5 + $0x118] sm:$0xff]
    %v2887 = vld [vmem:[#allocation5 + $0x120] sm:$0xff]
    %v2888 = vld [vmem:[#allocation5 + $0x128] sm:$0xff]
    %v2889 = vld [vmem:[#allocation5 + $0x130] sm:$0xff]
    %v2890 = vld [vmem:[#allocation5 + $0x138] sm:$0xff]
    %v2891 = vld [vmem:[#allocation5 + $0x140] sm:$0xff]
    %v2892 = vld [vmem:[#allocation5 + $0x148] sm:$0xff]
    %v2893 = vld [vmem:[#allocation5 + $0x150] sm:$0xff]
    %v2894 = vld [vmem:[#allocation5 + $0x158] sm:$0xff]
    %v2895 = vld [vmem:[#allocation5 + $0x160] sm:$0xff]
    %v2896 = vld [vmem:[#allocation5 + $0x168] sm:$0xff]
    %v2897 = vld [vmem:[#allocation5 + $0x170] sm:$0xff]
    %v2898 = vld [vmem:[#allocation5 + $0x178] sm:$0xff]
    %v2899 = vld [vmem:[#allocation5 + $0x180] sm:$0xff]
    %v2900 = vld [vmem:[#allocation5 + $0x188] sm:$0xff]
    %v2901 = vld [vmem:[#allocation5 + $0x190] sm:$0xff]
    %v2902 = vld [vmem:[#allocation5 + $0x198] sm:$0xff]
    %v2903 = vld [vmem:[#allocation5 + $0x1a0] sm:$0xff]
    %v2904 = vld [vmem:[#allocation5 + $0x1a8] sm:$0xff]
    %v2905 = vld [vmem:[#allocation5 + $0x1b0] sm:$0xff]
    %v2906 = vld [vmem:[#allocation5 + $0x1b8] sm:$0xff]
    %v2907 = vld [vmem:[#allocation5 + $0x1c0] sm:$0xff]
    %v2908 = vld [vmem:[#allocation5 + $0x1c8] sm:$0xff]
    %v2909 = vld [vmem:[#allocation5 + $0x1d0] sm:$0xff]
    %v2910 = vld [vmem:[#allocation5 + $0x1d8] sm:$0xff]
    %v2911 = vld [vmem:[#allocation5 + $0x1e0] sm:$0xff]
    %v2912 = vld [vmem:[#allocation5 + $0x1e8] sm:$0xff]
    %v2913 = vld [vmem:[#allocation5 + $0x1f0] sm:$0xff]
    %v2914 = vld [vmem:[#allocation5 + $0x1f8] sm:$0xff]
    %v2979 = vunpack.c.l.b16 %v2851
    %v2980 = vunpack.c.h.b16 %v2851
    %v2981 = vunpack.c.l.b16 %v2852
    %v2982 = vunpack.c.h.b16 %v2852
    %v2983 = vunpack.c.l.b16 %v2853
    %v2984 = vunpack.c.h.b16 %v2853
    %v2985 = vunpack.c.l.b16 %v2854
    %v2986 = vunpack.c.h.b16 %v2854
    %v2987 = vunpack.c.l.b16 %v2855
    %v2988 = vunpack.c.h.b16 %v2855
    %v2989 = vunpack.c.l.b16 %v2856
    %v2990 = vunpack.c.h.b16 %v2856
    %v2991 = vunpack.c.l.b16 %v2857
    %v2992 = vunpack.c.h.b16 %v2857
    %v2993 = vunpack.c.l.b16 %v2858
    %v2994 = vunpack.c.h.b16 %v2858
    %v2995 = vunpack.c.l.b16 %v2859
    %v2996 = vunpack.c.h.b16 %v2859
    %v2997 = vunpack.c.l.b16 %v2860
    %v2998 = vunpack.c.h.b16 %v2860
    %v2999 = vunpack.c.l.b16 %v2861
    %v3000 = vunpack.c.h.b16 %v2861
    %v3001 = vunpack.c.l.b16 %v2862
    %v3002 = vunpack.c.h.b16 %v2862
    %v3003 = vunpack.c.l.b16 %v2863
    %v3004 = vunpack.c.h.b16 %v2863
    %v3005 = vunpack.c.l.b16 %v2864
    %v3006 = vunpack.c.h.b16 %v2864
    %v3007 = vunpack.c.l.b16 %v2865
    %v3008 = vunpack.c.h.b16 %v2865
    %v3009 = vunpack.c.l.b16 %v2866
    %v3010 = vunpack.c.h.b16 %v2866
    %v3011 = vunpack.c.l.b16 %v2867
    %v3012 = vunpack.c.h.b16 %v2867
    %v3013 = vunpack.c.l.b16 %v2868
    %v3014 = vunpack.c.h.b16 %v2868
    %v3015 = vunpack.c.l.b16 %v2869
    %v3016 = vunpack.c.h.b16 %v2869
    %v3017 = vunpack.c.l.b16 %v2870
    %v3018 = vunpack.c.h.b16 %v2870
    %v3019 = vunpack.c.l.b16 %v2871
    %v3020 = vunpack.c.h.b16 %v2871
    %v3021 = vunpack.c.l.b16 %v2872
    %v3022 = vunpack.c.h.b16 %v2872
    %v3023 = vunpack.c.l.b16 %v2873
    %v3024 = vunpack.c.h.b16 %v2873
    %v3025 = vunpack.c.l.b16 %v2874
    %v3026 = vunpack.c.h.b16 %v2874
    %v3027 = vunpack.c.l.b16 %v2875
    %v3028 = vunpack.c.h.b16 %v2875
    %v3029 = vunpack.c.l.b16 %v2876
    %v3030 = vunpack.c.h.b16 %v2876
    %v3031 = vunpack.c.l.b16 %v2877
    %v3032 = vunpack.c.h.b16 %v2877
    %v3033 = vunpack.c.l.b16 %v2878
    %v3034 = vunpack.c.h.b16 %v2878
    %v3035 = vunpack.c.l.b16 %v2879
    %v3036 = vunpack.c.h.b16 %v2879
    %v3037 = vunpack.c.l.b16 %v2880
    %v3038 = vunpack.c.h.b16 %v2880
    %v3039 = vunpack.c.l.b16 %v2881
    %v3040 = vunpack.c.h.b16 %v2881
    %v3041 = vunpack.c.l.b16 %v2882
    %v3042 = vunpack.c.h.b16 %v2882
    %v3043 = vunpack.c.l.b16 %v2883
    %v3044 = vunpack.c.h.b16 %v2883
    %v3045 = vunpack.c.l.b16 %v2884
    %v3046 = vunpack.c.h.b16 %v2884
    %v3047 = vunpack.c.l.b16 %v2885
    %v3048 = vunpack.c.h.b16 %v2885
    %v3049 = vunpack.c.l.b16 %v2886
    %v3050 = vunpack.c.h.b16 %v2886
    %v3051 = vunpack.c.l.b16 %v2887
    %v3052 = vunpack.c.h.b16 %v2887
    %v3053 = vunpack.c.l.b16 %v2888
    %v3054 = vunpack.c.h.b16 %v2888
    %v3055 = vunpack.c.l.b16 %v2889
    %v3056 = vunpack.c.h.b16 %v2889
    %v3057 = vunpack.c.l.b16 %v2890
    %v3058 = vunpack.c.h.b16 %v2890
    %v3059 = vunpack.c.l.b16 %v2891
    %v3060 = vunpack.c.h.b16 %v2891
    %v3061 = vunpack.c.l.b16 %v2892
    %v3062 = vunpack.c.h.b16 %v2892
    %v3063 = vunpack.c.l.b16 %v2893
    %v3064 = vunpack.c.h.b16 %v2893
    %v3065 = vunpack.c.l.b16 %v2894
    %v3066 = vunpack.c.h.b16 %v2894
    %v3067 = vunpack.c.l.b16 %v2895
    %v3068 = vunpack.c.h.b16 %v2895
    %v3069 = vunpack.c.l.b16 %v2896
    %v3070 = vunpack.c.h.b16 %v2896
    %v3071 = vunpack.c.l.b16 %v2897
    %v3072 = vunpack.c.h.b16 %v2897
    %v3073 = vunpack.c.l.b16 %v2898
    %v3074 = vunpack.c.h.b16 %v2898
    %v3075 = vunpack.c.l.b16 %v2899
    %v3076 = vunpack.c.h.b16 %v2899
    %v3077 = vunpack.c.l.b16 %v2900
    %v3078 = vunpack.c.h.b16 %v2900
    %v3079 = vunpack.c.l.b16 %v2901
    %v3080 = vunpack.c.h.b16 %v2901
    %v3081 = vunpack.c.l.b16 %v2902
    %v3082 = vunpack.c.h.b16 %v2902
    %v3083 = vunpack.c.l.b16 %v2903
    %v3084 = vunpack.c.h.b16 %v2903
    %v3085 = vunpack.c.l.b16 %v2904
    %v3086 = vunpack.c.h.b16 %v2904
    %v3087 = vunpack.c.l.b16 %v2905
    %v3088 = vunpack.c.h.b16 %v2905
    %v3089 = vunpack.c.l.b16 %v2906
    %v3090 = vunpack.c.h.b16 %v2906
    %v3091 = vunpack.c.l.b16 %v2907
    %v3092 = vunpack.c.h.b16 %v2907
    %v3093 = vunpack.c.l.b16 %v2908
    %v3094 = vunpack.c.h.b16 %v2908
    %v3095 = vunpack.c.l.b16 %v2909
    %v3096 = vunpack.c.h.b16 %v2909
    %v3097 = vunpack.c.l.b16 %v2910
    %v3098 = vunpack.c.h.b16 %v2910
    %v3099 = vunpack.c.l.b16 %v2911
    %v3100 = vunpack.c.h.b16 %v2911
    %v3101 = vunpack.c.l.b16 %v2912
    %v3102 = vunpack.c.h.b16 %v2912
    %v3103 = vunpack.c.l.b16 %v2913
    %v3104 = vunpack.c.h.b16 %v2913
    %v3105 = vunpack.c.l.b16 %v2914
    %v3106 = vunpack.c.h.b16 %v2914
    %v3107 = vpack.c.b16 %v2981, %v2979
    %v3108 = vpack.c.b16 %v2982, %v2980
    %v3109 = vpack.c.b16 %v2985, %v2983
    %v3110 = vpack.c.b16 %v2986, %v2984
    %v3111 = vpack.c.b16 %v2989, %v2987
    %v3112 = vpack.c.b16 %v2990, %v2988
    %v3113 = vpack.c.b16 %v2993, %v2991
    %v3114 = vpack.c.b16 %v2994, %v2992
    %v3115 = vpack.c.b16 %v2997, %v2995
    %v3116 = vpack.c.b16 %v2998, %v2996
    %v3117 = vpack.c.b16 %v3001, %v2999
    %v3118 = vpack.c.b16 %v3002, %v3000
    %v3119 = vpack.c.b16 %v3005, %v3003
    %v3120 = vpack.c.b16 %v3006, %v3004
    %v3121 = vpack.c.b16 %v3009, %v3007
    %v3122 = vpack.c.b16 %v3010, %v3008
    %v3123 = vpack.c.b16 %v3013, %v3011
    %v3124 = vpack.c.b16 %v3014, %v3012
    %v3125 = vpack.c.b16 %v3017, %v3015
    %v3126 = vpack.c.b16 %v3018, %v3016
    %v3127 = vpack.c.b16 %v3021, %v3019
    %v3128 = vpack.c.b16 %v3022, %v3020
    %v3129 = vpack.c.b16 %v3025, %v3023
    %v3130 = vpack.c.b16 %v3026, %v3024
    %v3131 = vpack.c.b16 %v3029, %v3027
    %v3132 = vpack.c.b16 %v3030, %v3028
    %v3133 = vpack.c.b16 %v3033, %v3031
    %v3134 = vpack.c.b16 %v3034, %v3032
    %v3135 = vpack.c.b16 %v3037, %v3035
    %v3136 = vpack.c.b16 %v3038, %v3036
    %v3137 = vpack.c.b16 %v3041, %v3039
    %v3138 = vpack.c.b16 %v3042, %v3040
    %v3139 = vpack.c.b16 %v3045, %v3043
    %v3140 = vpack.c.b16 %v3046, %v3044
    %v3141 = vpack.c.b16 %v3049, %v3047
    %v3142 = vpack.c.b16 %v3050, %v3048
    %v3143 = vpack.c.b16 %v3053, %v3051
    %v3144 = vpack.c.b16 %v3054, %v3052
    %v3145 = vpack.c.b16 %v3057, %v3055
    %v3146 = vpack.c.b16 %v3058, %v3056
    %v3147 = vpack.c.b16 %v3061, %v3059
    %v3148 = vpack.c.b16 %v3062, %v3060
    %v3149 = vpack.c.b16 %v3065, %v3063
    %v3150 = vpack.c.b16 %v3066, %v3064
    %v3151 = vpack.c.b16 %v3069, %v3067
    %v3152 = vpack.c.b16 %v3070, %v3068
    %v3153 = vpack.c.b16 %v3073, %v3071
    %v3154 = vpack.c.b16 %v3074, %v3072
    %v3155 = vpack.c.b16 %v3077, %v3075
    %v3156 = vpack.c.b16 %v3078, %v3076
    %v3157 = vpack.c.b16 %v3081, %v3079
    %v3158 = vpack.c.b16 %v3082, %v3080
    %v3159 = vpack.c.b16 %v3085, %v3083
    %v3160 = vpack.c.b16 %v3086, %v3084
    %v3161 = vpack.c.b16 %v3089, %v3087
    %v3162 = vpack.c.b16 %v3090, %v3088
    %v3163 = vpack.c.b16 %v3093, %v3091
    %v3164 = vpack.c.b16 %v3094, %v3092
    %v3165 = vpack.c.b16 %v3097, %v3095
    %v3166 = vpack.c.b16 %v3098, %v3096
    %v3167 = vpack.c.b16 %v3101, %v3099
    %v3168 = vpack.c.b16 %v3102, %v3100
    %v3169 = vpack.c.b16 %v3105, %v3103
    %v3170 = vpack.c.b16 %v3106, %v3104
    %3235 = vmatprep.subr.bf16.mxu0 %v3122
    %3236 = vmatpush1.bf16.msra.mxu0 %v3121
    %3237 = vmatprep.subr.bf16.mxu0 %v3120
    %3238 = vmatpush1.bf16.msra.mxu0 %v3119
    %3239 = vmatprep.subr.bf16.mxu0 %v3118
    %3240 = vmatpush1.bf16.msra.mxu0 %v3117
    %3241 = vmatprep.subr.bf16.mxu0 %v3116
    %3242 = vmatpush1.bf16.msra.mxu0 %v3115
    %3243 = vmatprep.subr.bf16.mxu0 %v3114
    %3244 = vmatpush1.bf16.msra.mxu0 %v3113
    %3245 = vmatprep.subr.bf16.mxu0 %v3112
    %3246 = vmatpush1.bf16.msra.mxu0 %v3111
    %3247 = vmatprep.subr.bf16.mxu0 %v3110
    %3248 = vmatpush1.bf16.msra.mxu0 %v3109
    %3249 = vmatprep.subr.bf16.mxu0 %v3108
    %3250 = vmatpush1.bf16.msra.mxu0 %v3107
    %3251 = vmatprep.subr.bf16.mxu0 %v3138
    %3252 = vmatpush2.bf16.msra.mxu0 %v3137
    %3253 = vmatprep.subr.bf16.mxu0 %v3136
    %3254 = vmatpush2.bf16.msra.mxu0 %v3135
    %3255 = vmatprep.subr.bf16.mxu0 %v3134
    %3256 = vmatpush2.bf16.msra.mxu0 %v3133
    %3257 = vmatprep.subr.bf16.mxu0 %v3132
    %3258 = vmatpush2.bf16.msra.mxu0 %v3131
    %3259 = vmatprep.subr.bf16.mxu0 %v3130
    %3260 = vmatpush2.bf16.msra.mxu0 %v3129
    %3261 = vmatprep.subr.bf16.mxu0 %v3128
    %3262 = vmatpush2.bf16.msra.mxu0 %v3127
    %3263 = vmatprep.subr.bf16.mxu0 %v3126
    %3264 = vmatpush2.bf16.msra.mxu0 %v3125
    %3265 = vmatprep.subr.bf16.mxu0 %v3124
    %3266 = vmatpush2.bf16.msra.mxu0 %v3123
    %3267 = vmatprep.mubr.bf16.mxu0 %v2848
    %3268 = vmatmul.mubr.bf16.gmra.mxu0 %v2847
    %v3269 = vpop.f32.mrf.mxu0
    %v3270 = vadd.f32 0.0, %v3269
    %v3271 = vpop.f32.mrf.mxu0
    %v3272 = vadd.f32 0.0, %v3271
    %v3273 = vpop.f32.mrf.mxu0
    %v3274 = vpop.f32.mrf.mxu0
    %3275 = vdwg.mxu0
    %3276 = vmatprep.subr.bf16.mxu0 %v3154
    %3277 = vmatpush1.bf16.msra.mxu0 %v3153
    %3278 = vmatprep.subr.bf16.mxu0 %v3152
    %3279 = vmatpush1.bf16.msra.mxu0 %v3151
    %3280 = vmatprep.subr.bf16.mxu0 %v3150
    %3281 = vmatpush1.bf16.msra.mxu0 %v3149
    %3282 = vmatprep.subr.bf16.mxu0 %v3148
    %3283 = vmatpush1.bf16.msra.mxu0 %v3147
    %3284 = vmatprep.subr.bf16.mxu0 %v3146
    %3285 = vmatpush1.bf16.msra.mxu0 %v3145
    %3286 = vmatprep.subr.bf16.mxu0 %v3144
    %3287 = vmatpush1.bf16.msra.mxu0 %v3143
    %3288 = vmatprep.subr.bf16.mxu0 %v3142
    %3289 = vmatpush1.bf16.msra.mxu0 %v3141
    %3290 = vmatprep.subr.bf16.mxu0 %v3140
    %3291 = vmatpush1.bf16.msra.mxu0 %v3139
    %3292 = vmatprep.subr.bf16.mxu0 %v3170
    %3293 = vmatpush2.bf16.msra.mxu0 %v3169
    %3294 = vmatprep.subr.bf16.mxu0 %v3168
    %3295 = vmatpush2.bf16.msra.mxu0 %v3167
    %3296 = vmatprep.subr.bf16.mxu0 %v3166
    %3297 = vmatpush2.bf16.msra.mxu0 %v3165
    %3298 = vmatprep.subr.bf16.mxu0 %v3164
    %3299 = vmatpush2.bf16.msra.mxu0 %v3163
    %3300 = vmatprep.subr.bf16.mxu0 %v3162
    %3301 = vmatpush2.bf16.msra.mxu0 %v3161
    %3302 = vmatprep.subr.bf16.mxu0 %v3160
    %3303 = vmatpush2.bf16.msra.mxu0 %v3159
    %3304 = vmatprep.subr.bf16.mxu0 %v3158
    %3305 = vmatpush2.bf16.msra.mxu0 %v3157
    %3306 = vmatprep.subr.bf16.mxu0 %v3156
    %3307 = vmatpush2.bf16.msra.mxu0 %v3155
    %3308 = vmatprep.mubr.bf16.mxu0 %v2850
    %3309 = vmatmul.mubr.bf16.gmra.mxu0 %v2849
    %v3310 = vpop.f32.mrf.mxu0
    %v3311 = vadd.f32 %v3270, %v3310
    %v3312 = vpop.f32.mrf.mxu0
    %v3313 = vadd.f32 %v3272, %v3312
    %v3314 = vpop.f32.mrf.mxu0
    %v3315 = vpop.f32.mrf.mxu0
    %3316 = vdwg.mxu0
    %v3317 = vld [vmem:[%s5] sm:$0x1]
    %v3318 = vld [vmem:[%s6] sm:$0x1]
    %v3319 = vmul.u32 %v2063, 16
    %vm3320 = vcmp.ge.s32.totalorder %v1998, %v3319
    %vm3321 = vcmp.ge.s32.totalorder %v1999, %v3319
    %vm3322 = vcmp.ge.s32.totalorder %v2000, %v3319
    %vm3323 = vcmp.ge.s32.totalorder %v2001, %v3319
    %vm3324 = vcmp.ge.s32.totalorder %v2002, %v3319
    %vm3325 = vcmp.ge.s32.totalorder %v2003, %v3319
    %vm3326 = vcmp.ge.s32.totalorder %v2004, %v3319
    %vm3327 = vcmp.ge.s32.totalorder %v2005, %v3319
    %vm3328 = vcmp.ge.s32.totalorder %v2006, %v3319
    %vm3329 = vcmp.ge.s32.totalorder %v2007, %v3319
    %vm3330 = vcmp.ge.s32.totalorder %v2008, %v3319
    %vm3331 = vcmp.ge.s32.totalorder %v2009, %v3319
    %vm3332 = vcmp.ge.s32.totalorder %v2010, %v3319
    %vm3333 = vcmp.ge.s32.totalorder %v2011, %v3319
    %vm3334 = vcmp.ge.s32.totalorder %v2012, %v3319
    %vm3335 = vcmp.ge.s32.totalorder %v2013, %v3319
    %vm3336 = vcmp.ge.s32.totalorder %v2014, %v3319
    %vm3337 = vcmp.ge.s32.totalorder %v2015, %v3319
    %vm3338 = vcmp.ge.s32.totalorder %v2016, %v3319
    %vm3339 = vcmp.ge.s32.totalorder %v2017, %v3319
    %vm3340 = vcmp.ge.s32.totalorder %v2018, %v3319
    %vm3341 = vcmp.ge.s32.totalorder %v2019, %v3319
    %vm3342 = vcmp.ge.s32.totalorder %v2020, %v3319
    %vm3343 = vcmp.ge.s32.totalorder %v2021, %v3319
    %vm3344 = vcmp.ge.s32.totalorder %v2022, %v3319
    %vm3345 = vcmp.ge.s32.totalorder %v2023, %v3319
    %vm3346 = vcmp.ge.s32.totalorder %v2024, %v3319
    %vm3347 = vcmp.ge.s32.totalorder %v2025, %v3319
    %vm3348 = vcmp.ge.s32.totalorder %v2026, %v3319
    %vm3349 = vcmp.ge.s32.totalorder %v2027, %v3319
    %vm3350 = vcmp.ge.s32.totalorder %v2028, %v3319
    %vm3351 = vcmp.ge.s32.totalorder %v2029, %v3319
    %v3352 = vadd.s32 %v3319, 16
    %vm3353 = vcmp.lt.s32.totalorder %v1998, %v3352
    %vm3354 = vcmp.lt.s32.totalorder %v1999, %v3352
    %vm3355 = vcmp.lt.s32.totalorder %v2000, %v3352
    %vm3356 = vcmp.lt.s32.totalorder %v2001, %v3352
    %vm3357 = vcmp.lt.s32.totalorder %v2002, %v3352
    %vm3358 = vcmp.lt.s32.totalorder %v2003, %v3352
    %vm3359 = vcmp.lt.s32.totalorder %v2004, %v3352
    %vm3360 = vcmp.lt.s32.totalorder %v2005, %v3352
    %vm3361 = vcmp.lt.s32.totalorder %v2006, %v3352
    %vm3362 = vcmp.lt.s32.totalorder %v2007, %v3352
    %vm3363 = vcmp.lt.s32.totalorder %v2008, %v3352
    %vm3364 = vcmp.lt.s32.totalorder %v2009, %v3352
    %vm3365 = vcmp.lt.s32.totalorder %v2010, %v3352
    %vm3366 = vcmp.lt.s32.totalorder %v2011, %v3352
    %vm3367 = vcmp.lt.s32.totalorder %v2012, %v3352
    %vm3368 = vcmp.lt.s32.totalorder %v2013, %v3352
    %vm3369 = vcmp.lt.s32.totalorder %v2014, %v3352
    %vm3370 = vcmp.lt.s32.totalorder %v2015, %v3352
    %vm3371 = vcmp.lt.s32.totalorder %v2016, %v3352
    %vm3372 = vcmp.lt.s32.totalorder %v2017, %v3352
    %vm3373 = vcmp.lt.s32.totalorder %v2018, %v3352
    %vm3374 = vcmp.lt.s32.totalorder %v2019, %v3352
    %vm3375 = vcmp.lt.s32.totalorder %v2020, %v3352
    %vm3376 = vcmp.lt.s32.totalorder %v2021, %v3352
    %vm3377 = vcmp.lt.s32.totalorder %v2022, %v3352
    %vm3378 = vcmp.lt.s32.totalorder %v2023, %v3352
    %vm3379 = vcmp.lt.s32.totalorder %v2024, %v3352
    %vm3380 = vcmp.lt.s32.totalorder %v2025, %v3352
    %vm3381 = vcmp.lt.s32.totalorder %v2026, %v3352
    %vm3382 = vcmp.lt.s32.totalorder %v2027, %v3352
    %vm3383 = vcmp.lt.s32.totalorder %v2028, %v3352
    %vm3384 = vcmp.lt.s32.totalorder %v2029, %v3352
    %vm3385 = vmand %vm3320, %vm3353
    %vm3386 = vmand %vm3321, %vm3354
    %vm3387 = vmand %vm3322, %vm3355
    %vm3388 = vmand %vm3323, %vm3356
    %vm3389 = vmand %vm3324, %vm3357
    %vm3390 = vmand %vm3325, %vm3358
    %vm3391 = vmand %vm3326, %vm3359
    %vm3392 = vmand %vm3327, %vm3360
    %vm3393 = vmand %vm3328, %vm3361
    %vm3394 = vmand %vm3329, %vm3362
    %vm3395 = vmand %vm3330, %vm3363
    %vm3396 = vmand %vm3331, %vm3364
    %vm3397 = vmand %vm3332, %vm3365
    %vm3398 = vmand %vm3333, %vm3366
    %vm3399 = vmand %vm3334, %vm3367
    %vm3400 = vmand %vm3335, %vm3368
    %vm3401 = vmand %vm3336, %vm3369
    %vm3402 = vmand %vm3337, %vm3370
    %vm3403 = vmand %vm3338, %vm3371
    %vm3404 = vmand %vm3339, %vm3372
    %vm3405 = vmand %vm3340, %vm3373
    %vm3406 = vmand %vm3341, %vm3374
    %vm3407 = vmand %vm3342, %vm3375
    %vm3408 = vmand %vm3343, %vm3376
    %vm3409 = vmand %vm3344, %vm3377
    %vm3410 = vmand %vm3345, %vm3378
    %vm3411 = vmand %vm3346, %vm3379
    %vm3412 = vmand %vm3347, %vm3380
    %vm3413 = vmand %vm3348, %vm3381
    %vm3414 = vmand %vm3349, %vm3382
    %vm3415 = vmand %vm3350, %vm3383
    %vm3416 = vmand %vm3351, %vm3384
    %v3417 = vsel %vm3385, 1, 0
    %v3418 = vsel %vm3386, 1, 0
    %v3419 = vsel %vm3387, 1, 0
    %v3420 = vsel %vm3388, 1, 0
    %v3421 = vsel %vm3389, 1, 0
    %v3422 = vsel %vm3390, 1, 0
    %v3423 = vsel %vm3391, 1, 0
    %v3424 = vsel %vm3392, 1, 0
    %v3425 = vsel %vm3393, 1, 0
    %v3426 = vsel %vm3394, 1, 0
    %v3427 = vsel %vm3395, 1, 0
    %v3428 = vsel %vm3396, 1, 0
    %v3429 = vsel %vm3397, 1, 0
    %v3430 = vsel %vm3398, 1, 0
    %v3431 = vsel %vm3399, 1, 0
    %v3432 = vsel %vm3400, 1, 0
    %v3433 = vsel %vm3401, 1, 0
    %v3434 = vsel %vm3402, 1, 0
    %v3435 = vsel %vm3403, 1, 0
    %v3436 = vsel %vm3404, 1, 0
    %v3437 = vsel %vm3405, 1, 0
    %v3438 = vsel %vm3406, 1, 0
    %v3439 = vsel %vm3407, 1, 0
    %v3440 = vsel %vm3408, 1, 0
    %v3441 = vsel %vm3409, 1, 0
    %v3442 = vsel %vm3410, 1, 0
    %v3443 = vsel %vm3411, 1, 0
    %v3444 = vsel %vm3412, 1, 0
    %v3445 = vsel %vm3413, 1, 0
    %v3446 = vsel %vm3414, 1, 0
    %v3447 = vsel %vm3415, 1, 0
    %v3448 = vsel %vm3416, 1, 0
    %v3449 = vcvt.s32.f32 %v3417
    %v3450 = vcvt.s32.f32 %v3418
    %v3451 = vcvt.s32.f32 %v3419
    %v3452 = vcvt.s32.f32 %v3420
    %v3453 = vcvt.s32.f32 %v3421
    %v3454 = vcvt.s32.f32 %v3422
    %v3455 = vcvt.s32.f32 %v3423
    %v3456 = vcvt.s32.f32 %v3424
    %v3457 = vcvt.s32.f32 %v3425
    %v3458 = vcvt.s32.f32 %v3426
    %v3459 = vcvt.s32.f32 %v3427
    %v3460 = vcvt.s32.f32 %v3428
    %v3461 = vcvt.s32.f32 %v3429
    %v3462 = vcvt.s32.f32 %v3430
    %v3463 = vcvt.s32.f32 %v3431
    %v3464 = vcvt.s32.f32 %v3432
    %v3465 = vcvt.s32.f32 %v3433
    %v3466 = vcvt.s32.f32 %v3434
    %v3467 = vcvt.s32.f32 %v3435
    %v3468 = vcvt.s32.f32 %v3436
    %v3469 = vcvt.s32.f32 %v3437
    %v3470 = vcvt.s32.f32 %v3438
    %v3471 = vcvt.s32.f32 %v3439
    %v3472 = vcvt.s32.f32 %v3440
    %v3473 = vcvt.s32.f32 %v3441
    %v3474 = vcvt.s32.f32 %v3442
    %v3475 = vcvt.s32.f32 %v3443
    %v3476 = vcvt.s32.f32 %v3444
    %v3477 = vcvt.s32.f32 %v3445
    %v3478 = vcvt.s32.f32 %v3446
    %v3479 = vcvt.s32.f32 %v3447
    %v3480 = vcvt.s32.f32 %v3448
    %v3481 = vmul.u32 %v1998, 16
    %v3482 = vmul.u32 %v1999, 16
    %vm3483 = vcmp.ge.s32.totalorder %v2063, %v3481
    %vm3484 = vcmp.ge.s32.totalorder %v2386, %v3481
    %vm3485 = vcmp.ge.s32.totalorder %v2063, %v3482
    %vm3486 = vcmp.ge.s32.totalorder %v2386, %v3482
    %v3487 = vadd.s32 %v3481, 16
    %v3488 = vadd.s32 %v3482, 16
    %vm3489 = vcmp.lt.s32.totalorder %v2063, %v3487
    %vm3490 = vcmp.lt.s32.totalorder %v2386, %v3487
    %vm3491 = vcmp.lt.s32.totalorder %v2063, %v3488
    %vm3492 = vcmp.lt.s32.totalorder %v2386, %v3488
    %vm3493 = vmand %vm3483, %vm3489
    %vm3494 = vmand %vm3484, %vm3490
    %vm3495 = vmand %vm3485, %vm3491
    %vm3496 = vmand %vm3486, %vm3492
    %v3497 = vsel %vm3493, 1, 0
    %v3498 = vsel %vm3494, 1, 0
    %v3499 = vsel %vm3495, 1, 0
    %v3500 = vsel %vm3496, 1, 0
    %v3501 = vcvt.s32.f32 %v3497
    %v3502 = vcvt.s32.f32 %v3498
    %v3503 = vcvt.s32.f32 %v3499
    %v3504 = vcvt.s32.f32 %v3500
    %v3505 = vsel %vm2411, %v3311, 0.0
    %v3506 = vrot.slane %v3505, 4
    %v3507 = vadd.f32 %v3505, %v3506
    %v3508 = vrot.slane %v3507, 2
    %v3509 = vadd.f32 %v3507, %v3508
    %v3510 = vrot.slane %v3509, 1
    %v3511 = vadd.f32 %v3509, %v3510
    %v3512 = vsel %vm2411, %v3313, 0.0
    %v3513 = vrot.slane %v3512, 4
    %v3514 = vadd.f32 %v3512, %v3513
    %v3515 = vrot.slane %v3514, 2
    %v3516 = vadd.f32 %v3514, %v3515
    %v3517 = vrot.slane %v3516, 1
    %v3518 = vadd.f32 %v3516, %v3517
    %v3519 = vmul.f32 %v3311, %v3311
    %v3520 = vmul.f32 %v3313, %v3313
    %v3521 = vsel %vm2411, %v3519, 0.0
    %v3522 = vrot.slane %v3521, 4
    %v3523 = vadd.f32 %v3521, %v3522
    %v3524 = vrot.slane %v3523, 2
    %v3525 = vadd.f32 %v3523, %v3524
    %v3526 = vrot.slane %v3525, 1
    %v3527 = vadd.f32 %v3525, %v3526
    %v3528 = vsel %vm2411, %v3520, 0.0
    %v3529 = vrot.slane %v3528, 4
    %v3530 = vadd.f32 %v3528, %v3529
    %v3531 = vrot.slane %v3530, 2
    %v3532 = vadd.f32 %v3530, %v3531
    %v3533 = vrot.slane %v3532, 1
    %v3534 = vadd.f32 %v3532, %v3533
    %v3535 = vsel %vm2472, %v3511, %v3527
    %v3536 = vsel %vm2472, %v3518, %v3534
    %3537 = vmatprep.subr.mxu0 0.0
    %3538 = vmatpush1.msra.mxu0 %v3464
    %3539 = vmatprep.subr.mxu0 0.0
    %3540 = vmatpush1.msra.mxu0 %v3463
    %3541 = vmatprep.subr.mxu0 0.0
    %3542 = vmatpush1.msra.mxu0 %v3462
    %3543 = vmatprep.subr.mxu0 0.0
    %3544 = vmatpush1.msra.mxu0 %v3461
    %3545 = vmatprep.subr.mxu0 0.0
    %3546 = vmatpush1.msra.mxu0 %v3460
    %3547 = vmatprep.subr.mxu0 0.0
    %3548 = vmatpush1.msra.mxu0 %v3459
    %3549 = vmatprep.subr.mxu0 0.0
    %3550 = vmatpush1.msra.mxu0 %v3458
    %3551 = vmatprep.subr.mxu0 0.0
    %3552 = vmatpush1.msra.mxu0 %v3457
    %3553 = vmatprep.subr.mxu0 0.0
    %3554 = vmatpush1.msra.mxu0 %v3456
    %3555 = vmatprep.subr.mxu0 0.0
    %3556 = vmatpush1.msra.mxu0 %v3455
    %3557 = vmatprep.subr.mxu0 0.0
    %3558 = vmatpush1.msra.mxu0 %v3454
    %3559 = vmatprep.subr.mxu0 0.0
    %3560 = vmatpush1.msra.mxu0 %v3453
    %3561 = vmatprep.subr.mxu0 0.0
    %3562 = vmatpush1.msra.mxu0 %v3452
    %3563 = vmatprep.subr.mxu0 0.0
    %3564 = vmatpush1.msra.mxu0 %v3451
    %3565 = vmatprep.subr.mxu0 0.0
    %3566 = vmatpush1.msra.mxu0 %v3450
    %3567 = vmatprep.subr.mxu0 0.0
    %3568 = vmatpush1.msra.mxu0 %v3449
    %3569 = vmatprep.subr.mxu0 0.0
    %3570 = vmatpush2.msra.mxu0 %v3480
    %3571 = vmatprep.subr.mxu0 0.0
    %3572 = vmatpush2.msra.mxu0 %v3479
    %3573 = vmatprep.subr.mxu0 0.0
    %3574 = vmatpush2.msra.mxu0 %v3478
    %3575 = vmatprep.subr.mxu0 0.0
    %3576 = vmatpush2.msra.mxu0 %v3477
    %3577 = vmatprep.subr.mxu0 0.0
    %3578 = vmatpush2.msra.mxu0 %v3476
    %3579 = vmatprep.subr.mxu0 0.0
    %3580 = vmatpush2.msra.mxu0 %v3475
    %3581 = vmatprep.subr.mxu0 0.0
    %3582 = vmatpush2.msra.mxu0 %v3474
    %3583 = vmatprep.subr.mxu0 0.0
    %3584 = vmatpush2.msra.mxu0 %v3473
    %3585 = vmatprep.subr.mxu0 0.0
    %3586 = vmatpush2.msra.mxu0 %v3472
    %3587 = vmatprep.subr.mxu0 0.0
    %3588 = vmatpush2.msra.mxu0 %v3471
    %3589 = vmatprep.subr.mxu0 0.0
    %3590 = vmatpush2.msra.mxu0 %v3470
    %3591 = vmatprep.subr.mxu0 0.0
    %3592 = vmatpush2.msra.mxu0 %v3469
    %3593 = vmatprep.subr.mxu0 0.0
    %3594 = vmatpush2.msra.mxu0 %v3468
    %3595 = vmatprep.subr.mxu0 0.0
    %3596 = vmatpush2.msra.mxu0 %v3467
    %3597 = vmatprep.subr.mxu0 0.0
    %3598 = vmatpush2.msra.mxu0 %v3466
    %3599 = vmatprep.subr.mxu0 0.0
    %3600 = vmatpush2.msra.mxu0 %v3465
    %3601 = vmatprep.mubr.f32.mxu0 %v3536
    %3602 = vmatmul.mubr.f32.gmra.mxu0 %v3535
    %v3603 = vpop.f32.mrf.mxu0
    %v3604 = vadd.f32 0.0, %v3603
    %v3605 = vpop.f32.mrf.mxu0
    %3606 = vdwg.mxu0
    %v3607 = vmul.f32 %v3604, 0.03125
    %v3608 = vmul.f32 %v3607, %v3607
    %v3610 = vrot.slane %v3608, 7
    %v3612 = vsub.f32 %v3607, %v3610
    %v3613 = vmax.f32 %v3612, 0.0
    %v3614 = vadd.f32 %v3613, 1e-05
    %v3615 = vrsqrt.pop %v3614
    %v3618 = vunpack.c.l.s4 1966171168
    %v3619 = vunpack.c.0.s8 %v3618
    %v3620 = vlaneseq
    %v3621 = vshrl.u32 %v3620, 7
    %v3622 = vsub.s32 %v3619, %v3621
    %v3623 = vrot.slane %v3615, %v3622
    %v3624 = vcombine.high %v3623, %v3623
    %v3626 = vunpack.c.l.s4 1966171168
    %v3627 = vunpack.c.0.s8 %v3626
    %v3628 = vlaneseq
    %v3629 = vshrl.u32 %v3628, 7
    %v3630 = vsub.s32 %v3627, %v3629
    %v3631 = vrot.slane %v3624, %v3630
    %v3633 = vmul.f32 %v3317, %v3631
    %v3634 = vmul.f32 %v3607, %v3633
    %v3635 = vsub.f32 %v3318, %v3634
    %v3637 = vlaneseq
    %v3638 = vshrl.u32 %v3637, 7
    %v3639 = vsub.s32 0, %v3638
    %v3640 = vrot.slane %v3635, %v3639
    %v3642 = vsel %vm2472, %v3633, %v3640
    %vm3643 = vcmask 130048
    %v3645 = vsel %vm3643, %v3642, 0
    %3647 = vmatprep.subr.mxu0 0.0
    %3648 = vmatpush1.msra.mxu0 0.0
    %3649 = vmatprep.subr.mxu0 0.0
    %3650 = vmatpush1.msra.mxu0 0.0
    %3651 = vmatprep.subr.mxu0 0.0
    %3652 = vmatpush1.msra.mxu0 0.0
    %3653 = vmatprep.subr.mxu0 0.0
    %3654 = vmatpush1.msra.mxu0 0.0
    %3655 = vmatprep.subr.mxu0 0.0
    %3656 = vmatpush1.msra.mxu0 0.0
    %3657 = vmatprep.subr.mxu0 0.0
    %3658 = vmatpush1.msra.mxu0 0.0
    %3659 = vmatprep.subr.mxu0 0.0
    %3660 = vmatpush1.msra.mxu0 0.0
    %3661 = vmatprep.subr.mxu0 0.0
    %3662 = vmatpush1.msra.mxu0 0.0
    %3663 = vmatprep.subr.mxu0 0.0
    %3664 = vmatpush1.msra.mxu0 0.0
    %3665 = vmatprep.subr.mxu0 0.0
    %3666 = vmatpush1.msra.mxu0 0.0
    %3667 = vmatprep.subr.mxu0 0.0
    %3668 = vmatpush1.msra.mxu0 0.0
    %3669 = vmatprep.subr.mxu0 0.0
    %3670 = vmatpush1.msra.mxu0 0.0
    %3671 = vmatprep.subr.mxu0 0.0
    %3672 = vmatpush1.msra.mxu0 0.0
    %3673 = vmatprep.subr.mxu0 0.0
    %3674 = vmatpush1.msra.mxu0 0.0
    %3675 = vmatprep.subr.mxu0 %v3504
    %3676 = vmatpush1.msra.mxu0 %v3503
    %3677 = vmatprep.subr.mxu0 %v3502
    %3678 = vmatpush1.msra.mxu0 %v3501
    %3679 = vmatprep.subr.mxu0 0.0
    %3680 = vmatpush2.msra.mxu0 0.0
    %3681 = vmatprep.subr.mxu0 0.0
    %3682 = vmatpush2.msra.mxu0 0.0
    %3683 = vmatprep.subr.mxu0 0.0
    %3684 = vmatpush2.msra.mxu0 0.0
    %3685 = vmatprep.subr.mxu0 0.0
    %3686 = vmatpush2.msra.mxu0 0.0
    %3687 = vmatprep.subr.mxu0 0.0
    %3688 = vmatpush2.msra.mxu0 0.0
    %3689 = vmatprep.subr.mxu0 0.0
    %3690 = vmatpush2.msra.mxu0 0.0
    %3691 = vmatprep.subr.mxu0 0.0
    %3692 = vmatpush2.msra.mxu0 0.0
    %3693 = vmatprep.subr.mxu0 0.0
    %3694 = vmatpush2.msra.mxu0 0.0
    %3695 = vmatprep.subr.mxu0 0.0
    %3696 = vmatpush2.msra.mxu0 0.0
    %3697 = vmatprep.subr.mxu0 0.0
    %3698 = vmatpush2.msra.mxu0 0.0
    %3699 = vmatprep.subr.mxu0 0.0
    %3700 = vmatpush2.msra.mxu0 0.0
    %3701 = vmatprep.subr.mxu0 0.0
    %3702 = vmatpush2.msra.mxu0 0.0
    %3703 = vmatprep.subr.mxu0 0.0
    %3704 = vmatpush2.msra.mxu0 0.0
    %3705 = vmatprep.subr.mxu0 0.0
    %3706 = vmatpush2.msra.mxu0 0.0
    %3707 = vmatprep.subr.mxu0 0.0
    %3708 = vmatpush2.msra.mxu0 0.0
    %3709 = vmatprep.subr.mxu0 0.0
    %3710 = vmatpush2.msra.mxu0 0.0
    %3711 = vmatprep.mubr.f32.mxu0 0.0
    %3712 = vmatmul.mubr.f32.gmra.mxu0 %v3645
    %v3713 = vpop.f32.mrf.mxu0
    %v3714 = vadd.f32 0.0, %v3713
    %v3715 = vpop.f32.mrf.mxu0
    %v3716 = vadd.f32 0.0, %v3715
    %3717 = vdwg.mxu0
    %v3718 = vlaneseq
    %v3719 = vshrl.u32 %v3718, 7
    %v3720 = vsub.s32 0, %v3719
    %v3721 = vrot.slane %v3714, %v3720
    %v3722 = vlaneseq
    %v3723 = vshrl.u32 %v3722, 7
    %v3724 = vsub.s32 0, %v3723
    %v3725 = vrot.slane %v3716, %v3724
    %v3726 = vmul.f32 %v3311, %v3721
    %v3727 = vmul.f32 %v3313, %v3725
    %v3728 = vlaneseq
    %v3729 = vshrl.u32 %v3728, 7
    %v3730 = vsub.s32 1, %v3729
    %v3731 = vrot.slane %v3714, %v3730
    %v3732 = vlaneseq
    %v3733 = vshrl.u32 %v3732, 7
    %v3734 = vsub.s32 1, %v3733
    %v3735 = vrot.slane %v3716, %v3734
    %v3736 = vadd.f32 %v3726, %v3731
    %v3737 = vadd.f32 %v3727, %v3735
    %v3738 = vmul.f32 %v3736, 0.2
    %v3739 = vmul.f32 %v3737, 0.2
    %v3740 = vmax.f32 %v3736, %v3738
    %v3741 = vmax.f32 %v3737, %v3739
    %v3742 = vpack.c.bf16 %v3740, %v3740
    %v3743 = vpack.c.bf16 %v3741, %v3741
    %v3744 = vld [vmem:[%s7] sm:$0xf]
    %v3745 = vld [vmem:[%s7 + $0x4] sm:$0xf]
    %v3746 = vld [vmem:[%s7 + $0x8] sm:$0xf]
    %v3747 = vld [vmem:[%s7 + $0xc] sm:$0xf]
    %v3748 = vld [vmem:[%s7 + $0x10] sm:$0xf]
    %v3749 = vld [vmem:[%s7 + $0x14] sm:$0xf]
    %v3750 = vld [vmem:[%s7 + $0x18] sm:$0xf]
    %v3751 = vld [vmem:[%s7 + $0x1c] sm:$0xf]
    %v3752 = vld [vmem:[%s7 + $0x20] sm:$0xf]
    %v3753 = vld [vmem:[%s7 + $0x24] sm:$0xf]
    %v3754 = vld [vmem:[%s7 + $0x28] sm:$0xf]
    %v3755 = vld [vmem:[%s7 + $0x2c] sm:$0xf]
    %v3756 = vld [vmem:[%s7 + $0x30] sm:$0xf]
    %v3757 = vld [vmem:[%s7 + $0x34] sm:$0xf]
    %v3758 = vld [vmem:[%s7 + $0x38] sm:$0xf]
    %v3759 = vld [vmem:[%s7 + $0x3c] sm:$0xf]
    %v3760 = vld [vmem:[%s7 + $0x40] sm:$0xf]
    %v3761 = vld [vmem:[%s7 + $0x44] sm:$0xf]
    %v3762 = vld [vmem:[%s7 + $0x48] sm:$0xf]
    %v3763 = vld [vmem:[%s7 + $0x4c] sm:$0xf]
    %v3764 = vld [vmem:[%s7 + $0x50] sm:$0xf]
    %v3765 = vld [vmem:[%s7 + $0x54] sm:$0xf]
    %v3766 = vld [vmem:[%s7 + $0x58] sm:$0xf]
    %v3767 = vld [vmem:[%s7 + $0x5c] sm:$0xf]
    %v3768 = vld [vmem:[%s7 + $0x60] sm:$0xf]
    %v3769 = vld [vmem:[%s7 + $0x64] sm:$0xf]
    %v3770 = vld [vmem:[%s7 + $0x68] sm:$0xf]
    %v3771 = vld [vmem:[%s7 + $0x6c] sm:$0xf]
    %v3772 = vld [vmem:[%s7 + $0x70] sm:$0xf]
    %v3773 = vld [vmem:[%s7 + $0x74] sm:$0xf]
    %v3774 = vld [vmem:[%s7 + $0x78] sm:$0xf]
    %v3775 = vld [vmem:[%s7 + $0x7c] sm:$0xf]
    %v3808 = vunpack.c.l.b16 %v3744
    %v3809 = vunpack.c.l.b16 %v3745
    %v3810 = vunpack.c.l.b16 %v3746
    %v3811 = vunpack.c.l.b16 %v3747
    %v3812 = vunpack.c.l.b16 %v3748
    %v3813 = vunpack.c.l.b16 %v3749
    %v3814 = vunpack.c.l.b16 %v3750
    %v3815 = vunpack.c.l.b16 %v3751
    %v3816 = vunpack.c.l.b16 %v3752
    %v3817 = vunpack.c.l.b16 %v3753
    %v3818 = vunpack.c.l.b16 %v3754
    %v3819 = vunpack.c.l.b16 %v3755
    %v3820 = vunpack.c.l.b16 %v3756
    %v3821 = vunpack.c.l.b16 %v3757
    %v3822 = vunpack.c.l.b16 %v3758
    %v3823 = vunpack.c.l.b16 %v3759
    %v3824 = vunpack.c.l.b16 %v3760
    %v3825 = vunpack.c.l.b16 %v3761
    %v3826 = vunpack.c.l.b16 %v3762
    %v3827 = vunpack.c.l.b16 %v3763
    %v3828 = vunpack.c.l.b16 %v3764
    %v3829 = vunpack.c.l.b16 %v3765
    %v3830 = vunpack.c.l.b16 %v3766
    %v3831 = vunpack.c.l.b16 %v3767
    %v3832 = vunpack.c.l.b16 %v3768
    %v3833 = vunpack.c.l.b16 %v3769
    %v3834 = vunpack.c.l.b16 %v3770
    %v3835 = vunpack.c.l.b16 %v3771
    %v3836 = vunpack.c.l.b16 %v3772
    %v3837 = vunpack.c.l.b16 %v3773
    %v3838 = vunpack.c.l.b16 %v3774
    %v3839 = vunpack.c.l.b16 %v3775
    %v3840 = vpack.c.b16 %v3809, %v3808
    %v3841 = vpack.c.b16 %v3811, %v3810
    %v3842 = vpack.c.b16 %v3813, %v3812
    %v3843 = vpack.c.b16 %v3815, %v3814
    %v3844 = vpack.c.b16 %v3817, %v3816
    %v3845 = vpack.c.b16 %v3819, %v3818
    %v3846 = vpack.c.b16 %v3821, %v3820
    %v3847 = vpack.c.b16 %v3823, %v3822
    %v3848 = vpack.c.b16 %v3825, %v3824
    %v3849 = vpack.c.b16 %v3827, %v3826
    %v3850 = vpack.c.b16 %v3829, %v3828
    %v3851 = vpack.c.b16 %v3831, %v3830
    %v3852 = vpack.c.b16 %v3833, %v3832
    %v3853 = vpack.c.b16 %v3835, %v3834
    %v3854 = vpack.c.b16 %v3837, %v3836
    %v3855 = vpack.c.b16 %v3839, %v3838
    %3872 = vmatprep.subr.bf16.mxu0 0
    %3873 = vmatpush1.bf16.msra.mxu0 %v3847
    %3874 = vmatprep.subr.bf16.mxu0 0
    %3875 = vmatpush1.bf16.msra.mxu0 %v3846
    %3876 = vmatprep.subr.bf16.mxu0 0
    %3877 = vmatpush1.bf16.msra.mxu0 %v3845
    %3878 = vmatprep.subr.bf16.mxu0 0
    %3879 = vmatpush1.bf16.msra.mxu0 %v3844
    %3880 = vmatprep.subr.bf16.mxu0 0
    %3881 = vmatpush1.bf16.msra.mxu0 %v3843
    %3882 = vmatprep.subr.bf16.mxu0 0
    %3883 = vmatpush1.bf16.msra.mxu0 %v3842
    %3884 = vmatprep.subr.bf16.mxu0 0
    %3885 = vmatpush1.bf16.msra.mxu0 %v3841
    %3886 = vmatprep.subr.bf16.mxu0 0
    %3887 = vmatpush1.bf16.msra.mxu0 %v3840
    %3888 = vmatprep.subr.bf16.mxu0 0
    %3889 = vmatpush2.bf16.msra.mxu0 %v3855
    %3890 = vmatprep.subr.bf16.mxu0 0
    %3891 = vmatpush2.bf16.msra.mxu0 %v3854
    %3892 = vmatprep.subr.bf16.mxu0 0
    %3893 = vmatpush2.bf16.msra.mxu0 %v3853
    %3894 = vmatprep.subr.bf16.mxu0 0
    %3895 = vmatpush2.bf16.msra.mxu0 %v3852
    %3896 = vmatprep.subr.bf16.mxu0 0
    %3897 = vmatpush2.bf16.msra.mxu0 %v3851
    %3898 = vmatprep.subr.bf16.mxu0 0
    %3899 = vmatpush2.bf16.msra.mxu0 %v3850
    %3900 = vmatprep.subr.bf16.mxu0 0
    %3901 = vmatpush2.bf16.msra.mxu0 %v3849
    %3902 = vmatprep.subr.bf16.mxu0 0
    %3903 = vmatpush2.bf16.msra.mxu0 %v3848
    %3904 = vmatprep.mubr.bf16.mxu0 %v3743
    %3905 = vmatmul.mubr.bf16.gmra.mxu0 %v3742
    %v3906 = vpop.f32.mrf.mxu0
    %v3907 = vadd.f32 0.0, %v3906
    %v3908 = vpop.f32.mrf.mxu0
    %v3909 = vpop.f32.mrf.mxu0
    %v3910 = vpop.f32.mrf.mxu0
    %3911 = vdwg.mxu0
    %v3912 = vld [vmem:[%s8] sm:$0x1]
    %v3913 = vld [vmem:[%s9] sm:$0x1]
    %vm3914 = vcmask 254976
    %v3915 = vsel %vm3914, %v3907, 0.0
    %v3916 = vrot.slane %v3915, 4
    %v3917 = vadd.f32 %v3915, %v3916
    %v3918 = vrot.slane %v3917, 2
    %v3919 = vadd.f32 %v3917, %v3918
    %v3920 = vrot.slane %v3919, 1
    %v3921 = vadd.f32 %v3919, %v3920
    %v3922 = vmul.f32 %v3921, 0.5
    %v3923 = vmul.f32 %v3907, %v3907
    %v3924 = vsel %vm3914, %v3923, 0.0
    %v3925 = vrot.slane %v3924, 4
    %v3926 = vadd.f32 %v3924, %v3925
    %v3927 = vrot.slane %v3926, 2
    %v3928 = vadd.f32 %v3926, %v3927
    %v3929 = vrot.slane %v3928, 1
    %v3930 = vadd.f32 %v3928, %v3929
    %v3931 = vmul.f32 %v3930, 0.5
    %v3932 = vmul.f32 %v3922, %v3922
    %v3933 = vsub.f32 %v3931, %v3932
    %v3934 = vmax.f32 %v3933, 0.0
    %v3935 = vadd.f32 %v3934, 1e-05
    %v3936 = vrsqrt.pop %v3935
    %v3937 = vmul.f32 %v3912, %v3936
    %v3938 = vmul.f32 %v3922, %v3937
    %v3939 = vsub.f32 %v3913, %v3938
    %v3941 = vlaneseq
    %v3942 = vshrl.u32 %v3941, 7
    %v3943 = vsub.s32 0, %v3942
    %v3944 = vrot.slane %v3937, %v3943
    %v3946 = vmul.f32 %v3907, %v3944
    %v3948 = vlaneseq
    %v3949 = vshrl.u32 %v3948, 7
    %v3950 = vsub.s32 0, %v3949
    %v3951 = vrot.slane %v3939, %v3950
    %v3953 = vadd.f32 %v3946, %v3951
    %v3954 = vmul.f32 %v3953, 0.2
    %v3955 = vmax.f32 %v3953, %v3954
    %v3956 = vpack.c.bf16 %v3955, %v3955
    %v3957 = vld [vmem:[%s10] sm:$0xf]
    %v3958 = vld [vmem:[%s10 + $0x4] sm:$0xf]
    %v3959 = vld [vmem:[%s10 + $0x8] sm:$0xf]
    %v3960 = vld [vmem:[%s10 + $0xc] sm:$0xf]
    %v3961 = vld [vmem:[#allocation2] sm:$0x1]
    %v3963 = vlaneseq
    %v3964 = vshrl.u32 %v3963, 7
    %v3965 = vsub.s32 0, %v3964
    %v3966 = vrot.slane %v3961, %v3965
    %v3972 = vunpack.c.l.b16 %v3957
    %v3973 = vunpack.c.l.b16 %v3958
    %v3974 = vunpack.c.l.b16 %v3959
    %v3975 = vunpack.c.l.b16 %v3960
    %v3976 = vpack.c.b16 %v3973, %v3972
    %v3977 = vpack.c.b16 %v3975, %v3974
    %vm3980 = vcmask 261120
    %v3982 = vsel %vm3980, %v3956, 0
    %3984 = vmatprep.subr.bf16.mxu0 0
    %3985 = vmatpush1.bf16.msra.mxu0 0
    %3986 = vmatprep.subr.bf16.mxu0 0
    %3987 = vmatpush1.bf16.msra.mxu0 0
    %3988 = vmatprep.subr.bf16.mxu0 0
    %3989 = vmatpush1.bf16.msra.mxu0 0
    %3990 = vmatprep.subr.bf16.mxu0 0
    %3991 = vmatpush1.bf16.msra.mxu0 0
    %3992 = vmatprep.subr.bf16.mxu0 0
    %3993 = vmatpush1.bf16.msra.mxu0 0
    %3994 = vmatprep.subr.bf16.mxu0 0
    %3995 = vmatpush1.bf16.msra.mxu0 0
    %3996 = vmatprep.subr.bf16.mxu0 0
    %3997 = vmatpush1.bf16.msra.mxu0 %v3977
    %3998 = vmatprep.subr.bf16.mxu0 0
    %3999 = vmatpush1.bf16.msra.mxu0 %v3976
    %4000 = vmatprep.subr.bf16.mxu0 0
    %4001 = vmatpush2.bf16.msra.mxu0 0
    %4002 = vmatprep.subr.bf16.mxu0 0
    %4003 = vmatpush2.bf16.msra.mxu0 0
    %4004 = vmatprep.subr.bf16.mxu0 0
    %4005 = vmatpush2.bf16.msra.mxu0 0
    %4006 = vmatprep.subr.bf16.mxu0 0
    %4007 = vmatpush2.bf16.msra.mxu0 0
    %4008 = vmatprep.subr.bf16.mxu0 0
    %4009 = vmatpush2.bf16.msra.mxu0 0
    %4010 = vmatprep.subr.bf16.mxu0 0
    %4011 = vmatpush2.bf16.msra.mxu0 0
    %4012 = vmatprep.subr.bf16.mxu0 0
    %4013 = vmatpush2.bf16.msra.mxu0 0
    %4014 = vmatprep.subr.bf16.mxu0 0
    %4015 = vmatpush2.bf16.msra.mxu0 0
    %4016 = vmatprep.mubr.bf16.mxu0 0
    %4017 = vmatmul.mubr.bf16.gmra.mxu0 %v3982
    %v4018 = vpop.f32.mrf.mxu0
    %v4019 = vadd.f32 %v3966, %v4018
    %v4020 = vpop.f32.mrf.mxu0
    %v4021 = vpop.f32.mrf.mxu0
    %v4022 = vpop.f32.mrf.mxu0
    %4023 = vdwg.mxu0
    %vm4024 = vcmask 1024
    %4025 = vst.msk [vmem:[%s12] sm:$0x3] %vm4024, %v4019
    // Predicated region
    $region58: #{discriminator_forward.1} parent=1 // pred_check
      _
    $region59: #{discriminator_forward.1} parent=1 // pred_check_branch
      %4027 = sbr.rel (0) target = $region61
    $region60: #{discriminator_forward.1} parent=1 // pred_region
      _
    $region61: #{discriminator_forward.1} parent=1 // pred_fallthru
      _
    // Predicated region
    $region62: #{discriminator_forward.1} parent=1 // pred_check
      _
    $region63: #{discriminator_forward.1} parent=1 // pred_check_branch
      %4029 = sbr.rel (0) target = $region65
    $region64: #{discriminator_forward.1} parent=1 // pred_region
      _
    $region65: #{discriminator_forward.1} parent=1 // pred_fallthru
      _
    %4030 = vsyncpa [#allocation4], 1
    %4031 = vsyncpa [#allocation6], 1

</llo_original>
